<compile_context>
chip_gen: v7x
topology: tpu7x:2x2x1
jax: 0.10.0
libtpu: 0.0.40
codegen_flags: <defaults>
</compile_context>

<pallas_src>
from functools import partial

import numpy as np

import jax
import jax.numpy as jnp
from jax.experimental import pallas as pl
from jax.experimental.pallas import tpu as pltpu


# ----------------------------------------------------------------------------
# The fused kernel.
# ----------------------------------------------------------------------------
def _hybrid_cnn_kernel(x_ref, feat_ref,
                       w1k_ref, b1r_ref, w2k_ref, b2r_ref,
                       fw1c_ref, fw1f_ref, fb1_ref, fw2_ref, fb2_ref,
                       o_ref, hp_ref):
    # x_ref   : (bb, H, 3*W*Cin)  conv1 height-taps pre-concatenated in lanes
    # w1k_ref : (3*W*Cin, W*C1)   conv1 stacked band weights (bf16)
    # w2k_ref : (3*W*C1, W*C2)    conv2 stacked band weights, even|odd columns
    # fw1c_ref: (Hh*half, 128)    fc1 rows pre-permuted to pooled layout (bf16)
    # hp_ref  : VMEM (bb, H+2, W*C1) f32 scratch (height-padded conv1 output)
    bb = x_ref.shape[0]
    H = x_ref.shape[1]
    K1 = x_ref.shape[2]
    WC1 = b1r_ref.shape[1]
    WC2 = b2r_ref.shape[1]
    Hh = H // 2
    half = WC2 // 2

    # ---- conv1 + bias + ReLU: one (bb*H, 192) x (192, 256) MXU dot ----------
    lhs1 = x_ref[...].reshape(bb * H, K1).astype(jnp.bfloat16)
    h1 = jnp.dot(lhs1, w1k_ref[...], preferred_element_type=jnp.float32)
    h1 = jnp.maximum(h1 + b1r_ref[...], 0.0)                   # (bb*H, W*C1)

    # ---- height-pad conv1 output into VMEM scratch for conv2's taps ---------
    # (pad rows re-zeroed every step: scratch is per-core under "parallel"
    #  grid sharding, so a one-time program_id==0 init would be unsafe)
    hp_ref[:, 0:1, :] = jnp.zeros((bb, 1, WC1), jnp.float32)
    hp_ref[:, H + 1:H + 2, :] = jnp.zeros((bb, 1, WC1), jnp.float32)
    hp_ref[:, 1:H + 1, :] = h1.reshape(bb, H, WC1)

    # ---- conv2 + bias + ReLU: one K = 3*W*C1 = 768 dot -----------------------
    lhs2 = jnp.concatenate(
        [hp_ref[:, 0:H, :], hp_ref[:, 1:H + 1, :], hp_ref[:, 2:H + 2, :]],
        axis=-1).reshape(bb * H, 3 * WC1).astype(jnp.bfloat16)
    h2 = jnp.dot(lhs2, w2k_ref[...], preferred_element_type=jnp.float32)
    h2 = jnp.maximum(h2 + b2r_ref[...], 0.0)                    # (bb*H, W*C2)

    # ---- 2x2 / stride-2 max-pool (on values, no VMEM round trip) ------------
    # vertical pairs = adjacent rows; horizontal pairs = even-x | odd-x column
    # blocks baked into conv2's band column ordering.
    h2p = h2.reshape(bb * Hh, 2, WC2)
    vmax = jnp.maximum(h2p[:, 0, :], h2p[:, 1, :])              # (bb*Hh, W*C2)
    pooled = jnp.maximum(vmax[:, :half], vmax[:, half:])        # (bb*Hh, half)

    # ---- fc1 (+ReLU) as two dots (pooled part + features part), then fc2 ----
    # TODO(synk): nn.Dropout(p=0.5) is identity in eval mode; training-mode
    # stochastic masking is not implemented here.
    pooled_flat = pooled.reshape(bb, Hh * half).astype(jnp.bfloat16)
    acc = jnp.dot(pooled_flat, fw1c_ref[...], preferred_element_type=jnp.float32)
    acc = acc + jnp.dot(feat_ref[...].astype(jnp.bfloat16), fw1f_ref[...],
                        preferred_element_type=jnp.float32)
    hfc = jnp.maximum(acc + fb1_ref[...], 0.0)                  # (bb, 128)
    o_ref[...] = (jnp.dot(hfc.astype(jnp.bfloat16), fw2_ref[...],
                          preferred_element_type=jnp.float32) + fb2_ref[...])


# ----------------------------------------------------------------------------
# One-time parameter preparation (torch layouts -> kernel layouts).
# ----------------------------------------------------------------------------
def _make_band(w_oihw, W, reorder_cols):
    """Fold the 3 width taps + width zero-padding of a 3x3 conv into band
    weights: band[kh, xin*Cin + ci, col(xo, co)] = w[co, ci, kh, kw]."""
    w = np.transpose(np.asarray(w_oihw, np.float32), (2, 3, 1, 0))  # (3,3,Cin,Cout)
    KH, KW, Cin, Cout = w.shape
    band = np.zeros((KH, W * Cin, W * Cout), np.float32)
    half = (W // 2) * Cout
    for kh in range(KH):
        for kw in range(KW):
            for xo in range(W):
                xin = xo + kw - 1                 # padding=1 folded in (skip OOB)
                if xin < 0 or xin >= W:
                    continue
                if reorder_cols:                  # even-x block | odd-x block
                    c0 = (xo // 2) * Cout + (half if (xo % 2) else 0)
                else:
                    c0 = xo * Cout
                band[kh, xin * Cin:(xin + 1) * Cin, c0:c0 + Cout] = w[kh, kw]
    return band


def prepare_params(params, image_size):
    H = W = image_size
    Cin = params["conv1_w"].shape[1]
    C1 = params["conv1_w"].shape[0]                # 16
    C2 = params["conv2_w"].shape[0]                # 32
    conv_out = (H // 2) * (W // 2) * C2

    # conv bands stacked along K so each conv is a single dot.
    w1k = _make_band(params["conv1_w"], W, False).reshape(3 * W * Cin, W * C1)
    w2k = _make_band(params["conv2_w"], W, True).reshape(3 * W * C1, W * C2)

    # fc1: split into pooled part (rows permuted from torch CHW flatten order
    # to the kernel's (yo, xo, c) pooled layout, then flattened) + feature part.
    fc1_w = np.asarray(params["fc1_w"], np.float32)        # (128, conv_out + F)
    nh = fc1_w.shape[0]
    wc = fc1_w[:, :conv_out].reshape(nh, C2, H // 2, W // 2)
    fw1c = np.transpose(wc, (2, 3, 1, 0)).reshape((H // 2) * (W // 2) * C2, nh)
    fw1f = fc1_w[:, conv_out:].T                            # (F, 128)

    # fc2: lane-pad the output dimension to a multiple of 128.
    fc2_w = np.asarray(params["fc2_w"], np.float32)        # (NC, 128)
    NC = fc2_w.shape[0]
    NCp = ((NC + 127) // 128) * 128
    fw2 = np.zeros((nh, NCp), np.float32)
    fw2[:, :NC] = fc2_w.T
    fb2 = np.zeros((1, NCp), np.float32)
    fb2[0, :NC] = np.asarray(params["fc2_b"], np.float32)

    return {
        # matmul weights in bf16 (MXU-native); biases stay f32.
        "w1k": jnp.asarray(w1k, jnp.bfloat16),
        "b1r": jnp.asarray(np.tile(np.asarray(params["conv1_b"], np.float32), W)[None, :]),
        "w2k": jnp.asarray(w2k, jnp.bfloat16),
        "b2r": jnp.asarray(np.tile(np.asarray(params["conv2_b"], np.float32), W)[None, :]),
        "fw1c": jnp.asarray(fw1c, jnp.bfloat16),
        "fw1f": jnp.asarray(fw1f, jnp.bfloat16),
        "fb1": jnp.asarray(np.asarray(params["fc1_b"], np.float32)[None, :]),
        "fw2": jnp.asarray(fw2, jnp.bfloat16),
        "fb2": jnp.asarray(fb2),
    }


def _full_spec(arr):
    n = arr.ndim
    return pl.BlockSpec(tuple(arr.shape), lambda *_: (0,) * n)


# ----------------------------------------------------------------------------
# Forward pass (single fused pallas_call; batch gridded / parallel).
# ----------------------------------------------------------------------------
@partial(jax.jit, static_argnames=("num_classes",))
def hybrid_cnn_forward(image_nchw, features, prepped, *, num_classes):
    B, Cin, H, W = image_nchw.shape
    F = features.shape[1]
    WC1 = prepped["b1r"].shape[1]
    K1 = prepped["w1k"].shape[0]          # 3 * W * Cin
    NCp = prepped["fw2"].shape[1]         # 128-padded class dim

    # Input prep (tiny XLA ops): NCHW -> NHWC, pack (W, Cin) into lanes,
    # zero-pad height, and pre-concatenate the 3 conv1 height taps so the
    # kernel's conv1 is a single lane-dense K = 3*W*Cin dot.
    x = jnp.transpose(image_nchw, (0, 2, 3, 1)).astype(jnp.float32)
    x = x.reshape(B, H, W * Cin)
    xp = jnp.pad(x, ((0, 0), (1, 1), (0, 0)))
    x_taps = jnp.concatenate([xp[:, 0:H], xp[:, 1:H + 1], xp[:, 2:H + 2]], axis=-1)
    feat = features.astype(jnp.float32)

    # Capped batch block + cdiv grid; ragged tail is zero-padded and sliced.
    bb = min(32, B)
    grid_n = pl.cdiv(B, bb)
    Bp = grid_n * bb
    if Bp != B:
        x_taps = jnp.pad(x_taps, ((0, Bp - B), (0, 0), (0, 0)))
        feat = jnp.pad(feat, ((0, Bp - B), (0, 0)))

    weight_names = ("w1k", "b1r", "w2k", "b2r", "fw1c", "fw1f", "fb1", "fw2", "fb2")
    weight_args = [prepped[k] for k in weight_names]

    in_specs = [
        pl.BlockSpec((bb, H, K1), lambda i: (i, 0, 0)),
        pl.BlockSpec((bb, F), lambda i: (i, 0)),
    ] + [_full_spec(a) for a in weight_args]

    out = pl.pallas_call(
        _hybrid_cnn_kernel,
        out_shape=jax.ShapeDtypeStruct((Bp, NCp), jnp.float32),
        grid_spec=pltpu.PrefetchScalarGridSpec(
            num_scalar_prefetch=0,
            grid=(grid_n,),
            in_specs=in_specs,
            out_specs=pl.BlockSpec((bb, NCp), lambda i: (i, 0)),
            scratch_shapes=[pltpu.VMEM((bb, H + 2, WC1), jnp.float32)]),
        compiler_params=pltpu.CompilerParams(
            dimension_semantics=("parallel",),
            vmem_limit_bytes=32 * 1024 * 1024),
    )(x_taps, feat, *weight_args)
    return out[:B, :num_classes]


# ----------------------------------------------------------------------------
# Parameter construction (torch layouts: conv OIHW, linear (out, in)).
# ----------------------------------------------------------------------------
def init_params(key, image_channels, image_size, num_features, num_classes):
    ks = jax.random.split(key, 8)
    conv_out = (image_size // 2) * (image_size // 2) * 32
    return {
        "conv1_w": 0.1 * jax.random.normal(ks[0], (16, image_channels, 3, 3), jnp.float32),
        "conv1_b": 0.1 * jax.random.normal(ks[1], (16,), jnp.float32),
        "conv2_w": 0.1 * jax.random.normal(ks[2], (32, 16, 3, 3), jnp.float32),
        "conv2_b": 0.1 * jax.random.normal(ks[3], (32,), jnp.float32),
        "fc1_w": 0.02 * jax.random.normal(ks[4], (128, conv_out + num_features), jnp.float32),
        "fc1_b": 0.02 * jax.random.normal(ks[5], (128,), jnp.float32),
        "fc2_w": 0.02 * jax.random.normal(ks[6], (num_classes, 128), jnp.float32),
        "fc2_b": 0.02 * jax.random.normal(ks[7], (num_classes,), jnp.float32),
    }


# ----------------------------------------------------------------------------
# Plain NumPy reference of the PyTorch module (eval mode).
# ----------------------------------------------------------------------------
def _reference_forward_np(image, features, params):
    x = np.asarray(image, np.float32)
    feats = np.asarray(features, np.float32)

    def conv3x3(x, w, b):
        Bn, C, H, W = x.shape
        w = np.asarray(w, np.float32)
        O = w.shape[0]
        xp = np.zeros((Bn, C, H + 2, W + 2), np.float32)
        xp[:, :, 1:H + 1, 1:W + 1] = x
        out = np.zeros((Bn, O, H, W), np.float32)
        for kh in range(3):
            for kw in range(3):
                patch = xp[:, :, kh:kh + H, kw:kw + W]
                out += np.einsum("bchw,oc->bohw", patch, w[:, :, kh, kw])
        return out + np.asarray(b, np.float32)[None, :, None, None]

    h = np.maximum(conv3x3(x, params["conv1_w"], params["conv1_b"]), 0.0)
    h = np.maximum(conv3x3(h, params["conv2_w"], params["conv2_b"]), 0.0)
    Bn, C, H, W = h.shape
    pooled = h.reshape(Bn, C, H // 2, 2, W // 2, 2).max(axis=(3, 5))
    flat = pooled.reshape(Bn, -1)
    combined = np.concatenate([flat, feats], axis=1)
    fc1_w = np.asarray(params["fc1_w"], np.float32)
    fc1_b = np.asarray(params["fc1_b"], np.float32)
    fc2_w = np.asarray(params["fc2_w"], np.float32)
    fc2_b = np.asarray(params["fc2_b"], np.float32)
    hfc = np.maximum(combined @ fc1_w.T + fc1_b, 0.0)
    return hfc @ fc2_w.T + fc2_b


if __name__ == "__main__":
    B = 2
    image_channels = 4
    image_size = 16
    num_features = 8
    num_classes = 3

    key = jax.random.PRNGKey(0)
    k_img, k_feat, k_param = jax.random.split(key, 3)

    image = jax.random.normal(k_img, (B, image_channels, image_size, image_size),
                              jnp.float32)
    features = jax.random.normal(k_feat, (B, num_features), jnp.float32)
    params = init_params(k_param, image_channels, image_size, num_features,
                         num_classes)
    prepped = prepare_params(params, image_size)    # one-time weight prep

    out = hybrid_cnn_forward(image, features, prepped, num_classes=num_classes)
    out = jax.block_until_ready(out)
    assert out.shape == (B, num_classes), out.shape
    assert out.dtype == jnp.float32

    ref = _reference_forward_np(image, features, params)
    # tolerances account for bf16 MXU operands (accumulation is f32).
    np.testing.assert_allclose(np.asarray(out), ref, rtol=3e-2, atol=3e-2)
    print("KERNEL_OK")
</pallas_src>

<mosaic_0001>
module attributes {stable_mosaic.version = 11 : i64} {
  func.func @_hybrid_cnn_kernel(%arg0: i32, %arg1: memref<2x16x192xf32, #tpu.memory_space<vmem>>, %arg2: memref<2x8xf32, #tpu.memory_space<vmem>>, %arg3: memref<192x256xbf16, #tpu.memory_space<vmem>>, %arg4: memref<1x256xf32, #tpu.memory_space<vmem>>, %arg5: memref<768x512xbf16, #tpu.memory_space<vmem>>, %arg6: memref<1x512xf32, #tpu.memory_space<vmem>>, %arg7: memref<2048x128xbf16, #tpu.memory_space<vmem>>, %arg8: memref<8x128xbf16, #tpu.memory_space<vmem>>, %arg9: memref<1x128xf32, #tpu.memory_space<vmem>>, %arg10: memref<128x128xbf16, #tpu.memory_space<vmem>>, %arg11: memref<1x128xf32, #tpu.memory_space<vmem>>, %arg12: memref<2x128xf32, #tpu.memory_space<vmem>>, %arg13: memref<2x18x256xf32, #tpu.memory_space<vmem>>) attributes {dimension_semantics = [#tpu.dimension_semantics<parallel>], iteration_bounds = array<i64: 1>, scalar_prefetch = 0 : i64, scratch_operands = 1 : i64, tpu.core_type = #tpu.core_type<tc>, window_params = [{transform_indices = @transform_0, window_bounds = array<i64: 2, 16, 192>}, {transform_indices = @transform_1, window_bounds = array<i64: 2, 8>}, {pipeline_mode = #tpu.pipeline_mode<synchronous>, transform_indices = @transform_2, window_bounds = array<i64: 192, 256>}, {pipeline_mode = #tpu.pipeline_mode<synchronous>, transform_indices = @transform_3, window_bounds = array<i64: 1, 256>}, {pipeline_mode = #tpu.pipeline_mode<synchronous>, transform_indices = @transform_4, window_bounds = array<i64: 768, 512>}, {pipeline_mode = #tpu.pipeline_mode<synchronous>, transform_indices = @transform_5, window_bounds = array<i64: 1, 512>}, {pipeline_mode = #tpu.pipeline_mode<synchronous>, transform_indices = @transform_6, window_bounds = array<i64: 2048, 128>}, {pipeline_mode = #tpu.pipeline_mode<synchronous>, transform_indices = @transform_7, window_bounds = array<i64: 8, 128>}, {pipeline_mode = #tpu.pipeline_mode<synchronous>, transform_indices = @transform_8, window_bounds = array<i64: 1, 128>}, {pipeline_mode = #tpu.pipeline_mode<synchronous>, transform_indices = @transform_9, window_bounds = array<i64: 128, 128>}, {pipeline_mode = #tpu.pipeline_mode<synchronous>, transform_indices = @transform_10, window_bounds = array<i64: 1, 128>}, {transform_indices = @transform_11, window_bounds = array<i64: 2, 128>}]} {
    %c0 = arith.constant 0 : index
    %c0_0 = arith.constant 0 : index
    %c0_1 = arith.constant 0 : index
    %0 = vector.load %arg1[%c0, %c0_0, %c0_1] : memref<2x16x192xf32, #tpu.memory_space<vmem>>, vector<2x16x192xf32>
    %1 = vector.shape_cast %0 : vector<2x16x192xf32> to vector<32x192xf32>
    %2 = arith.truncf %1 : vector<32x192xf32> to vector<32x192xbf16>
    %c0_2 = arith.constant 0 : index
    %c0_3 = arith.constant 0 : index
    %3 = vector.load %arg3[%c0_2, %c0_3] : memref<192x256xbf16, #tpu.memory_space<vmem>>, vector<192x256xbf16>
    %cst = arith.constant dense<0.000000e+00> : vector<32x256xf32>
    %4 = tpu.matmul %2, %3, %cst {dimension_numbers = #tpu.dot_dimension_numbers<[1], [0], [0], [1], [0, 0, 1, 1], [], []>} : vector<32x192xbf16>, vector<192x256xbf16>, vector<32x256xf32> -> vector<32x256xf32>
    %c0_4 = arith.constant 0 : index
    %c0_5 = arith.constant 0 : index
    %5 = vector.load %arg4[%c0_4, %c0_5] : memref<1x256xf32, #tpu.memory_space<vmem>>, vector<1x256xf32>
    %6 = vector.broadcast %5 : vector<1x256xf32> to vector<32x256xf32>
    %7 = arith.addf %4, %6 : vector<32x256xf32>
    %cst_6 = arith.constant 0.000000e+00 : f32
    %8 = vector.broadcast %cst_6 : f32 to vector<32x256xf32>
    %9 = arith.maximumf %7, %8 : vector<32x256xf32>
    %cst_7 = arith.constant 0.000000e+00 : f32
    %10 = vector.broadcast %cst_7 : f32 to vector<2x1x256xf32>
    %c0_8 = arith.constant 0 : index
    %c0_9 = arith.constant 0 : index
    %c0_10 = arith.constant 0 : index
    %11 = vector.load %arg13[%c0_8, %c0_9, %c0_10] : memref<2x18x256xf32, #tpu.memory_space<vmem>>, vector<2x1x256xf32>
    tpu.vector_store %arg13[%c0_8, %c0_9, %c0_10], %10 {strides = array<i32>} : memref<2x18x256xf32, #tpu.memory_space<vmem>>, vector<2x1x256xf32>,
    %cst_11 = arith.constant 0.000000e+00 : f32
    %12 = vector.broadcast %cst_11 : f32 to vector<2x1x256xf32>
    %c0_12 = arith.constant 0 : index
    %c17 = arith.constant 17 : index
    %c0_13 = arith.constant 0 : index
    %13 = vector.load %arg13[%c0_12, %c17, %c0_13] : memref<2x18x256xf32, #tpu.memory_space<vmem>>, vector<2x1x256xf32>
    tpu.vector_store %arg13[%c0_12, %c17, %c0_13], %12 {strides = array<i32>} : memref<2x18x256xf32, #tpu.memory_space<vmem>>, vector<2x1x256xf32>,
    %14 = vector.shape_cast %9 : vector<32x256xf32> to vector<2x16x256xf32>
    %c0_14 = arith.constant 0 : index
    %c1 = arith.constant 1 : index
    %c0_15 = arith.constant 0 : index
    %15 = vector.load %arg13[%c0_14, %c1, %c0_15] : memref<2x18x256xf32, #tpu.memory_space<vmem>>, vector<2x16x256xf32>
    tpu.vector_store %arg13[%c0_14, %c1, %c0_15], %14 {strides = array<i32>} : memref<2x18x256xf32, #tpu.memory_space<vmem>>, vector<2x16x256xf32>,
    %c0_16 = arith.constant 0 : index
    %c0_17 = arith.constant 0 : index
    %c0_18 = arith.constant 0 : index
    %16 = vector.load %arg13[%c0_16, %c0_17, %c0_18] : memref<2x18x256xf32, #tpu.memory_space<vmem>>, vector<2x16x256xf32>
    %c0_19 = arith.constant 0 : index
    %c1_20 = arith.constant 1 : index
    %c0_21 = arith.constant 0 : index
    %17 = vector.load %arg13[%c0_19, %c1_20, %c0_21] : memref<2x18x256xf32, #tpu.memory_space<vmem>>, vector<2x16x256xf32>
    %c0_22 = arith.constant 0 : index
    %c2 = arith.constant 2 : index
    %c0_23 = arith.constant 0 : index
    %18 = vector.load %arg13[%c0_22, %c2, %c0_23] : memref<2x18x256xf32, #tpu.memory_space<vmem>>, vector<2x16x256xf32>
    %19 = tpu.concatenate %16, %17, %18 in 2 : vector<2x16x256xf32>, vector<2x16x256xf32>, vector<2x16x256xf32> -> vector<2x16x768xf32>
    %20 = vector.shape_cast %19 : vector<2x16x768xf32> to vector<32x768xf32>
    %21 = arith.truncf %20 : vector<32x768xf32> to vector<32x768xbf16>
    %c0_24 = arith.constant 0 : index
    %c0_25 = arith.constant 0 : index
    %22 = vector.load %arg5[%c0_24, %c0_25] : memref<768x512xbf16, #tpu.memory_space<vmem>>, vector<768x512xbf16>
    %cst_26 = arith.constant dense<0.000000e+00> : vector<32x512xf32>
    %23 = tpu.matmul %21, %22, %cst_26 {dimension_numbers = #tpu.dot_dimension_numbers<[1], [0], [0], [1], [0, 0, 1, 1], [], []>} : vector<32x768xbf16>, vector<768x512xbf16>, vector<32x512xf32> -> vector<32x512xf32>
    %c0_27 = arith.constant 0 : index
    %c0_28 = arith.constant 0 : index
    %24 = vector.load %arg6[%c0_27, %c0_28] : memref<1x512xf32, #tpu.memory_space<vmem>>, vector<1x512xf32>
    %25 = vector.broadcast %24 : vector<1x512xf32> to vector<32x512xf32>
    %26 = arith.addf %23, %25 : vector<32x512xf32>
    %cst_29 = arith.constant 0.000000e+00 : f32
    %27 = vector.broadcast %cst_29 : f32 to vector<32x512xf32>
    %28 = arith.maximumf %26, %27 : vector<32x512xf32>
    %29 = vector.shape_cast %28 : vector<32x512xf32> to vector<16x2x512xf32>
    %30 = vector.extract_strided_slice %29 {offsets = [0, 0, 0], sizes = [16, 1, 512], strides = [1, 1, 1]} : vector<16x2x512xf32> to vector<16x1x512xf32>
    %31 = vector.shape_cast %30 : vector<16x1x512xf32> to vector<16x512xf32>
    %32 = vector.extract_strided_slice %29 {offsets = [0, 1, 0], sizes = [16, 1, 512], strides = [1, 1, 1]} : vector<16x2x512xf32> to vector<16x1x512xf32>
    %33 = vector.shape_cast %32 : vector<16x1x512xf32> to vector<16x512xf32>
    %34 = arith.maximumf %31, %33 : vector<16x512xf32>
    %35 = vector.extract_strided_slice %34 {offsets = [0, 0], sizes = [16, 256], strides = [1, 1]} : vector<16x512xf32> to vector<16x256xf32>
    %36 = vector.extract_strided_slice %34 {offsets = [0, 256], sizes = [16, 256], strides = [1, 1]} : vector<16x512xf32> to vector<16x256xf32>
    %37 = arith.maximumf %35, %36 : vector<16x256xf32>
    %38 = vector.shape_cast %37 : vector<16x256xf32> to vector<2x2048xf32>
    %39 = arith.truncf %38 : vector<2x2048xf32> to vector<2x2048xbf16>
    %c0_30 = arith.constant 0 : index
    %c0_31 = arith.constant 0 : index
    %40 = vector.load %arg7[%c0_30, %c0_31] : memref<2048x128xbf16, #tpu.memory_space<vmem>>, vector<2048x128xbf16>
    %cst_32 = arith.constant dense<0.000000e+00> : vector<2x128xf32>
    %41 = tpu.matmul %39, %40, %cst_32 {dimension_numbers = #tpu.dot_dimension_numbers<[1], [0], [0], [1], [0, 0, 1, 1], [], []>} : vector<2x2048xbf16>, vector<2048x128xbf16>, vector<2x128xf32> -> vector<2x128xf32>
    %c0_33 = arith.constant 0 : index
    %c0_34 = arith.constant 0 : index
    %42 = vector.load %arg2[%c0_33, %c0_34] : memref<2x8xf32, #tpu.memory_space<vmem>>, vector<2x8xf32>
    %43 = arith.truncf %42 : vector<2x8xf32> to vector<2x8xbf16>
    %c0_35 = arith.constant 0 : index
    %c0_36 = arith.constant 0 : index
    %44 = vector.load %arg8[%c0_35, %c0_36] : memref<8x128xbf16, #tpu.memory_space<vmem>>, vector<8x128xbf16>
    %cst_37 = arith.constant dense<0.000000e+00> : vector<2x128xf32>
    %45 = tpu.matmul %43, %44, %cst_37 {dimension_numbers = #tpu.dot_dimension_numbers<[1], [0], [0], [1], [0, 0, 1, 1], [], []>} : vector<2x8xbf16>, vector<8x128xbf16>, vector<2x128xf32> -> vector<2x128xf32>
    %46 = arith.addf %41, %45 : vector<2x128xf32>
    %c0_38 = arith.constant 0 : index
    %c0_39 = arith.constant 0 : index
    %47 = vector.load %arg9[%c0_38, %c0_39] : memref<1x128xf32, #tpu.memory_space<vmem>>, vector<1x128xf32>
    %48 = vector.broadcast %47 : vector<1x128xf32> to vector<2x128xf32>
    %49 = arith.addf %46, %48 : vector<2x128xf32>
    %cst_40 = arith.constant 0.000000e+00 : f32
    %50 = vector.broadcast %cst_40 : f32 to vector<2x128xf32>
    %51 = arith.maximumf %49, %50 : vector<2x128xf32>
    %52 = arith.truncf %51 : vector<2x128xf32> to vector<2x128xbf16>
    %c0_41 = arith.constant 0 : index
    %c0_42 = arith.constant 0 : index
    %53 = vector.load %arg10[%c0_41, %c0_42] : memref<128x128xbf16, #tpu.memory_space<vmem>>, vector<128x128xbf16>
    %cst_43 = arith.constant dense<0.000000e+00> : vector<2x128xf32>
    %54 = tpu.matmul %52, %53, %cst_43 {dimension_numbers = #tpu.dot_dimension_numbers<[1], [0], [0], [1], [0, 0, 1, 1], [], []>} : vector<2x128xbf16>, vector<128x128xbf16>, vector<2x128xf32> -> vector<2x128xf32>
    %c0_44 = arith.constant 0 : index
    %c0_45 = arith.constant 0 : index
    %55 = vector.load %arg11[%c0_44, %c0_45] : memref<1x128xf32, #tpu.memory_space<vmem>>, vector<1x128xf32>
    %56 = vector.broadcast %55 : vector<1x128xf32> to vector<2x128xf32>
    %57 = arith.addf %54, %56 : vector<2x128xf32>
    %c0_46 = arith.constant 0 : index
    %c0_47 = arith.constant 0 : index
    %58 = vector.load %arg12[%c0_46, %c0_47] : memref<2x128xf32, #tpu.memory_space<vmem>>, vector<2x128xf32>
    tpu.vector_store %arg12[%c0_46, %c0_47], %57 {strides = array<i32>} : memref<2x128xf32, #tpu.memory_space<vmem>>, vector<2x128xf32>,
    return
  }
  func.func @transform_0(%arg0: i32) -> (i32, i32, i32) {
    %c0_i32 = arith.constant 0 : i32
    %c0_i32_0 = arith.constant 0 : i32
    %c0_i32_1 = arith.constant 0 : i32
    return %arg0, %c0_i32, %c0_i32_0 : i32, i32, i32
  }
  func.func @transform_1(%arg0: i32) -> (i32, i32) {
    %c0_i32 = arith.constant 0 : i32
    %c0_i32_0 = arith.constant 0 : i32
    return %arg0, %c0_i32 : i32, i32
  }
  func.func @transform_2(%arg0: i32) -> (i32, i32) {
    %c0_i32 = arith.constant 0 : i32
    %c0_i32_0 = arith.constant 0 : i32
    %c0_i32_1 = arith.constant 0 : i32
    return %c0_i32, %c0_i32_0 : i32, i32
  }
  func.func @transform_3(%arg0: i32) -> (i32, i32) {
    %c0_i32 = arith.constant 0 : i32
    %c0_i32_0 = arith.constant 0 : i32
    %c0_i32_1 = arith.constant 0 : i32
    return %c0_i32, %c0_i32_0 : i32, i32
  }
  func.func @transform_4(%arg0: i32) -> (i32, i32) {
    %c0_i32 = arith.constant 0 : i32
    %c0_i32_0 = arith.constant 0 : i32
    %c0_i32_1 = arith.constant 0 : i32
    return %c0_i32, %c0_i32_0 : i32, i32
  }
  func.func @transform_5(%arg0: i32) -> (i32, i32) {
    %c0_i32 = arith.constant 0 : i32
    %c0_i32_0 = arith.constant 0 : i32
    %c0_i32_1 = arith.constant 0 : i32
    return %c0_i32, %c0_i32_0 : i32, i32
  }
  func.func @transform_6(%arg0: i32) -> (i32, i32) {
    %c0_i32 = arith.constant 0 : i32
    %c0_i32_0 = arith.constant 0 : i32
    %c0_i32_1 = arith.constant 0 : i32
    return %c0_i32, %c0_i32_0 : i32, i32
  }
  func.func @transform_7(%arg0: i32) -> (i32, i32) {
    %c0_i32 = arith.constant 0 : i32
    %c0_i32_0 = arith.constant 0 : i32
    %c0_i32_1 = arith.constant 0 : i32
    return %c0_i32, %c0_i32_0 : i32, i32
  }
  func.func @transform_8(%arg0: i32) -> (i32, i32) {
    %c0_i32 = arith.constant 0 : i32
    %c0_i32_0 = arith.constant 0 : i32
    %c0_i32_1 = arith.constant 0 : i32
    return %c0_i32, %c0_i32_0 : i32, i32
  }
  func.func @transform_9(%arg0: i32) -> (i32, i32) {
    %c0_i32 = arith.constant 0 : i32
    %c0_i32_0 = arith.constant 0 : i32
    %c0_i32_1 = arith.constant 0 : i32
    return %c0_i32, %c0_i32_0 : i32, i32
  }
  func.func @transform_10(%arg0: i32) -> (i32, i32) {
    %c0_i32 = arith.constant 0 : i32
    %c0_i32_0 = arith.constant 0 : i32
    %c0_i32_1 = arith.constant 0 : i32
    return %c0_i32, %c0_i32_0 : i32, i32
  }
  func.func @transform_11(%arg0: i32) -> (i32, i32) {
    %c0_i32 = arith.constant 0 : i32
    %c0_i32_0 = arith.constant 0 : i32
    return %arg0, %c0_i32 : i32, i32
  }
}

</mosaic_0001>

<llo_original>
// kernel: hybrid_cnn_forward.1
$region0: #{hybrid_cnn_forward.1}
  #allocation0 [shape = 'u32[]', space=smem, size = 0x4, offset = 0x4, fixed_abs, tag = 'smem constant byte address 0x4 - core index']
  #allocation1 [shape = 'u32[144,128]{1,0:T(1,128)}', space=vmem, size = 0x12000, scoped, tag = 'internal scratch']
  #allocation2 [shape = 'f32[2,18,256]{2,1,0:T(8,128)}', space=vmem, size = 0xc000, scoped, tag = 'scratch operand']
  %s0 = inlined_call_operand.vmem [shape: f32[2,16,192], index: 0, kind: input, shape index: {}]
  %s1 = inlined_call_operand.vmem [shape: f32[2,8], index: 1, kind: input, shape index: {}]
  %s2 = inlined_call_operand.vmem [shape: bf16[192,256], index: 2, kind: input, shape index: {}]
  %s3 = inlined_call_operand.vmem [shape: f32[1,256], index: 3, kind: input, shape index: {}]
  %s4 = inlined_call_operand.hbm [shape: bf16[768,512], index: 4, kind: input, shape index: {}]
  %s5 = inlined_call_operand.vmem [shape: f32[1,512], index: 5, kind: input, shape index: {}]
  %s6 = inlined_call_operand.hbm [shape: bf16[2048,128], index: 6, kind: input, shape index: {}]
  %s7 = inlined_call_operand.vmem [shape: bf16[8,128], index: 7, kind: input, shape index: {}]
  %s8 = inlined_call_operand.vmem [shape: f32[1,128], index: 8, kind: input, shape index: {}]
  %s9 = inlined_call_operand.vmem [shape: bf16[128,128], index: 9, kind: input, shape index: {}]
  %s10 = inlined_call_operand.vmem [shape: f32[1,128], index: 10, kind: input, shape index: {}]
  %s11 = inlined_call_operand.hbm [shape: f32[2,128], index: 11, kind: output, shape index: {}]
  %s12 = sld [smem:[#allocation0]]
  $region62: #{hybrid_cnn_forward.1} parent=0
    _
  %s14 = ssub.s32 1, %s12
  %s15 = scalar_select 0, %s14, %s12
  $region1: #{hybrid_cnn_forward.1} parent=0
    #allocation3 [shape = 'u8[786432]{0}', space=vmem, size = 0xc0000, scoped, tag = 'input window, operand 4, single buffered']
    #allocation4 [shape = 's32[1]{0}', space=sflag, size = 0x4, scoped, tag = 'scoped memory for hybrid_cnn_forward.1']
    #allocation5 [shape = 's32[1]{0}', space=sflag, size = 0x4, scoped, tag = 'scoped memory for hybrid_cnn_forward.1']
    #allocation6 [shape = 'u8[524288]{0}', space=vmem, size = 0x80000, scoped, tag = 'input window, operand 6, single buffered']
    #allocation7 [shape = 's32[1]{0}', space=sflag, size = 0x4, scoped, tag = 'scoped memory for hybrid_cnn_forward.1']
    #allocation8 [shape = 'u8[1024]{0}', space=vmem, size = 0x400, scoped, tag = 'output window, operand 0, single buffered']
    %16 = vsyncpa [#allocation4], 0
    %17 = vsyncpa [#allocation7], 0
    %18 = vsyncpa [#allocation5], 0
    // Predicated region
    $region2: #{hybrid_cnn_forward.1} parent=1 // pred_check
      _
    $region3: #{hybrid_cnn_forward.1} parent=1 // pred_check_branch
      %20 = sbr.rel (0) target = $region5
    $region4: #{hybrid_cnn_forward.1} parent=1 // pred_region
      _
    $region5: #{hybrid_cnn_forward.1} parent=1 // pred_fallthru
      _
    // Predicated region
    $region6: #{hybrid_cnn_forward.1} parent=1 // pred_check
      _
    $region7: #{hybrid_cnn_forward.1} parent=1 // pred_check_branch
      %22 = sbr.rel (0) target = $region9
    $region8: #{hybrid_cnn_forward.1} parent=1 // pred_region
      _
    $region9: #{hybrid_cnn_forward.1} parent=1 // pred_fallthru
      _
    // Predicated region
    $region10: #{hybrid_cnn_forward.1} parent=1 // pred_check
      _
    $region11: #{hybrid_cnn_forward.1} parent=1 // pred_check_branch
      %24 = sbr.rel (0) target = $region13
    $region12: #{hybrid_cnn_forward.1} parent=1 // pred_region
      _
    $region13: #{hybrid_cnn_forward.1} parent=1 // pred_fallthru
      _
    // Predicated region
    $region14: #{hybrid_cnn_forward.1} parent=1 // pred_check
      _
    $region15: #{hybrid_cnn_forward.1} parent=1 // pred_check_branch
      %26 = sbr.rel (0) target = $region17
    $region16: #{hybrid_cnn_forward.1} parent=1 // pred_region
      _
    $region17: #{hybrid_cnn_forward.1} parent=1 // pred_fallthru
      _
    // Predicated region
    $region18: #{hybrid_cnn_forward.1} parent=1 // pred_check
      _
    $region19: #{hybrid_cnn_forward.1} parent=1 // pred_check_branch
      %28 = sbr.rel (0) target = $region21
    $region20: #{hybrid_cnn_forward.1} parent=1 // pred_region
      %s30 = ssub.s32 24576, 24576
      %31 = vsyncadd [#allocation4], %s30
      %s32 = sshll.u32 [#allocation3], 4
      %s33 = int_to_ptr.vmem [resolvable:$true] %s32
      %38 = dma.hbm_to_vmem [thread:$0]  %s4, 24576, %s33, [#allocation4], 256, 256, 16
    $region21: #{hybrid_cnn_forward.1} parent=1 // pred_fallthru
      _
    // Predicated region
    $region22: #{hybrid_cnn_forward.1} parent=1 // pred_check
      _
    $region23: #{hybrid_cnn_forward.1} parent=1 // pred_check_branch
      %40 = sbr.rel (0) target = $region25
    $region24: #{hybrid_cnn_forward.1} parent=1 // pred_region
      _
    $region25: #{hybrid_cnn_forward.1} parent=1 // pred_fallthru
      _
    // Predicated region
    $region26: #{hybrid_cnn_forward.1} parent=1 // pred_check
      _
    $region27: #{hybrid_cnn_forward.1} parent=1 // pred_check_branch
      %42 = sbr.rel (0) target = $region29
    $region28: #{hybrid_cnn_forward.1} parent=1 // pred_region
      %s44 = ssub.s32 16384, 16384
      %45 = vsyncadd [#allocation7], %s44
      %s46 = sshll.u32 [#allocation6], 4
      %s47 = int_to_ptr.vmem [resolvable:$true] %s46
      %52 = dma.hbm_to_vmem [thread:$0]  %s6, 16384, %s47, [#allocation7], 64, 64, 4
    $region29: #{hybrid_cnn_forward.1} parent=1 // pred_fallthru
      _
    // Predicated region
    $region30: #{hybrid_cnn_forward.1} parent=1 // pred_check
      _
    $region31: #{hybrid_cnn_forward.1} parent=1 // pred_check_branch
      %54 = sbr.rel (0) target = $region33
    $region32: #{hybrid_cnn_forward.1} parent=1 // pred_region
      _
    $region33: #{hybrid_cnn_forward.1} parent=1 // pred_fallthru
      _
    // Predicated region
    $region34: #{hybrid_cnn_forward.1} parent=1 // pred_check
      _
    $region35: #{hybrid_cnn_forward.1} parent=1 // pred_check_branch
      %56 = sbr.rel (0) target = $region37
    $region36: #{hybrid_cnn_forward.1} parent=1 // pred_region
      _
    $region37: #{hybrid_cnn_forward.1} parent=1 // pred_fallthru
      _
    // Predicated region
    $region38: #{hybrid_cnn_forward.1} parent=1 // pred_check
      _
    $region39: #{hybrid_cnn_forward.1} parent=1 // pred_check_branch
      %58 = sbr.rel (0) target = $region41
    $region40: #{hybrid_cnn_forward.1} parent=1 // pred_region
      _
    $region41: #{hybrid_cnn_forward.1} parent=1 // pred_fallthru
      _
    // Predicated region
    $region42: #{hybrid_cnn_forward.1} parent=1 // pred_check
      _
    $region43: #{hybrid_cnn_forward.1} parent=1 // pred_check_branch
      %60 = sbr.rel (0) target = $region45
    $region44: #{hybrid_cnn_forward.1} parent=1 // pred_region
      _
    $region45: #{hybrid_cnn_forward.1} parent=1 // pred_fallthru
      _
    // Predicated region
    $region46: #{hybrid_cnn_forward.1} parent=1 // pred_check
      _
    $region47: #{hybrid_cnn_forward.1} parent=1 // pred_check_branch
      %62 = sbr.rel (0) target = $region49
    $region48: #{hybrid_cnn_forward.1} parent=1 // pred_region
      %63 = dma.done [#allocation4], 24576
    $region49: #{hybrid_cnn_forward.1} parent=1 // pred_fallthru
      _
    // Predicated region
    $region50: #{hybrid_cnn_forward.1} parent=1 // pred_check
      _
    $region51: #{hybrid_cnn_forward.1} parent=1 // pred_check_branch
      %65 = sbr.rel (0) target = $region53
    $region52: #{hybrid_cnn_forward.1} parent=1 // pred_region
      %66 = dma.done [#allocation7], 16384
    $region53: #{hybrid_cnn_forward.1} parent=1 // pred_fallthru
      _
    %v68 = vld [vmem:[%s0] sm:$0xff]
    %v69 = vld [vmem:[%s0 + $0x8] sm:$0xff]
    %v70 = vld [vmem:[%s0 + $0x10] sm:$0xff]
    %v71 = vld [vmem:[%s0 + $0x18] sm:$0xff]
    %v72 = vld [vmem:[%s0 + $0x20] sm:$0xff]
    %v73 = vld [vmem:[%s0 + $0x28] sm:$0xff]
    %v74 = vld [vmem:[%s0 + $0x30] sm:$0xff]
    %v75 = vld [vmem:[%s0 + $0x38] sm:$0xff]
    %v76 = vpack.c.bf16 %v70, %v68
    %v77 = vpack.c.bf16 %v71, %v69
    %v78 = vpack.c.bf16 %v74, %v72
    %v79 = vpack.c.bf16 %v75, %v73
    %v80 = vld [vmem:[%s2] sm:$0xff]
    %v81 = vld [vmem:[%s2 + $0x8] sm:$0xff]
    %v82 = vld [vmem:[%s2 + $0x10] sm:$0xff]
    %v83 = vld [vmem:[%s2 + $0x18] sm:$0xff]
    %v84 = vld [vmem:[%s2 + $0x20] sm:$0xff]
    %v85 = vld [vmem:[%s2 + $0x28] sm:$0xff]
    %v86 = vld [vmem:[%s2 + $0x30] sm:$0xff]
    %v87 = vld [vmem:[%s2 + $0x38] sm:$0xff]
    %v88 = vld [vmem:[%s2 + $0x40] sm:$0xff]
    %v89 = vld [vmem:[%s2 + $0x48] sm:$0xff]
    %v90 = vld [vmem:[%s2 + $0x50] sm:$0xff]
    %v91 = vld [vmem:[%s2 + $0x58] sm:$0xff]
    %v92 = vld [vmem:[%s2 + $0x60] sm:$0xff]
    %v93 = vld [vmem:[%s2 + $0x68] sm:$0xff]
    %v94 = vld [vmem:[%s2 + $0x70] sm:$0xff]
    %v95 = vld [vmem:[%s2 + $0x78] sm:$0xff]
    %v96 = vld [vmem:[%s2 + $0x80] sm:$0xff]
    %v97 = vld [vmem:[%s2 + $0x88] sm:$0xff]
    %v98 = vld [vmem:[%s2 + $0x90] sm:$0xff]
    %v99 = vld [vmem:[%s2 + $0x98] sm:$0xff]
    %v100 = vld [vmem:[%s2 + $0xa0] sm:$0xff]
    %v101 = vld [vmem:[%s2 + $0xa8] sm:$0xff]
    %v102 = vld [vmem:[%s2 + $0xb0] sm:$0xff]
    %v103 = vld [vmem:[%s2 + $0xb8] sm:$0xff]
    %v104 = vld [vmem:[%s3] sm:$0x3]
    %v106 = vlaneseq
    %v107 = vshrl.u32 %v106, 7
    %v108 = vsub.s32 0, %v107
    %v109 = vrot.slane %v104, %v108
    %v110 = vlaneseq
    %v111 = vshrl.u32 %v110, 7
    %v112 = vsub.s32 1, %v111
    %v113 = vrot.slane %v104, %v112
    %v140 = vunpack.c.l.b16 %v80
    %v141 = vunpack.c.h.b16 %v80
    %v142 = vunpack.c.l.b16 %v81
    %v143 = vunpack.c.h.b16 %v81
    %v144 = vunpack.c.l.b16 %v82
    %v145 = vunpack.c.h.b16 %v82
    %v146 = vunpack.c.l.b16 %v83
    %v147 = vunpack.c.h.b16 %v83
    %v148 = vunpack.c.l.b16 %v84
    %v149 = vunpack.c.h.b16 %v84
    %v150 = vunpack.c.l.b16 %v85
    %v151 = vunpack.c.h.b16 %v85
    %v152 = vunpack.c.l.b16 %v86
    %v153 = vunpack.c.h.b16 %v86
    %v154 = vunpack.c.l.b16 %v87
    %v155 = vunpack.c.h.b16 %v87
    %v156 = vunpack.c.l.b16 %v88
    %v157 = vunpack.c.h.b16 %v88
    %v158 = vunpack.c.l.b16 %v89
    %v159 = vunpack.c.h.b16 %v89
    %v160 = vunpack.c.l.b16 %v90
    %v161 = vunpack.c.h.b16 %v90
    %v162 = vunpack.c.l.b16 %v91
    %v163 = vunpack.c.h.b16 %v91
    %v164 = vunpack.c.l.b16 %v92
    %v165 = vunpack.c.h.b16 %v92
    %v166 = vunpack.c.l.b16 %v93
    %v167 = vunpack.c.h.b16 %v93
    %v168 = vunpack.c.l.b16 %v94
    %v169 = vunpack.c.h.b16 %v94
    %v170 = vunpack.c.l.b16 %v95
    %v171 = vunpack.c.h.b16 %v95
    %v172 = vunpack.c.l.b16 %v96
    %v173 = vunpack.c.h.b16 %v96
    %v174 = vunpack.c.l.b16 %v97
    %v175 = vunpack.c.h.b16 %v97
    %v176 = vunpack.c.l.b16 %v98
    %v177 = vunpack.c.h.b16 %v98
    %v178 = vunpack.c.l.b16 %v99
    %v179 = vunpack.c.h.b16 %v99
    %v180 = vunpack.c.l.b16 %v100
    %v181 = vunpack.c.h.b16 %v100
    %v182 = vunpack.c.l.b16 %v101
    %v183 = vunpack.c.h.b16 %v101
    %v184 = vunpack.c.l.b16 %v102
    %v185 = vunpack.c.h.b16 %v102
    %v186 = vunpack.c.l.b16 %v103
    %v187 = vunpack.c.h.b16 %v103
    %v188 = vpack.c.b16 %v142, %v140
    %v189 = vpack.c.b16 %v143, %v141
    %v190 = vpack.c.b16 %v146, %v144
    %v191 = vpack.c.b16 %v147, %v145
    %v192 = vpack.c.b16 %v150, %v148
    %v193 = vpack.c.b16 %v151, %v149
    %v194 = vpack.c.b16 %v154, %v152
    %v195 = vpack.c.b16 %v155, %v153
    %v196 = vpack.c.b16 %v158, %v156
    %v197 = vpack.c.b16 %v159, %v157
    %v198 = vpack.c.b16 %v162, %v160
    %v199 = vpack.c.b16 %v163, %v161
    %v200 = vpack.c.b16 %v166, %v164
    %v201 = vpack.c.b16 %v167, %v165
    %v202 = vpack.c.b16 %v170, %v168
    %v203 = vpack.c.b16 %v171, %v169
    %v204 = vpack.c.b16 %v174, %v172
    %v205 = vpack.c.b16 %v175, %v173
    %v206 = vpack.c.b16 %v178, %v176
    %v207 = vpack.c.b16 %v179, %v177
    %v208 = vpack.c.b16 %v182, %v180
    %v209 = vpack.c.b16 %v183, %v181
    %v210 = vpack.c.b16 %v186, %v184
    %v211 = vpack.c.b16 %v187, %v185
    %vm236 = vcmask 523264
    %v238 = vsel %vm236, %v77, 0
    %v241 = vsel %vm236, %v79, 0
    %243 = vmatprep.subr.bf16.mxu0 %v189
    %244 = vmatpush1.bf16.msra.mxu0 %v188
    %245 = vmatprep.subr.bf16.mxu0 %v191
    %246 = vmatpush1.bf16.msra.mxu0 %v190
    %247 = vmatprep.subr.bf16.mxu0 %v193
    %248 = vmatpush1.bf16.msra.mxu0 %v192
    %249 = vmatprep.subr.bf16.mxu0 %v195
    %250 = vmatpush1.bf16.msra.mxu0 %v194
    %251 = vmatprep.subr.bf16.mxu0 %v197
    %252 = vmatpush1.bf16.msra.mxu0 %v196
    %253 = vmatprep.subr.bf16.mxu0 %v199
    %254 = vmatpush1.bf16.msra.mxu0 %v198
    %255 = vmatprep.subr.bf16.mxu0 %v201
    %256 = vmatpush1.bf16.msra.mxu0 %v200
    %257 = vmatprep.subr.bf16.mxu0 %v203
    %258 = vmatpush1.bf16.msra.mxu0 %v202
    %259 = vmatprep.subr.bf16.mxu0 %v205
    %260 = vmatpush1.bf16.msra.mxu0 %v204
    %261 = vmatprep.subr.bf16.mxu0 %v207
    %262 = vmatpush1.bf16.msra.mxu0 %v206
    %263 = vmatprep.subr.bf16.mxu0 %v209
    %264 = vmatpush1.bf16.msra.mxu0 %v208
    %265 = vmatprep.subr.bf16.mxu0 %v211
    %266 = vmatpush1.bf16.msra.mxu0 %v210
    %267 = vmatprep.subr.bf16.mxu0 0
    %268 = vmatpush1.bf16.msra.mxu0 0
    %269 = vmatprep.subr.bf16.mxu0 0
    %270 = vmatpush1.bf16.msra.mxu0 0
    %271 = vmatprep.subr.bf16.mxu0 0
    %272 = vmatpush1.bf16.msra.mxu0 0
    %273 = vmatprep.subr.bf16.mxu0 0
    %274 = vmatpush1.bf16.msra.mxu0 0
    %275 = vmatprep.mubr.bf16.mxu0 %v238
    %276 = vmatmul.mubr.bf16.gmra.mrb[0].mxu0 %v76
    %v277 = vpop.f32.mrb[0].mxu0
    %v278 = vadd.f32 %v109, %v277
    %v279 = vpop.f32.mrb[0].mxu0
    %v280 = vadd.f32 %v113, %v279
    %v281 = vpop.f32.mrb[0].mxu0
    %v282 = vadd.f32 %v109, %v281
    %v283 = vpop.f32.mrb[0].mxu0
    %v284 = vadd.f32 %v113, %v283
    %285 = vmatprep.mubr.bf16.mxu0 %v241
    %286 = vmatmul.mubr.bf16.gmra.mrb[0].mxu0 %v78
    %v287 = vpop.f32.mrb[0].mxu0
    %v288 = vadd.f32 %v109, %v287
    %v289 = vpop.f32.mrb[0].mxu0
    %v290 = vadd.f32 %v113, %v289
    %v291 = vpop.f32.mrb[0].mxu0
    %v292 = vadd.f32 %v109, %v291
    %v293 = vpop.f32.mrb[0].mxu0
    %v294 = vadd.f32 %v113, %v293
    %295 = vdwg.mxu0
    %v296 = vmax.f32 %v278, 0.0
    %v297 = vmax.f32 %v280, 0.0
    %v298 = vmax.f32 %v282, 0.0
    %v299 = vmax.f32 %v284, 0.0
    %v300 = vmax.f32 %v288, 0.0
    %v301 = vmax.f32 %v290, 0.0
    %v302 = vmax.f32 %v292, 0.0
    %v303 = vmax.f32 %v294, 0.0
    %v304 = vlaneseq
    %vm305 = vcmp.ge.s32.totalorder %v304, 0
    %vm306 = vcmp.lt.s32.totalorder %v304, 256
    %vm307 = vmand %vm305, %vm306
    %308 = vst.msk [vmem:[#allocation2] ss:$8 sm:$0x3] %vm307, 0.0
    %309 = vst.msk [vmem:[#allocation2] ss:$8 sm:$0x0] %vm307, 0.0
    %s310 = scalar_lea.vmem [#allocation2], 48
    %311 = vst.msk [vmem:[%s310] ss:$8 sm:$0x3] %vm307, 0.0
    %312 = vst.msk [vmem:[%s310] ss:$8 sm:$0x0] %vm307, 0.0
    %s313 = scalar_lea.vmem [#allocation2], 33
    %314 = vst.msk [vmem:[%s313] ss:$8 sm:$0x3] %vm307, 0.0
    %315 = vst.msk [vmem:[%s313] ss:$8 sm:$0x0] %vm307, 0.0
    %s316 = scalar_lea.vmem [#allocation2], 81
    %317 = vst.msk [vmem:[%s316] ss:$8 sm:$0x3] %vm307, 0.0
    %318 = vst.msk [vmem:[%s316] ss:$8 sm:$0x0] %vm307, 0.0
    %vm327 = vcmask 1040384
    %v328 = vrot.slane %v296, 7
    %v329 = vrot.slane %v297, 7
    %v330 = vrot.slane %v298, 7
    %v331 = vsel %vm327, %v328, %v330
    %v332 = vrot.slane %v299, 7
    %v333 = vsel %vm327, %v329, %v332
    %v334 = vrot.slane %v300, 7
    %v335 = vrot.slane %v301, 7
    %v336 = vrot.slane %v302, 7
    %v337 = vsel %vm327, %v334, %v336
    %v338 = vrot.slane %v303, 7
    %v339 = vsel %vm327, %v335, %v338
    %352 = vst [vmem:[#allocation2] sm:$0xfe] %v328
    %353 = vst [vmem:[#allocation2 + $0x8] sm:$0xfe] %v329
    %354 = vst [vmem:[#allocation2 + $0x10] sm:$0xff] %v331
    %355 = vst [vmem:[#allocation2 + $0x18] sm:$0xff] %v333
    %356 = vst [vmem:[#allocation2 + $0x20] sm:$0x1] %v330
    %357 = vst [vmem:[#allocation2 + $0x28] sm:$0x1] %v332
    %358 = vst [vmem:[#allocation2 + $0x30] sm:$0xfe] %v334
    %359 = vst [vmem:[#allocation2 + $0x38] sm:$0xfe] %v335
    %360 = vst [vmem:[#allocation2 + $0x40] sm:$0xff] %v337
    %361 = vst [vmem:[#allocation2 + $0x48] sm:$0xff] %v339
    %362 = vst [vmem:[#allocation2 + $0x50] sm:$0x1] %v336
    %363 = vst [vmem:[#allocation2 + $0x58] sm:$0x1] %v338
    %v364 = vld [vmem:[#allocation2] sm:$0xff]
    %v365 = vld [vmem:[#allocation2 + $0x8] sm:$0xff]
    %v366 = vld [vmem:[#allocation2 + $0x10] sm:$0xff]
    %v367 = vld [vmem:[#allocation2 + $0x18] sm:$0xff]
    %v368 = vld [vmem:[#allocation2 + $0x30] sm:$0xff]
    %v369 = vld [vmem:[#allocation2 + $0x38] sm:$0xff]
    %v370 = vld [vmem:[#allocation2 + $0x40] sm:$0xff]
    %v371 = vld [vmem:[#allocation2 + $0x48] sm:$0xff]
    %v372 = vld [vmem:[#allocation2] sm:$0xfe]
    %v373 = vld [vmem:[#allocation2 + $0x8] sm:$0xfe]
    %v374 = vld [vmem:[#allocation2 + $0x20] sm:$0x1]
    %v375 = vld [vmem:[#allocation2 + $0x28] sm:$0x1]
    %v376 = vld [vmem:[#allocation2 + $0x30] sm:$0xfe]
    %v377 = vld [vmem:[#allocation2 + $0x38] sm:$0xfe]
    %v378 = vld [vmem:[#allocation2 + $0x50] sm:$0x1]
    %v379 = vld [vmem:[#allocation2 + $0x58] sm:$0x1]
    %v380 = vld [vmem:[#allocation2] sm:$0xfc]
    %v381 = vld [vmem:[#allocation2 + $0x8] sm:$0xfc]
    %v382 = vld [vmem:[#allocation2 + $0x20] sm:$0x3]
    %v383 = vld [vmem:[#allocation2 + $0x28] sm:$0x3]
    %v384 = vld [vmem:[#allocation2 + $0x30] sm:$0xfc]
    %v385 = vld [vmem:[#allocation2 + $0x38] sm:$0xfc]
    %v386 = vld [vmem:[#allocation2 + $0x50] sm:$0x3]
    %v387 = vld [vmem:[#allocation2 + $0x58] sm:$0x3]
    %vm400 = vcmask 1046528
    %v401 = vrot.slane %v372, 1
    %v402 = vrot.slane %v366, 1
    %v403 = vsel %vm400, %v401, %v402
    %v404 = vrot.slane %v373, 1
    %v405 = vrot.slane %v367, 1
    %v406 = vsel %vm400, %v404, %v405
    %v407 = vrot.slane %v374, 1
    %v408 = vsel %vm400, %v402, %v407
    %v409 = vrot.slane %v375, 1
    %v410 = vsel %vm400, %v405, %v409
    %v411 = vrot.slane %v376, 1
    %v412 = vrot.slane %v370, 1
    %v413 = vsel %vm400, %v411, %v412
    %v414 = vrot.slane %v377, 1
    %v415 = vrot.slane %v371, 1
    %v416 = vsel %vm400, %v414, %v415
    %v417 = vrot.slane %v378, 1
    %v418 = vsel %vm400, %v412, %v417
    %v419 = vrot.slane %v379, 1
    %v420 = vsel %vm400, %v415, %v419
    %vm437 = vcmask 1045504
    %v438 = vrot.slane %v380, 2
    %v439 = vrot.slane %v366, 2
    %v440 = vsel %vm437, %v438, %v439
    %v441 = vrot.slane %v381, 2
    %v442 = vrot.slane %v367, 2
    %v443 = vsel %vm437, %v441, %v442
    %v444 = vrot.slane %v382, 2
    %v445 = vsel %vm437, %v439, %v444
    %v446 = vrot.slane %v383, 2
    %v447 = vsel %vm437, %v442, %v446
    %v448 = vrot.slane %v384, 2
    %v449 = vrot.slane %v370, 2
    %v450 = vsel %vm437, %v448, %v449
    %v451 = vrot.slane %v385, 2
    %v452 = vrot.slane %v371, 2
    %v453 = vsel %vm437, %v451, %v452
    %v454 = vrot.slane %v386, 2
    %v455 = vsel %vm437, %v449, %v454
    %v456 = vrot.slane %v387, 2
    %v457 = vsel %vm437, %v452, %v456
    %v466 = vpack.c.bf16 %v366, %v364
    %v467 = vpack.c.bf16 %v367, %v365
    %v468 = vpack.c.bf16 %v408, %v403
    %v469 = vpack.c.bf16 %v410, %v406
    %v470 = vpack.c.bf16 %v445, %v440
    %v471 = vpack.c.bf16 %v447, %v443
    %v472 = vpack.c.bf16 %v370, %v368
    %v473 = vpack.c.bf16 %v371, %v369
    %v474 = vpack.c.bf16 %v418, %v413
    %v475 = vpack.c.bf16 %v420, %v416
    %v476 = vpack.c.bf16 %v455, %v450
    %v477 = vpack.c.bf16 %v457, %v453
    %v478 = vld [vmem:[#allocation3] sm:$0xff]
    %v479 = vld [vmem:[#allocation3 + $0x8] sm:$0xff]
    %v480 = vld [vmem:[#allocation3 + $0x10] sm:$0xff]
    %v481 = vld [vmem:[#allocation3 + $0x18] sm:$0xff]
    %v482 = vld [vmem:[#allocation3 + $0x20] sm:$0xff]
    %v483 = vld [vmem:[#allocation3 + $0x28] sm:$0xff]
    %v484 = vld [vmem:[#allocation3 + $0x30] sm:$0xff]
    %v485 = vld [vmem:[#allocation3 + $0x38] sm:$0xff]
    %v486 = vld [vmem:[#allocation3 + $0x40] sm:$0xff]
    %v487 = vld [vmem:[#allocation3 + $0x48] sm:$0xff]
    %v488 = vld [vmem:[#allocation3 + $0x50] sm:$0xff]
    %v489 = vld [vmem:[#allocation3 + $0x58] sm:$0xff]
    %v490 = vld [vmem:[#allocation3 + $0x60] sm:$0xff]
    %v491 = vld [vmem:[#allocation3 + $0x68] sm:$0xff]
    %v492 = vld [vmem:[#allocation3 + $0x70] sm:$0xff]
    %v493 = vld [vmem:[#allocation3 + $0x78] sm:$0xff]
    %v494 = vld [vmem:[#allocation3 + $0x80] sm:$0xff]
    %v495 = vld [vmem:[#allocation3 + $0x88] sm:$0xff]
    %v496 = vld [vmem:[#allocation3 + $0x90] sm:$0xff]
    %v497 = vld [vmem:[#allocation3 + $0x98] sm:$0xff]
    %v498 = vld [vmem:[#allocation3 + $0xa0] sm:$0xff]
    %v499 = vld [vmem:[#allocation3 + $0xa8] sm:$0xff]
    %v500 = vld [vmem:[#allocation3 + $0xb0] sm:$0xff]
    %v501 = vld [vmem:[#allocation3 + $0xb8] sm:$0xff]
    %v502 = vld [vmem:[#allocation3 + $0xc0] sm:$0xff]
    %v503 = vld [vmem:[#allocation3 + $0xc8] sm:$0xff]
    %v504 = vld [vmem:[#allocation3 + $0xd0] sm:$0xff]
    %v505 = vld [vmem:[#allocation3 + $0xd8] sm:$0xff]
    %v506 = vld [vmem:[#allocation3 + $0xe0] sm:$0xff]
    %v507 = vld [vmem:[#allocation3 + $0xe8] sm:$0xff]
    %v508 = vld [vmem:[#allocation3 + $0xf0] sm:$0xff]
    %v509 = vld [vmem:[#allocation3 + $0xf8] sm:$0xff]
    %v510 = vld [vmem:[#allocation3 + $0x100] sm:$0xff]
    %v511 = vld [vmem:[#allocation3 + $0x108] sm:$0xff]
    %v512 = vld [vmem:[#allocation3 + $0x110] sm:$0xff]
    %v513 = vld [vmem:[#allocation3 + $0x118] sm:$0xff]
    %v514 = vld [vmem:[#allocation3 + $0x120] sm:$0xff]
    %v515 = vld [vmem:[#allocation3 + $0x128] sm:$0xff]
    %v516 = vld [vmem:[#allocation3 + $0x130] sm:$0xff]
    %v517 = vld [vmem:[#allocation3 + $0x138] sm:$0xff]
    %v518 = vld [vmem:[#allocation3 + $0x140] sm:$0xff]
    %v519 = vld [vmem:[#allocation3 + $0x148] sm:$0xff]
    %v520 = vld [vmem:[#allocation3 + $0x150] sm:$0xff]
    %v521 = vld [vmem:[#allocation3 + $0x158] sm:$0xff]
    %v522 = vld [vmem:[#allocation3 + $0x160] sm:$0xff]
    %v523 = vld [vmem:[#allocation3 + $0x168] sm:$0xff]
    %v524 = vld [vmem:[#allocation3 + $0x170] sm:$0xff]
    %v525 = vld [vmem:[#allocation3 + $0x178] sm:$0xff]
    %v526 = vld [vmem:[#allocation3 + $0x180] sm:$0xff]
    %v527 = vld [vmem:[#allocation3 + $0x188] sm:$0xff]
    %v528 = vld [vmem:[#allocation3 + $0x190] sm:$0xff]
    %v529 = vld [vmem:[#allocation3 + $0x198] sm:$0xff]
    %v530 = vld [vmem:[#allocation3 + $0x1a0] sm:$0xff]
    %v531 = vld [vmem:[#allocation3 + $0x1a8] sm:$0xff]
    %v532 = vld [vmem:[#allocation3 + $0x1b0] sm:$0xff]
    %v533 = vld [vmem:[#allocation3 + $0x1b8] sm:$0xff]
    %v534 = vld [vmem:[#allocation3 + $0x1c0] sm:$0xff]
    %v535 = vld [vmem:[#allocation3 + $0x1c8] sm:$0xff]
    %v536 = vld [vmem:[#allocation3 + $0x1d0] sm:$0xff]
    %v537 = vld [vmem:[#allocation3 + $0x1d8] sm:$0xff]
    %v538 = vld [vmem:[#allocation3 + $0x1e0] sm:$0xff]
    %v539 = vld [vmem:[#allocation3 + $0x1e8] sm:$0xff]
    %v540 = vld [vmem:[#allocation3 + $0x1f0] sm:$0xff]
    %v541 = vld [vmem:[#allocation3 + $0x1f8] sm:$0xff]
    %v542 = vld [vmem:[#allocation3 + $0x200] sm:$0xff]
    %v543 = vld [vmem:[#allocation3 + $0x208] sm:$0xff]
    %v544 = vld [vmem:[#allocation3 + $0x210] sm:$0xff]
    %v545 = vld [vmem:[#allocation3 + $0x218] sm:$0xff]
    %v546 = vld [vmem:[#allocation3 + $0x220] sm:$0xff]
    %v547 = vld [vmem:[#allocation3 + $0x228] sm:$0xff]
    %v548 = vld [vmem:[#allocation3 + $0x230] sm:$0xff]
    %v549 = vld [vmem:[#allocation3 + $0x238] sm:$0xff]
    %v550 = vld [vmem:[#allocation3 + $0x240] sm:$0xff]
    %v551 = vld [vmem:[#allocation3 + $0x248] sm:$0xff]
    %v552 = vld [vmem:[#allocation3 + $0x250] sm:$0xff]
    %v553 = vld [vmem:[#allocation3 + $0x258] sm:$0xff]
    %v554 = vld [vmem:[#allocation3 + $0x260] sm:$0xff]
    %v555 = vld [vmem:[#allocation3 + $0x268] sm:$0xff]
    %v556 = vld [vmem:[#allocation3 + $0x270] sm:$0xff]
    %v557 = vld [vmem:[#allocation3 + $0x278] sm:$0xff]
    %v558 = vld [vmem:[#allocation3 + $0x280] sm:$0xff]
    %v559 = vld [vmem:[#allocation3 + $0x288] sm:$0xff]
    %v560 = vld [vmem:[#allocation3 + $0x290] sm:$0xff]
    %v561 = vld [vmem:[#allocation3 + $0x298] sm:$0xff]
    %v562 = vld [vmem:[#allocation3 + $0x2a0] sm:$0xff]
    %v563 = vld [vmem:[#allocation3 + $0x2a8] sm:$0xff]
    %v564 = vld [vmem:[#allocation3 + $0x2b0] sm:$0xff]
    %v565 = vld [vmem:[#allocation3 + $0x2b8] sm:$0xff]
    %v566 = vld [vmem:[#allocation3 + $0x2c0] sm:$0xff]
    %v567 = vld [vmem:[#allocation3 + $0x2c8] sm:$0xff]
    %v568 = vld [vmem:[#allocation3 + $0x2d0] sm:$0xff]
    %v569 = vld [vmem:[#allocation3 + $0x2d8] sm:$0xff]
    %v570 = vld [vmem:[#allocation3 + $0x2e0] sm:$0xff]
    %v571 = vld [vmem:[#allocation3 + $0x2e8] sm:$0xff]
    %v572 = vld [vmem:[#allocation3 + $0x2f0] sm:$0xff]
    %v573 = vld [vmem:[#allocation3 + $0x2f8] sm:$0xff]
    %v574 = vld [vmem:[#allocation3 + $0x300] sm:$0xff]
    %v575 = vld [vmem:[#allocation3 + $0x308] sm:$0xff]
    %v576 = vld [vmem:[#allocation3 + $0x310] sm:$0xff]
    %v577 = vld [vmem:[#allocation3 + $0x318] sm:$0xff]
    %v578 = vld [vmem:[#allocation3 + $0x320] sm:$0xff]
    %v579 = vld [vmem:[#allocation3 + $0x328] sm:$0xff]
    %v580 = vld [vmem:[#allocation3 + $0x330] sm:$0xff]
    %v581 = vld [vmem:[#allocation3 + $0x338] sm:$0xff]
    %v582 = vld [vmem:[#allocation3 + $0x340] sm:$0xff]
    %v583 = vld [vmem:[#allocation3 + $0x348] sm:$0xff]
    %v584 = vld [vmem:[#allocation3 + $0x350] sm:$0xff]
    %v585 = vld [vmem:[#allocation3 + $0x358] sm:$0xff]
    %v586 = vld [vmem:[#allocation3 + $0x360] sm:$0xff]
    %v587 = vld [vmem:[#allocation3 + $0x368] sm:$0xff]
    %v588 = vld [vmem:[#allocation3 + $0x370] sm:$0xff]
    %v589 = vld [vmem:[#allocation3 + $0x378] sm:$0xff]
    %v590 = vld [vmem:[#allocation3 + $0x380] sm:$0xff]
    %v591 = vld [vmem:[#allocation3 + $0x388] sm:$0xff]
    %v592 = vld [vmem:[#allocation3 + $0x390] sm:$0xff]
    %v593 = vld [vmem:[#allocation3 + $0x398] sm:$0xff]
    %v594 = vld [vmem:[#allocation3 + $0x3a0] sm:$0xff]
    %v595 = vld [vmem:[#allocation3 + $0x3a8] sm:$0xff]
    %v596 = vld [vmem:[#allocation3 + $0x3b0] sm:$0xff]
    %v597 = vld [vmem:[#allocation3 + $0x3b8] sm:$0xff]
    %v598 = vld [vmem:[#allocation3 + $0x3c0] sm:$0xff]
    %v599 = vld [vmem:[#allocation3 + $0x3c8] sm:$0xff]
    %v600 = vld [vmem:[#allocation3 + $0x3d0] sm:$0xff]
    %v601 = vld [vmem:[#allocation3 + $0x3d8] sm:$0xff]
    %v602 = vld [vmem:[#allocation3 + $0x3e0] sm:$0xff]
    %v603 = vld [vmem:[#allocation3 + $0x3e8] sm:$0xff]
    %v604 = vld [vmem:[#allocation3 + $0x3f0] sm:$0xff]
    %v605 = vld [vmem:[#allocation3 + $0x3f8] sm:$0xff]
    %v606 = vld [vmem:[#allocation3 + $0x400] sm:$0xff]
    %v607 = vld [vmem:[#allocation3 + $0x408] sm:$0xff]
    %v608 = vld [vmem:[#allocation3 + $0x410] sm:$0xff]
    %v609 = vld [vmem:[#allocation3 + $0x418] sm:$0xff]
    %v610 = vld [vmem:[#allocation3 + $0x420] sm:$0xff]
    %v611 = vld [vmem:[#allocation3 + $0x428] sm:$0xff]
    %v612 = vld [vmem:[#allocation3 + $0x430] sm:$0xff]
    %v613 = vld [vmem:[#allocation3 + $0x438] sm:$0xff]
    %v614 = vld [vmem:[#allocation3 + $0x440] sm:$0xff]
    %v615 = vld [vmem:[#allocation3 + $0x448] sm:$0xff]
    %v616 = vld [vmem:[#allocation3 + $0x450] sm:$0xff]
    %v617 = vld [vmem:[#allocation3 + $0x458] sm:$0xff]
    %v618 = vld [vmem:[#allocation3 + $0x460] sm:$0xff]
    %v619 = vld [vmem:[#allocation3 + $0x468] sm:$0xff]
    %v620 = vld [vmem:[#allocation3 + $0x470] sm:$0xff]
    %v621 = vld [vmem:[#allocation3 + $0x478] sm:$0xff]
    %v622 = vld [vmem:[#allocation3 + $0x480] sm:$0xff]
    %v623 = vld [vmem:[#allocation3 + $0x488] sm:$0xff]
    %v624 = vld [vmem:[#allocation3 + $0x490] sm:$0xff]
    %v625 = vld [vmem:[#allocation3 + $0x498] sm:$0xff]
    %v626 = vld [vmem:[#allocation3 + $0x4a0] sm:$0xff]
    %v627 = vld [vmem:[#allocation3 + $0x4a8] sm:$0xff]
    %v628 = vld [vmem:[#allocation3 + $0x4b0] sm:$0xff]
    %v629 = vld [vmem:[#allocation3 + $0x4b8] sm:$0xff]
    %v630 = vld [vmem:[#allocation3 + $0x4c0] sm:$0xff]
    %v631 = vld [vmem:[#allocation3 + $0x4c8] sm:$0xff]
    %v632 = vld [vmem:[#allocation3 + $0x4d0] sm:$0xff]
    %v633 = vld [vmem:[#allocation3 + $0x4d8] sm:$0xff]
    %v634 = vld [vmem:[#allocation3 + $0x4e0] sm:$0xff]
    %v635 = vld [vmem:[#allocation3 + $0x4e8] sm:$0xff]
    %v636 = vld [vmem:[#allocation3 + $0x4f0] sm:$0xff]
    %v637 = vld [vmem:[#allocation3 + $0x4f8] sm:$0xff]
    %v638 = vld [vmem:[#allocation3 + $0x500] sm:$0xff]
    %v639 = vld [vmem:[#allocation3 + $0x508] sm:$0xff]
    %v640 = vld [vmem:[#allocation3 + $0x510] sm:$0xff]
    %v641 = vld [vmem:[#allocation3 + $0x518] sm:$0xff]
    %v642 = vld [vmem:[#allocation3 + $0x520] sm:$0xff]
    %v643 = vld [vmem:[#allocation3 + $0x528] sm:$0xff]
    %v644 = vld [vmem:[#allocation3 + $0x530] sm:$0xff]
    %v645 = vld [vmem:[#allocation3 + $0x538] sm:$0xff]
    %v646 = vld [vmem:[#allocation3 + $0x540] sm:$0xff]
    %v647 = vld [vmem:[#allocation3 + $0x548] sm:$0xff]
    %v648 = vld [vmem:[#allocation3 + $0x550] sm:$0xff]
    %v649 = vld [vmem:[#allocation3 + $0x558] sm:$0xff]
    %v650 = vld [vmem:[#allocation3 + $0x560] sm:$0xff]
    %v651 = vld [vmem:[#allocation3 + $0x568] sm:$0xff]
    %v652 = vld [vmem:[#allocation3 + $0x570] sm:$0xff]
    %v653 = vld [vmem:[#allocation3 + $0x578] sm:$0xff]
    %v654 = vld [vmem:[#allocation3 + $0x580] sm:$0xff]
    %v655 = vld [vmem:[#allocation3 + $0x588] sm:$0xff]
    %v656 = vld [vmem:[#allocation3 + $0x590] sm:$0xff]
    %v657 = vld [vmem:[#allocation3 + $0x598] sm:$0xff]
    %v658 = vld [vmem:[#allocation3 + $0x5a0] sm:$0xff]
    %v659 = vld [vmem:[#allocation3 + $0x5a8] sm:$0xff]
    %v660 = vld [vmem:[#allocation3 + $0x5b0] sm:$0xff]
    %v661 = vld [vmem:[#allocation3 + $0x5b8] sm:$0xff]
    %v662 = vld [vmem:[#allocation3 + $0x5c0] sm:$0xff]
    %v663 = vld [vmem:[#allocation3 + $0x5c8] sm:$0xff]
    %v664 = vld [vmem:[#allocation3 + $0x5d0] sm:$0xff]
    %v665 = vld [vmem:[#allocation3 + $0x5d8] sm:$0xff]
    %v666 = vld [vmem:[#allocation3 + $0x5e0] sm:$0xff]
    %v667 = vld [vmem:[#allocation3 + $0x5e8] sm:$0xff]
    %v668 = vld [vmem:[#allocation3 + $0x5f0] sm:$0xff]
    %v669 = vld [vmem:[#allocation3 + $0x5f8] sm:$0xff]
    %v670 = vld [vmem:[%s5] sm:$0xf]
    %v672 = vlaneseq
    %v673 = vshrl.u32 %v672, 7
    %v674 = vsub.s32 0, %v673
    %v675 = vrot.slane %v670, %v674
    %v676 = vlaneseq
    %v677 = vshrl.u32 %v676, 7
    %v678 = vsub.s32 1, %v677
    %v679 = vrot.slane %v670, %v678
    %v680 = vlaneseq
    %v681 = vshrl.u32 %v680, 7
    %v682 = vsub.s32 2, %v681
    %v683 = vrot.slane %v670, %v682
    %v684 = vlaneseq
    %v685 = vshrl.u32 %v684, 7
    %v686 = vsub.s32 3, %v685
    %v687 = vrot.slane %v670, %v686
    %v884 = vunpack.c.l.b16 %v478
    %v885 = vunpack.c.h.b16 %v478
    %v886 = vunpack.c.l.b16 %v479
    %v887 = vunpack.c.h.b16 %v479
    %v888 = vunpack.c.l.b16 %v480
    %v889 = vunpack.c.h.b16 %v480
    %v890 = vunpack.c.l.b16 %v481
    %v891 = vunpack.c.h.b16 %v481
    %v892 = vunpack.c.l.b16 %v482
    %v893 = vunpack.c.h.b16 %v482
    %v894 = vunpack.c.l.b16 %v483
    %v895 = vunpack.c.h.b16 %v483
    %v896 = vunpack.c.l.b16 %v484
    %v897 = vunpack.c.h.b16 %v484
    %v898 = vunpack.c.l.b16 %v485
    %v899 = vunpack.c.h.b16 %v485
    %v900 = vunpack.c.l.b16 %v486
    %v901 = vunpack.c.h.b16 %v486
    %v902 = vunpack.c.l.b16 %v487
    %v903 = vunpack.c.h.b16 %v487
    %v904 = vunpack.c.l.b16 %v488
    %v905 = vunpack.c.h.b16 %v488
    %v906 = vunpack.c.l.b16 %v489
    %v907 = vunpack.c.h.b16 %v489
    %v908 = vunpack.c.l.b16 %v490
    %v909 = vunpack.c.h.b16 %v490
    %v910 = vunpack.c.l.b16 %v491
    %v911 = vunpack.c.h.b16 %v491
    %v912 = vunpack.c.l.b16 %v492
    %v913 = vunpack.c.h.b16 %v492
    %v914 = vunpack.c.l.b16 %v493
    %v915 = vunpack.c.h.b16 %v493
    %v916 = vunpack.c.l.b16 %v494
    %v917 = vunpack.c.h.b16 %v494
    %v918 = vunpack.c.l.b16 %v495
    %v919 = vunpack.c.h.b16 %v495
    %v920 = vunpack.c.l.b16 %v496
    %v921 = vunpack.c.h.b16 %v496
    %v922 = vunpack.c.l.b16 %v497
    %v923 = vunpack.c.h.b16 %v497
    %v924 = vunpack.c.l.b16 %v498
    %v925 = vunpack.c.h.b16 %v498
    %v926 = vunpack.c.l.b16 %v499
    %v927 = vunpack.c.h.b16 %v499
    %v928 = vunpack.c.l.b16 %v500
    %v929 = vunpack.c.h.b16 %v500
    %v930 = vunpack.c.l.b16 %v501
    %v931 = vunpack.c.h.b16 %v501
    %v932 = vunpack.c.l.b16 %v502
    %v933 = vunpack.c.h.b16 %v502
    %v934 = vunpack.c.l.b16 %v503
    %v935 = vunpack.c.h.b16 %v503
    %v936 = vunpack.c.l.b16 %v504
    %v937 = vunpack.c.h.b16 %v504
    %v938 = vunpack.c.l.b16 %v505
    %v939 = vunpack.c.h.b16 %v505
    %v940 = vunpack.c.l.b16 %v506
    %v941 = vunpack.c.h.b16 %v506
    %v942 = vunpack.c.l.b16 %v507
    %v943 = vunpack.c.h.b16 %v507
    %v944 = vunpack.c.l.b16 %v508
    %v945 = vunpack.c.h.b16 %v508
    %v946 = vunpack.c.l.b16 %v509
    %v947 = vunpack.c.h.b16 %v509
    %v948 = vunpack.c.l.b16 %v510
    %v949 = vunpack.c.h.b16 %v510
    %v950 = vunpack.c.l.b16 %v511
    %v951 = vunpack.c.h.b16 %v511
    %v952 = vunpack.c.l.b16 %v512
    %v953 = vunpack.c.h.b16 %v512
    %v954 = vunpack.c.l.b16 %v513
    %v955 = vunpack.c.h.b16 %v513
    %v956 = vunpack.c.l.b16 %v514
    %v957 = vunpack.c.h.b16 %v514
    %v958 = vunpack.c.l.b16 %v515
    %v959 = vunpack.c.h.b16 %v515
    %v960 = vunpack.c.l.b16 %v516
    %v961 = vunpack.c.h.b16 %v516
    %v962 = vunpack.c.l.b16 %v517
    %v963 = vunpack.c.h.b16 %v517
    %v964 = vunpack.c.l.b16 %v518
    %v965 = vunpack.c.h.b16 %v518
    %v966 = vunpack.c.l.b16 %v519
    %v967 = vunpack.c.h.b16 %v519
    %v968 = vunpack.c.l.b16 %v520
    %v969 = vunpack.c.h.b16 %v520
    %v970 = vunpack.c.l.b16 %v521
    %v971 = vunpack.c.h.b16 %v521
    %v972 = vunpack.c.l.b16 %v522
    %v973 = vunpack.c.h.b16 %v522
    %v974 = vunpack.c.l.b16 %v523
    %v975 = vunpack.c.h.b16 %v523
    %v976 = vunpack.c.l.b16 %v524
    %v977 = vunpack.c.h.b16 %v524
    %v978 = vunpack.c.l.b16 %v525
    %v979 = vunpack.c.h.b16 %v525
    %v980 = vunpack.c.l.b16 %v526
    %v981 = vunpack.c.h.b16 %v526
    %v982 = vunpack.c.l.b16 %v527
    %v983 = vunpack.c.h.b16 %v527
    %v984 = vunpack.c.l.b16 %v528
    %v985 = vunpack.c.h.b16 %v528
    %v986 = vunpack.c.l.b16 %v529
    %v987 = vunpack.c.h.b16 %v529
    %v988 = vunpack.c.l.b16 %v530
    %v989 = vunpack.c.h.b16 %v530
    %v990 = vunpack.c.l.b16 %v531
    %v991 = vunpack.c.h.b16 %v531
    %v992 = vunpack.c.l.b16 %v532
    %v993 = vunpack.c.h.b16 %v532
    %v994 = vunpack.c.l.b16 %v533
    %v995 = vunpack.c.h.b16 %v533
    %v996 = vunpack.c.l.b16 %v534
    %v997 = vunpack.c.h.b16 %v534
    %v998 = vunpack.c.l.b16 %v535
    %v999 = vunpack.c.h.b16 %v535
    %v1000 = vunpack.c.l.b16 %v536
    %v1001 = vunpack.c.h.b16 %v536
    %v1002 = vunpack.c.l.b16 %v537
    %v1003 = vunpack.c.h.b16 %v537
    %v1004 = vunpack.c.l.b16 %v538
    %v1005 = vunpack.c.h.b16 %v538
    %v1006 = vunpack.c.l.b16 %v539
    %v1007 = vunpack.c.h.b16 %v539
    %v1008 = vunpack.c.l.b16 %v540
    %v1009 = vunpack.c.h.b16 %v540
    %v1010 = vunpack.c.l.b16 %v541
    %v1011 = vunpack.c.h.b16 %v541
    %v1012 = vunpack.c.l.b16 %v542
    %v1013 = vunpack.c.h.b16 %v542
    %v1014 = vunpack.c.l.b16 %v543
    %v1015 = vunpack.c.h.b16 %v543
    %v1016 = vunpack.c.l.b16 %v544
    %v1017 = vunpack.c.h.b16 %v544
    %v1018 = vunpack.c.l.b16 %v545
    %v1019 = vunpack.c.h.b16 %v545
    %v1020 = vunpack.c.l.b16 %v546
    %v1021 = vunpack.c.h.b16 %v546
    %v1022 = vunpack.c.l.b16 %v547
    %v1023 = vunpack.c.h.b16 %v547
    %v1024 = vunpack.c.l.b16 %v548
    %v1025 = vunpack.c.h.b16 %v548
    %v1026 = vunpack.c.l.b16 %v549
    %v1027 = vunpack.c.h.b16 %v549
    %v1028 = vunpack.c.l.b16 %v550
    %v1029 = vunpack.c.h.b16 %v550
    %v1030 = vunpack.c.l.b16 %v551
    %v1031 = vunpack.c.h.b16 %v551
    %v1032 = vunpack.c.l.b16 %v552
    %v1033 = vunpack.c.h.b16 %v552
    %v1034 = vunpack.c.l.b16 %v553
    %v1035 = vunpack.c.h.b16 %v553
    %v1036 = vunpack.c.l.b16 %v554
    %v1037 = vunpack.c.h.b16 %v554
    %v1038 = vunpack.c.l.b16 %v555
    %v1039 = vunpack.c.h.b16 %v555
    %v1040 = vunpack.c.l.b16 %v556
    %v1041 = vunpack.c.h.b16 %v556
    %v1042 = vunpack.c.l.b16 %v557
    %v1043 = vunpack.c.h.b16 %v557
    %v1044 = vunpack.c.l.b16 %v558
    %v1045 = vunpack.c.h.b16 %v558
    %v1046 = vunpack.c.l.b16 %v559
    %v1047 = vunpack.c.h.b16 %v559
    %v1048 = vunpack.c.l.b16 %v560
    %v1049 = vunpack.c.h.b16 %v560
    %v1050 = vunpack.c.l.b16 %v561
    %v1051 = vunpack.c.h.b16 %v561
    %v1052 = vunpack.c.l.b16 %v562
    %v1053 = vunpack.c.h.b16 %v562
    %v1054 = vunpack.c.l.b16 %v563
    %v1055 = vunpack.c.h.b16 %v563
    %v1056 = vunpack.c.l.b16 %v564
    %v1057 = vunpack.c.h.b16 %v564
    %v1058 = vunpack.c.l.b16 %v565
    %v1059 = vunpack.c.h.b16 %v565
    %v1060 = vunpack.c.l.b16 %v566
    %v1061 = vunpack.c.h.b16 %v566
    %v1062 = vunpack.c.l.b16 %v567
    %v1063 = vunpack.c.h.b16 %v567
    %v1064 = vunpack.c.l.b16 %v568
    %v1065 = vunpack.c.h.b16 %v568
    %v1066 = vunpack.c.l.b16 %v569
    %v1067 = vunpack.c.h.b16 %v569
    %v1068 = vunpack.c.l.b16 %v570
    %v1069 = vunpack.c.h.b16 %v570
    %v1070 = vunpack.c.l.b16 %v571
    %v1071 = vunpack.c.h.b16 %v571
    %v1072 = vunpack.c.l.b16 %v572
    %v1073 = vunpack.c.h.b16 %v572
    %v1074 = vunpack.c.l.b16 %v573
    %v1075 = vunpack.c.h.b16 %v573
    %v1076 = vunpack.c.l.b16 %v574
    %v1077 = vunpack.c.h.b16 %v574
    %v1078 = vunpack.c.l.b16 %v575
    %v1079 = vunpack.c.h.b16 %v575
    %v1080 = vunpack.c.l.b16 %v576
    %v1081 = vunpack.c.h.b16 %v576
    %v1082 = vunpack.c.l.b16 %v577
    %v1083 = vunpack.c.h.b16 %v577
    %v1084 = vunpack.c.l.b16 %v578
    %v1085 = vunpack.c.h.b16 %v578
    %v1086 = vunpack.c.l.b16 %v579
    %v1087 = vunpack.c.h.b16 %v579
    %v1088 = vunpack.c.l.b16 %v580
    %v1089 = vunpack.c.h.b16 %v580
    %v1090 = vunpack.c.l.b16 %v581
    %v1091 = vunpack.c.h.b16 %v581
    %v1092 = vunpack.c.l.b16 %v582
    %v1093 = vunpack.c.h.b16 %v582
    %v1094 = vunpack.c.l.b16 %v583
    %v1095 = vunpack.c.h.b16 %v583
    %v1096 = vunpack.c.l.b16 %v584
    %v1097 = vunpack.c.h.b16 %v584
    %v1098 = vunpack.c.l.b16 %v585
    %v1099 = vunpack.c.h.b16 %v585
    %v1100 = vunpack.c.l.b16 %v586
    %v1101 = vunpack.c.h.b16 %v586
    %v1102 = vunpack.c.l.b16 %v587
    %v1103 = vunpack.c.h.b16 %v587
    %v1104 = vunpack.c.l.b16 %v588
    %v1105 = vunpack.c.h.b16 %v588
    %v1106 = vunpack.c.l.b16 %v589
    %v1107 = vunpack.c.h.b16 %v589
    %v1108 = vunpack.c.l.b16 %v590
    %v1109 = vunpack.c.h.b16 %v590
    %v1110 = vunpack.c.l.b16 %v591
    %v1111 = vunpack.c.h.b16 %v591
    %v1112 = vunpack.c.l.b16 %v592
    %v1113 = vunpack.c.h.b16 %v592
    %v1114 = vunpack.c.l.b16 %v593
    %v1115 = vunpack.c.h.b16 %v593
    %v1116 = vunpack.c.l.b16 %v594
    %v1117 = vunpack.c.h.b16 %v594
    %v1118 = vunpack.c.l.b16 %v595
    %v1119 = vunpack.c.h.b16 %v595
    %v1120 = vunpack.c.l.b16 %v596
    %v1121 = vunpack.c.h.b16 %v596
    %v1122 = vunpack.c.l.b16 %v597
    %v1123 = vunpack.c.h.b16 %v597
    %v1124 = vunpack.c.l.b16 %v598
    %v1125 = vunpack.c.h.b16 %v598
    %v1126 = vunpack.c.l.b16 %v599
    %v1127 = vunpack.c.h.b16 %v599
    %v1128 = vunpack.c.l.b16 %v600
    %v1129 = vunpack.c.h.b16 %v600
    %v1130 = vunpack.c.l.b16 %v601
    %v1131 = vunpack.c.h.b16 %v601
    %v1132 = vunpack.c.l.b16 %v602
    %v1133 = vunpack.c.h.b16 %v602
    %v1134 = vunpack.c.l.b16 %v603
    %v1135 = vunpack.c.h.b16 %v603
    %v1136 = vunpack.c.l.b16 %v604
    %v1137 = vunpack.c.h.b16 %v604
    %v1138 = vunpack.c.l.b16 %v605
    %v1139 = vunpack.c.h.b16 %v605
    %v1140 = vunpack.c.l.b16 %v606
    %v1141 = vunpack.c.h.b16 %v606
    %v1142 = vunpack.c.l.b16 %v607
    %v1143 = vunpack.c.h.b16 %v607
    %v1144 = vunpack.c.l.b16 %v608
    %v1145 = vunpack.c.h.b16 %v608
    %v1146 = vunpack.c.l.b16 %v609
    %v1147 = vunpack.c.h.b16 %v609
    %v1148 = vunpack.c.l.b16 %v610
    %v1149 = vunpack.c.h.b16 %v610
    %v1150 = vunpack.c.l.b16 %v611
    %v1151 = vunpack.c.h.b16 %v611
    %v1152 = vunpack.c.l.b16 %v612
    %v1153 = vunpack.c.h.b16 %v612
    %v1154 = vunpack.c.l.b16 %v613
    %v1155 = vunpack.c.h.b16 %v613
    %v1156 = vunpack.c.l.b16 %v614
    %v1157 = vunpack.c.h.b16 %v614
    %v1158 = vunpack.c.l.b16 %v615
    %v1159 = vunpack.c.h.b16 %v615
    %v1160 = vunpack.c.l.b16 %v616
    %v1161 = vunpack.c.h.b16 %v616
    %v1162 = vunpack.c.l.b16 %v617
    %v1163 = vunpack.c.h.b16 %v617
    %v1164 = vunpack.c.l.b16 %v618
    %v1165 = vunpack.c.h.b16 %v618
    %v1166 = vunpack.c.l.b16 %v619
    %v1167 = vunpack.c.h.b16 %v619
    %v1168 = vunpack.c.l.b16 %v620
    %v1169 = vunpack.c.h.b16 %v620
    %v1170 = vunpack.c.l.b16 %v621
    %v1171 = vunpack.c.h.b16 %v621
    %v1172 = vunpack.c.l.b16 %v622
    %v1173 = vunpack.c.h.b16 %v622
    %v1174 = vunpack.c.l.b16 %v623
    %v1175 = vunpack.c.h.b16 %v623
    %v1176 = vunpack.c.l.b16 %v624
    %v1177 = vunpack.c.h.b16 %v624
    %v1178 = vunpack.c.l.b16 %v625
    %v1179 = vunpack.c.h.b16 %v625
    %v1180 = vunpack.c.l.b16 %v626
    %v1181 = vunpack.c.h.b16 %v626
    %v1182 = vunpack.c.l.b16 %v627
    %v1183 = vunpack.c.h.b16 %v627
    %v1184 = vunpack.c.l.b16 %v628
    %v1185 = vunpack.c.h.b16 %v628
    %v1186 = vunpack.c.l.b16 %v629
    %v1187 = vunpack.c.h.b16 %v629
    %v1188 = vunpack.c.l.b16 %v630
    %v1189 = vunpack.c.h.b16 %v630
    %v1190 = vunpack.c.l.b16 %v631
    %v1191 = vunpack.c.h.b16 %v631
    %v1192 = vunpack.c.l.b16 %v632
    %v1193 = vunpack.c.h.b16 %v632
    %v1194 = vunpack.c.l.b16 %v633
    %v1195 = vunpack.c.h.b16 %v633
    %v1196 = vunpack.c.l.b16 %v634
    %v1197 = vunpack.c.h.b16 %v634
    %v1198 = vunpack.c.l.b16 %v635
    %v1199 = vunpack.c.h.b16 %v635
    %v1200 = vunpack.c.l.b16 %v636
    %v1201 = vunpack.c.h.b16 %v636
    %v1202 = vunpack.c.l.b16 %v637
    %v1203 = vunpack.c.h.b16 %v637
    %v1204 = vunpack.c.l.b16 %v638
    %v1205 = vunpack.c.h.b16 %v638
    %v1206 = vunpack.c.l.b16 %v639
    %v1207 = vunpack.c.h.b16 %v639
    %v1208 = vunpack.c.l.b16 %v640
    %v1209 = vunpack.c.h.b16 %v640
    %v1210 = vunpack.c.l.b16 %v641
    %v1211 = vunpack.c.h.b16 %v641
    %v1212 = vunpack.c.l.b16 %v642
    %v1213 = vunpack.c.h.b16 %v642
    %v1214 = vunpack.c.l.b16 %v643
    %v1215 = vunpack.c.h.b16 %v643
    %v1216 = vunpack.c.l.b16 %v644
    %v1217 = vunpack.c.h.b16 %v644
    %v1218 = vunpack.c.l.b16 %v645
    %v1219 = vunpack.c.h.b16 %v645
    %v1220 = vunpack.c.l.b16 %v646
    %v1221 = vunpack.c.h.b16 %v646
    %v1222 = vunpack.c.l.b16 %v647
    %v1223 = vunpack.c.h.b16 %v647
    %v1224 = vunpack.c.l.b16 %v648
    %v1225 = vunpack.c.h.b16 %v648
    %v1226 = vunpack.c.l.b16 %v649
    %v1227 = vunpack.c.h.b16 %v649
    %v1228 = vunpack.c.l.b16 %v650
    %v1229 = vunpack.c.h.b16 %v650
    %v1230 = vunpack.c.l.b16 %v651
    %v1231 = vunpack.c.h.b16 %v651
    %v1232 = vunpack.c.l.b16 %v652
    %v1233 = vunpack.c.h.b16 %v652
    %v1234 = vunpack.c.l.b16 %v653
    %v1235 = vunpack.c.h.b16 %v653
    %v1236 = vunpack.c.l.b16 %v654
    %v1237 = vunpack.c.h.b16 %v654
    %v1238 = vunpack.c.l.b16 %v655
    %v1239 = vunpack.c.h.b16 %v655
    %v1240 = vunpack.c.l.b16 %v656
    %v1241 = vunpack.c.h.b16 %v656
    %v1242 = vunpack.c.l.b16 %v657
    %v1243 = vunpack.c.h.b16 %v657
    %v1244 = vunpack.c.l.b16 %v658
    %v1245 = vunpack.c.h.b16 %v658
    %v1246 = vunpack.c.l.b16 %v659
    %v1247 = vunpack.c.h.b16 %v659
    %v1248 = vunpack.c.l.b16 %v660
    %v1249 = vunpack.c.h.b16 %v660
    %v1250 = vunpack.c.l.b16 %v661
    %v1251 = vunpack.c.h.b16 %v661
    %v1252 = vunpack.c.l.b16 %v662
    %v1253 = vunpack.c.h.b16 %v662
    %v1254 = vunpack.c.l.b16 %v663
    %v1255 = vunpack.c.h.b16 %v663
    %v1256 = vunpack.c.l.b16 %v664
    %v1257 = vunpack.c.h.b16 %v664
    %v1258 = vunpack.c.l.b16 %v665
    %v1259 = vunpack.c.h.b16 %v665
    %v1260 = vunpack.c.l.b16 %v666
    %v1261 = vunpack.c.h.b16 %v666
    %v1262 = vunpack.c.l.b16 %v667
    %v1263 = vunpack.c.h.b16 %v667
    %v1264 = vunpack.c.l.b16 %v668
    %v1265 = vunpack.c.h.b16 %v668
    %v1266 = vunpack.c.l.b16 %v669
    %v1267 = vunpack.c.h.b16 %v669
    %v1268 = vpack.c.b16 %v888, %v884
    %v1269 = vpack.c.b16 %v889, %v885
    %v1270 = vpack.c.b16 %v890, %v886
    %v1271 = vpack.c.b16 %v891, %v887
    %v1272 = vpack.c.b16 %v896, %v892
    %v1273 = vpack.c.b16 %v897, %v893
    %v1274 = vpack.c.b16 %v898, %v894
    %v1275 = vpack.c.b16 %v899, %v895
    %v1276 = vpack.c.b16 %v904, %v900
    %v1277 = vpack.c.b16 %v905, %v901
    %v1278 = vpack.c.b16 %v906, %v902
    %v1279 = vpack.c.b16 %v907, %v903
    %v1280 = vpack.c.b16 %v912, %v908
    %v1281 = vpack.c.b16 %v913, %v909
    %v1282 = vpack.c.b16 %v914, %v910
    %v1283 = vpack.c.b16 %v915, %v911
    %v1284 = vpack.c.b16 %v920, %v916
    %v1285 = vpack.c.b16 %v921, %v917
    %v1286 = vpack.c.b16 %v922, %v918
    %v1287 = vpack.c.b16 %v923, %v919
    %v1288 = vpack.c.b16 %v928, %v924
    %v1289 = vpack.c.b16 %v929, %v925
    %v1290 = vpack.c.b16 %v930, %v926
    %v1291 = vpack.c.b16 %v931, %v927
    %v1292 = vpack.c.b16 %v936, %v932
    %v1293 = vpack.c.b16 %v937, %v933
    %v1294 = vpack.c.b16 %v938, %v934
    %v1295 = vpack.c.b16 %v939, %v935
    %v1296 = vpack.c.b16 %v944, %v940
    %v1297 = vpack.c.b16 %v945, %v941
    %v1298 = vpack.c.b16 %v946, %v942
    %v1299 = vpack.c.b16 %v947, %v943
    %v1300 = vpack.c.b16 %v952, %v948
    %v1301 = vpack.c.b16 %v953, %v949
    %v1302 = vpack.c.b16 %v954, %v950
    %v1303 = vpack.c.b16 %v955, %v951
    %v1304 = vpack.c.b16 %v960, %v956
    %v1305 = vpack.c.b16 %v961, %v957
    %v1306 = vpack.c.b16 %v962, %v958
    %v1307 = vpack.c.b16 %v963, %v959
    %v1308 = vpack.c.b16 %v968, %v964
    %v1309 = vpack.c.b16 %v969, %v965
    %v1310 = vpack.c.b16 %v970, %v966
    %v1311 = vpack.c.b16 %v971, %v967
    %v1312 = vpack.c.b16 %v976, %v972
    %v1313 = vpack.c.b16 %v977, %v973
    %v1314 = vpack.c.b16 %v978, %v974
    %v1315 = vpack.c.b16 %v979, %v975
    %v1316 = vpack.c.b16 %v984, %v980
    %v1317 = vpack.c.b16 %v985, %v981
    %v1318 = vpack.c.b16 %v986, %v982
    %v1319 = vpack.c.b16 %v987, %v983
    %v1320 = vpack.c.b16 %v992, %v988
    %v1321 = vpack.c.b16 %v993, %v989
    %v1322 = vpack.c.b16 %v994, %v990
    %v1323 = vpack.c.b16 %v995, %v991
    %v1324 = vpack.c.b16 %v1000, %v996
    %v1325 = vpack.c.b16 %v1001, %v997
    %v1326 = vpack.c.b16 %v1002, %v998
    %v1327 = vpack.c.b16 %v1003, %v999
    %v1328 = vpack.c.b16 %v1008, %v1004
    %v1329 = vpack.c.b16 %v1009, %v1005
    %v1330 = vpack.c.b16 %v1010, %v1006
    %v1331 = vpack.c.b16 %v1011, %v1007
    %v1332 = vpack.c.b16 %v1016, %v1012
    %v1333 = vpack.c.b16 %v1017, %v1013
    %v1334 = vpack.c.b16 %v1018, %v1014
    %v1335 = vpack.c.b16 %v1019, %v1015
    %v1336 = vpack.c.b16 %v1024, %v1020
    %v1337 = vpack.c.b16 %v1025, %v1021
    %v1338 = vpack.c.b16 %v1026, %v1022
    %v1339 = vpack.c.b16 %v1027, %v1023
    %v1340 = vpack.c.b16 %v1032, %v1028
    %v1341 = vpack.c.b16 %v1033, %v1029
    %v1342 = vpack.c.b16 %v1034, %v1030
    %v1343 = vpack.c.b16 %v1035, %v1031
    %v1344 = vpack.c.b16 %v1040, %v1036
    %v1345 = vpack.c.b16 %v1041, %v1037
    %v1346 = vpack.c.b16 %v1042, %v1038
    %v1347 = vpack.c.b16 %v1043, %v1039
    %v1348 = vpack.c.b16 %v1048, %v1044
    %v1349 = vpack.c.b16 %v1049, %v1045
    %v1350 = vpack.c.b16 %v1050, %v1046
    %v1351 = vpack.c.b16 %v1051, %v1047
    %v1352 = vpack.c.b16 %v1056, %v1052
    %v1353 = vpack.c.b16 %v1057, %v1053
    %v1354 = vpack.c.b16 %v1058, %v1054
    %v1355 = vpack.c.b16 %v1059, %v1055
    %v1356 = vpack.c.b16 %v1064, %v1060
    %v1357 = vpack.c.b16 %v1065, %v1061
    %v1358 = vpack.c.b16 %v1066, %v1062
    %v1359 = vpack.c.b16 %v1067, %v1063
    %v1360 = vpack.c.b16 %v1072, %v1068
    %v1361 = vpack.c.b16 %v1073, %v1069
    %v1362 = vpack.c.b16 %v1074, %v1070
    %v1363 = vpack.c.b16 %v1075, %v1071
    %v1364 = vpack.c.b16 %v1080, %v1076
    %v1365 = vpack.c.b16 %v1081, %v1077
    %v1366 = vpack.c.b16 %v1082, %v1078
    %v1367 = vpack.c.b16 %v1083, %v1079
    %v1368 = vpack.c.b16 %v1088, %v1084
    %v1369 = vpack.c.b16 %v1089, %v1085
    %v1370 = vpack.c.b16 %v1090, %v1086
    %v1371 = vpack.c.b16 %v1091, %v1087
    %v1372 = vpack.c.b16 %v1096, %v1092
    %v1373 = vpack.c.b16 %v1097, %v1093
    %v1374 = vpack.c.b16 %v1098, %v1094
    %v1375 = vpack.c.b16 %v1099, %v1095
    %v1376 = vpack.c.b16 %v1104, %v1100
    %v1377 = vpack.c.b16 %v1105, %v1101
    %v1378 = vpack.c.b16 %v1106, %v1102
    %v1379 = vpack.c.b16 %v1107, %v1103
    %v1380 = vpack.c.b16 %v1112, %v1108
    %v1381 = vpack.c.b16 %v1113, %v1109
    %v1382 = vpack.c.b16 %v1114, %v1110
    %v1383 = vpack.c.b16 %v1115, %v1111
    %v1384 = vpack.c.b16 %v1120, %v1116
    %v1385 = vpack.c.b16 %v1121, %v1117
    %v1386 = vpack.c.b16 %v1122, %v1118
    %v1387 = vpack.c.b16 %v1123, %v1119
    %v1388 = vpack.c.b16 %v1128, %v1124
    %v1389 = vpack.c.b16 %v1129, %v1125
    %v1390 = vpack.c.b16 %v1130, %v1126
    %v1391 = vpack.c.b16 %v1131, %v1127
    %v1392 = vpack.c.b16 %v1136, %v1132
    %v1393 = vpack.c.b16 %v1137, %v1133
    %v1394 = vpack.c.b16 %v1138, %v1134
    %v1395 = vpack.c.b16 %v1139, %v1135
    %v1396 = vpack.c.b16 %v1144, %v1140
    %v1397 = vpack.c.b16 %v1145, %v1141
    %v1398 = vpack.c.b16 %v1146, %v1142
    %v1399 = vpack.c.b16 %v1147, %v1143
    %v1400 = vpack.c.b16 %v1152, %v1148
    %v1401 = vpack.c.b16 %v1153, %v1149
    %v1402 = vpack.c.b16 %v1154, %v1150
    %v1403 = vpack.c.b16 %v1155, %v1151
    %v1404 = vpack.c.b16 %v1160, %v1156
    %v1405 = vpack.c.b16 %v1161, %v1157
    %v1406 = vpack.c.b16 %v1162, %v1158
    %v1407 = vpack.c.b16 %v1163, %v1159
    %v1408 = vpack.c.b16 %v1168, %v1164
    %v1409 = vpack.c.b16 %v1169, %v1165
    %v1410 = vpack.c.b16 %v1170, %v1166
    %v1411 = vpack.c.b16 %v1171, %v1167
    %v1412 = vpack.c.b16 %v1176, %v1172
    %v1413 = vpack.c.b16 %v1177, %v1173
    %v1414 = vpack.c.b16 %v1178, %v1174
    %v1415 = vpack.c.b16 %v1179, %v1175
    %v1416 = vpack.c.b16 %v1184, %v1180
    %v1417 = vpack.c.b16 %v1185, %v1181
    %v1418 = vpack.c.b16 %v1186, %v1182
    %v1419 = vpack.c.b16 %v1187, %v1183
    %v1420 = vpack.c.b16 %v1192, %v1188
    %v1421 = vpack.c.b16 %v1193, %v1189
    %v1422 = vpack.c.b16 %v1194, %v1190
    %v1423 = vpack.c.b16 %v1195, %v1191
    %v1424 = vpack.c.b16 %v1200, %v1196
    %v1425 = vpack.c.b16 %v1201, %v1197
    %v1426 = vpack.c.b16 %v1202, %v1198
    %v1427 = vpack.c.b16 %v1203, %v1199
    %v1428 = vpack.c.b16 %v1208, %v1204
    %v1429 = vpack.c.b16 %v1209, %v1205
    %v1430 = vpack.c.b16 %v1210, %v1206
    %v1431 = vpack.c.b16 %v1211, %v1207
    %v1432 = vpack.c.b16 %v1216, %v1212
    %v1433 = vpack.c.b16 %v1217, %v1213
    %v1434 = vpack.c.b16 %v1218, %v1214
    %v1435 = vpack.c.b16 %v1219, %v1215
    %v1436 = vpack.c.b16 %v1224, %v1220
    %v1437 = vpack.c.b16 %v1225, %v1221
    %v1438 = vpack.c.b16 %v1226, %v1222
    %v1439 = vpack.c.b16 %v1227, %v1223
    %v1440 = vpack.c.b16 %v1232, %v1228
    %v1441 = vpack.c.b16 %v1233, %v1229
    %v1442 = vpack.c.b16 %v1234, %v1230
    %v1443 = vpack.c.b16 %v1235, %v1231
    %v1444 = vpack.c.b16 %v1240, %v1236
    %v1445 = vpack.c.b16 %v1241, %v1237
    %v1446 = vpack.c.b16 %v1242, %v1238
    %v1447 = vpack.c.b16 %v1243, %v1239
    %v1448 = vpack.c.b16 %v1248, %v1244
    %v1449 = vpack.c.b16 %v1249, %v1245
    %v1450 = vpack.c.b16 %v1250, %v1246
    %v1451 = vpack.c.b16 %v1251, %v1247
    %v1452 = vpack.c.b16 %v1256, %v1252
    %v1453 = vpack.c.b16 %v1257, %v1253
    %v1454 = vpack.c.b16 %v1258, %v1254
    %v1455 = vpack.c.b16 %v1259, %v1255
    %v1456 = vpack.c.b16 %v1264, %v1260
    %v1457 = vpack.c.b16 %v1265, %v1261
    %v1458 = vpack.c.b16 %v1266, %v1262
    %v1459 = vpack.c.b16 %v1267, %v1263
    %1652 = vmatprep.subr.bf16.mxu0 %v1269
    %1653 = vmatpush1.bf16.msra.mxu0 %v1268
    %1654 = vmatprep.subr.bf16.mxu0 %v1273
    %1655 = vmatpush1.bf16.msra.mxu0 %v1272
    %1656 = vmatprep.subr.bf16.mxu0 %v1277
    %1657 = vmatpush1.bf16.msra.mxu0 %v1276
    %1658 = vmatprep.subr.bf16.mxu0 %v1281
    %1659 = vmatpush1.bf16.msra.mxu0 %v1280
    %1660 = vmatprep.subr.bf16.mxu0 %v1285
    %1661 = vmatpush1.bf16.msra.mxu0 %v1284
    %1662 = vmatprep.subr.bf16.mxu0 %v1289
    %1663 = vmatpush1.bf16.msra.mxu0 %v1288
    %1664 = vmatprep.subr.bf16.mxu0 %v1293
    %1665 = vmatpush1.bf16.msra.mxu0 %v1292
    %1666 = vmatprep.subr.bf16.mxu0 %v1297
    %1667 = vmatpush1.bf16.msra.mxu0 %v1296
    %1668 = vmatprep.subr.bf16.mxu0 %v1301
    %1669 = vmatpush1.bf16.msra.mxu0 %v1300
    %1670 = vmatprep.subr.bf16.mxu0 %v1305
    %1671 = vmatpush1.bf16.msra.mxu0 %v1304
    %1672 = vmatprep.subr.bf16.mxu0 %v1309
    %1673 = vmatpush1.bf16.msra.mxu0 %v1308
    %1674 = vmatprep.subr.bf16.mxu0 %v1313
    %1675 = vmatpush1.bf16.msra.mxu0 %v1312
    %1676 = vmatprep.subr.bf16.mxu0 %v1317
    %1677 = vmatpush1.bf16.msra.mxu0 %v1316
    %1678 = vmatprep.subr.bf16.mxu0 %v1321
    %1679 = vmatpush1.bf16.msra.mxu0 %v1320
    %1680 = vmatprep.subr.bf16.mxu0 %v1325
    %1681 = vmatpush1.bf16.msra.mxu0 %v1324
    %1682 = vmatprep.subr.bf16.mxu0 %v1329
    %1683 = vmatpush1.bf16.msra.mxu0 %v1328
    %1684 = vmatprep.mubr.bf16.mxu0 %v467
    %1685 = vmatmul.mubr.bf16.gmra.mrb[0].mxu0 %v466
    %v1686 = vpop.f32.mrb[0].mxu0
    %v1687 = vadd.f32 %v675, %v1686
    %v1688 = vpop.f32.mrb[0].mxu0
    %v1689 = vadd.f32 %v679, %v1688
    %v1690 = vpop.f32.mrb[0].mxu0
    %v1691 = vadd.f32 %v675, %v1690
    %v1692 = vpop.f32.mrb[0].mxu0
    %v1693 = vadd.f32 %v679, %v1692
    %1694 = vmatprep.mubr.bf16.mxu0 %v473
    %1695 = vmatmul.mubr.bf16.gmra.mrb[0].mxu0 %v472
    %v1696 = vpop.f32.mrb[0].mxu0
    %v1697 = vadd.f32 %v675, %v1696
    %v1698 = vpop.f32.mrb[0].mxu0
    %v1699 = vadd.f32 %v679, %v1698
    %v1700 = vpop.f32.mrb[0].mxu0
    %v1701 = vadd.f32 %v675, %v1700
    %v1702 = vpop.f32.mrb[0].mxu0
    %v1703 = vadd.f32 %v679, %v1702
    %1704 = vdwg.mxu0
    %1705 = vmatprep.subr.bf16.mxu0 %v1333
    %1706 = vmatpush1.bf16.msra.mxu0 %v1332
    %1707 = vmatprep.subr.bf16.mxu0 %v1337
    %1708 = vmatpush1.bf16.msra.mxu0 %v1336
    %1709 = vmatprep.subr.bf16.mxu0 %v1341
    %1710 = vmatpush1.bf16.msra.mxu0 %v1340
    %1711 = vmatprep.subr.bf16.mxu0 %v1345
    %1712 = vmatpush1.bf16.msra.mxu0 %v1344
    %1713 = vmatprep.subr.bf16.mxu0 %v1349
    %1714 = vmatpush1.bf16.msra.mxu0 %v1348
    %1715 = vmatprep.subr.bf16.mxu0 %v1353
    %1716 = vmatpush1.bf16.msra.mxu0 %v1352
    %1717 = vmatprep.subr.bf16.mxu0 %v1357
    %1718 = vmatpush1.bf16.msra.mxu0 %v1356
    %1719 = vmatprep.subr.bf16.mxu0 %v1361
    %1720 = vmatpush1.bf16.msra.mxu0 %v1360
    %1721 = vmatprep.subr.bf16.mxu0 %v1365
    %1722 = vmatpush1.bf16.msra.mxu0 %v1364
    %1723 = vmatprep.subr.bf16.mxu0 %v1369
    %1724 = vmatpush1.bf16.msra.mxu0 %v1368
    %1725 = vmatprep.subr.bf16.mxu0 %v1373
    %1726 = vmatpush1.bf16.msra.mxu0 %v1372
    %1727 = vmatprep.subr.bf16.mxu0 %v1377
    %1728 = vmatpush1.bf16.msra.mxu0 %v1376
    %1729 = vmatprep.subr.bf16.mxu0 %v1381
    %1730 = vmatpush1.bf16.msra.mxu0 %v1380
    %1731 = vmatprep.subr.bf16.mxu0 %v1385
    %1732 = vmatpush1.bf16.msra.mxu0 %v1384
    %1733 = vmatprep.subr.bf16.mxu0 %v1389
    %1734 = vmatpush1.bf16.msra.mxu0 %v1388
    %1735 = vmatprep.subr.bf16.mxu0 %v1393
    %1736 = vmatpush1.bf16.msra.mxu0 %v1392
    %1737 = vmatprep.mubr.bf16.mxu0 %v469
    %1738 = vmatmul.mubr.bf16.gmra.mrb[0].mxu0 %v468
    %v1739 = vpop.f32.mrb[0].mxu0
    %v1740 = vadd.f32 %v1687, %v1739
    %v1741 = vpop.f32.mrb[0].mxu0
    %v1742 = vadd.f32 %v1689, %v1741
    %v1743 = vpop.f32.mrb[0].mxu0
    %v1744 = vadd.f32 %v1691, %v1743
    %v1745 = vpop.f32.mrb[0].mxu0
    %v1746 = vadd.f32 %v1693, %v1745
    %1747 = vmatprep.mubr.bf16.mxu0 %v475
    %1748 = vmatmul.mubr.bf16.gmra.mrb[0].mxu0 %v474
    %v1749 = vpop.f32.mrb[0].mxu0
    %v1750 = vadd.f32 %v1697, %v1749
    %v1751 = vpop.f32.mrb[0].mxu0
    %v1752 = vadd.f32 %v1699, %v1751
    %v1753 = vpop.f32.mrb[0].mxu0
    %v1754 = vadd.f32 %v1701, %v1753
    %v1755 = vpop.f32.mrb[0].mxu0
    %v1756 = vadd.f32 %v1703, %v1755
    %1757 = vdwg.mxu0
    %1758 = vmatprep.subr.bf16.mxu0 %v1397
    %1759 = vmatpush1.bf16.msra.mxu0 %v1396
    %1760 = vmatprep.subr.bf16.mxu0 %v1401
    %1761 = vmatpush1.bf16.msra.mxu0 %v1400
    %1762 = vmatprep.subr.bf16.mxu0 %v1405
    %1763 = vmatpush1.bf16.msra.mxu0 %v1404
    %1764 = vmatprep.subr.bf16.mxu0 %v1409
    %1765 = vmatpush1.bf16.msra.mxu0 %v1408
    %1766 = vmatprep.subr.bf16.mxu0 %v1413
    %1767 = vmatpush1.bf16.msra.mxu0 %v1412
    %1768 = vmatprep.subr.bf16.mxu0 %v1417
    %1769 = vmatpush1.bf16.msra.mxu0 %v1416
    %1770 = vmatprep.subr.bf16.mxu0 %v1421
    %1771 = vmatpush1.bf16.msra.mxu0 %v1420
    %1772 = vmatprep.subr.bf16.mxu0 %v1425
    %1773 = vmatpush1.bf16.msra.mxu0 %v1424
    %1774 = vmatprep.subr.bf16.mxu0 %v1429
    %1775 = vmatpush1.bf16.msra.mxu0 %v1428
    %1776 = vmatprep.subr.bf16.mxu0 %v1433
    %1777 = vmatpush1.bf16.msra.mxu0 %v1432
    %1778 = vmatprep.subr.bf16.mxu0 %v1437
    %1779 = vmatpush1.bf16.msra.mxu0 %v1436
    %1780 = vmatprep.subr.bf16.mxu0 %v1441
    %1781 = vmatpush1.bf16.msra.mxu0 %v1440
    %1782 = vmatprep.subr.bf16.mxu0 %v1445
    %1783 = vmatpush1.bf16.msra.mxu0 %v1444
    %1784 = vmatprep.subr.bf16.mxu0 %v1449
    %1785 = vmatpush1.bf16.msra.mxu0 %v1448
    %1786 = vmatprep.subr.bf16.mxu0 %v1453
    %1787 = vmatpush1.bf16.msra.mxu0 %v1452
    %1788 = vmatprep.subr.bf16.mxu0 %v1457
    %1789 = vmatpush1.bf16.msra.mxu0 %v1456
    %1790 = vmatprep.mubr.bf16.mxu0 %v471
    %1791 = vmatmul.mubr.bf16.gmra.mrb[0].mxu0 %v470
    %v1792 = vpop.f32.mrb[0].mxu0
    %v1793 = vadd.f32 %v1740, %v1792
    %v1794 = vpop.f32.mrb[0].mxu0
    %v1795 = vadd.f32 %v1742, %v1794
    %v1796 = vpop.f32.mrb[0].mxu0
    %v1797 = vadd.f32 %v1744, %v1796
    %v1798 = vpop.f32.mrb[0].mxu0
    %v1799 = vadd.f32 %v1746, %v1798
    %1800 = vmatprep.mubr.bf16.mxu0 %v477
    %1801 = vmatmul.mubr.bf16.gmra.mrb[0].mxu0 %v476
    %v1802 = vpop.f32.mrb[0].mxu0
    %v1803 = vadd.f32 %v1750, %v1802
    %v1804 = vpop.f32.mrb[0].mxu0
    %v1805 = vadd.f32 %v1752, %v1804
    %v1806 = vpop.f32.mrb[0].mxu0
    %v1807 = vadd.f32 %v1754, %v1806
    %v1808 = vpop.f32.mrb[0].mxu0
    %v1809 = vadd.f32 %v1756, %v1808
    %1810 = vdwg.mxu0
    %1811 = vmatprep.subr.bf16.mxu0 %v1271
    %1812 = vmatpush1.bf16.msra.mxu0 %v1270
    %1813 = vmatprep.subr.bf16.mxu0 %v1275
    %1814 = vmatpush1.bf16.msra.mxu0 %v1274
    %1815 = vmatprep.subr.bf16.mxu0 %v1279
    %1816 = vmatpush1.bf16.msra.mxu0 %v1278
    %1817 = vmatprep.subr.bf16.mxu0 %v1283
    %1818 = vmatpush1.bf16.msra.mxu0 %v1282
    %1819 = vmatprep.subr.bf16.mxu0 %v1287
    %1820 = vmatpush1.bf16.msra.mxu0 %v1286
    %1821 = vmatprep.subr.bf16.mxu0 %v1291
    %1822 = vmatpush1.bf16.msra.mxu0 %v1290
    %1823 = vmatprep.subr.bf16.mxu0 %v1295
    %1824 = vmatpush1.bf16.msra.mxu0 %v1294
    %1825 = vmatprep.subr.bf16.mxu0 %v1299
    %1826 = vmatpush1.bf16.msra.mxu0 %v1298
    %1827 = vmatprep.subr.bf16.mxu0 %v1303
    %1828 = vmatpush1.bf16.msra.mxu0 %v1302
    %1829 = vmatprep.subr.bf16.mxu0 %v1307
    %1830 = vmatpush1.bf16.msra.mxu0 %v1306
    %1831 = vmatprep.subr.bf16.mxu0 %v1311
    %1832 = vmatpush1.bf16.msra.mxu0 %v1310
    %1833 = vmatprep.subr.bf16.mxu0 %v1315
    %1834 = vmatpush1.bf16.msra.mxu0 %v1314
    %1835 = vmatprep.subr.bf16.mxu0 %v1319
    %1836 = vmatpush1.bf16.msra.mxu0 %v1318
    %1837 = vmatprep.subr.bf16.mxu0 %v1323
    %1838 = vmatpush1.bf16.msra.mxu0 %v1322
    %1839 = vmatprep.subr.bf16.mxu0 %v1327
    %1840 = vmatpush1.bf16.msra.mxu0 %v1326
    %1841 = vmatprep.subr.bf16.mxu0 %v1331
    %1842 = vmatpush1.bf16.msra.mxu0 %v1330
    %1843 = vmatprep.mubr.bf16.mxu0 %v467
    %1844 = vmatmul.mubr.bf16.gmra.mrb[0].mxu0 %v466
    %v1845 = vpop.f32.mrb[0].mxu0
    %v1846 = vadd.f32 %v683, %v1845
    %v1847 = vpop.f32.mrb[0].mxu0
    %v1848 = vadd.f32 %v687, %v1847
    %v1849 = vpop.f32.mrb[0].mxu0
    %v1850 = vadd.f32 %v683, %v1849
    %v1851 = vpop.f32.mrb[0].mxu0
    %v1852 = vadd.f32 %v687, %v1851
    %1853 = vmatprep.mubr.bf16.mxu0 %v473
    %1854 = vmatmul.mubr.bf16.gmra.mrb[0].mxu0 %v472
    %v1855 = vpop.f32.mrb[0].mxu0
    %v1856 = vadd.f32 %v683, %v1855
    %v1857 = vpop.f32.mrb[0].mxu0
    %v1858 = vadd.f32 %v687, %v1857
    %v1859 = vpop.f32.mrb[0].mxu0
    %v1860 = vadd.f32 %v683, %v1859
    %v1861 = vpop.f32.mrb[0].mxu0
    %v1862 = vadd.f32 %v687, %v1861
    %1863 = vdwg.mxu0
    %1864 = vmatprep.subr.bf16.mxu0 %v1335
    %1865 = vmatpush1.bf16.msra.mxu0 %v1334
    %1866 = vmatprep.subr.bf16.mxu0 %v1339
    %1867 = vmatpush1.bf16.msra.mxu0 %v1338
    %1868 = vmatprep.subr.bf16.mxu0 %v1343
    %1869 = vmatpush1.bf16.msra.mxu0 %v1342
    %1870 = vmatprep.subr.bf16.mxu0 %v1347
    %1871 = vmatpush1.bf16.msra.mxu0 %v1346
    %1872 = vmatprep.subr.bf16.mxu0 %v1351
    %1873 = vmatpush1.bf16.msra.mxu0 %v1350
    %1874 = vmatprep.subr.bf16.mxu0 %v1355
    %1875 = vmatpush1.bf16.msra.mxu0 %v1354
    %1876 = vmatprep.subr.bf16.mxu0 %v1359
    %1877 = vmatpush1.bf16.msra.mxu0 %v1358
    %1878 = vmatprep.subr.bf16.mxu0 %v1363
    %1879 = vmatpush1.bf16.msra.mxu0 %v1362
    %1880 = vmatprep.subr.bf16.mxu0 %v1367
    %1881 = vmatpush1.bf16.msra.mxu0 %v1366
    %1882 = vmatprep.subr.bf16.mxu0 %v1371
    %1883 = vmatpush1.bf16.msra.mxu0 %v1370
    %1884 = vmatprep.subr.bf16.mxu0 %v1375
    %1885 = vmatpush1.bf16.msra.mxu0 %v1374
    %1886 = vmatprep.subr.bf16.mxu0 %v1379
    %1887 = vmatpush1.bf16.msra.mxu0 %v1378
    %1888 = vmatprep.subr.bf16.mxu0 %v1383
    %1889 = vmatpush1.bf16.msra.mxu0 %v1382
    %1890 = vmatprep.subr.bf16.mxu0 %v1387
    %1891 = vmatpush1.bf16.msra.mxu0 %v1386
    %1892 = vmatprep.subr.bf16.mxu0 %v1391
    %1893 = vmatpush1.bf16.msra.mxu0 %v1390
    %1894 = vmatprep.subr.bf16.mxu0 %v1395
    %1895 = vmatpush1.bf16.msra.mxu0 %v1394
    %1896 = vmatprep.mubr.bf16.mxu0 %v469
    %1897 = vmatmul.mubr.bf16.gmra.mrb[0].mxu0 %v468
    %v1898 = vpop.f32.mrb[0].mxu0
    %v1899 = vadd.f32 %v1846, %v1898
    %v1900 = vpop.f32.mrb[0].mxu0
    %v1901 = vadd.f32 %v1848, %v1900
    %v1902 = vpop.f32.mrb[0].mxu0
    %v1903 = vadd.f32 %v1850, %v1902
    %v1904 = vpop.f32.mrb[0].mxu0
    %v1905 = vadd.f32 %v1852, %v1904
    %1906 = vmatprep.mubr.bf16.mxu0 %v475
    %1907 = vmatmul.mubr.bf16.gmra.mrb[0].mxu0 %v474
    %v1908 = vpop.f32.mrb[0].mxu0
    %v1909 = vadd.f32 %v1856, %v1908
    %v1910 = vpop.f32.mrb[0].mxu0
    %v1911 = vadd.f32 %v1858, %v1910
    %v1912 = vpop.f32.mrb[0].mxu0
    %v1913 = vadd.f32 %v1860, %v1912
    %v1914 = vpop.f32.mrb[0].mxu0
    %v1915 = vadd.f32 %v1862, %v1914
    %1916 = vdwg.mxu0
    %1917 = vmatprep.subr.bf16.mxu0 %v1399
    %1918 = vmatpush1.bf16.msra.mxu0 %v1398
    %1919 = vmatprep.subr.bf16.mxu0 %v1403
    %1920 = vmatpush1.bf16.msra.mxu0 %v1402
    %1921 = vmatprep.subr.bf16.mxu0 %v1407
    %1922 = vmatpush1.bf16.msra.mxu0 %v1406
    %1923 = vmatprep.subr.bf16.mxu0 %v1411
    %1924 = vmatpush1.bf16.msra.mxu0 %v1410
    %1925 = vmatprep.subr.bf16.mxu0 %v1415
    %1926 = vmatpush1.bf16.msra.mxu0 %v1414
    %1927 = vmatprep.subr.bf16.mxu0 %v1419
    %1928 = vmatpush1.bf16.msra.mxu0 %v1418
    %1929 = vmatprep.subr.bf16.mxu0 %v1423
    %1930 = vmatpush1.bf16.msra.mxu0 %v1422
    %1931 = vmatprep.subr.bf16.mxu0 %v1427
    %1932 = vmatpush1.bf16.msra.mxu0 %v1426
    %1933 = vmatprep.subr.bf16.mxu0 %v1431
    %1934 = vmatpush1.bf16.msra.mxu0 %v1430
    %1935 = vmatprep.subr.bf16.mxu0 %v1435
    %1936 = vmatpush1.bf16.msra.mxu0 %v1434
    %1937 = vmatprep.subr.bf16.mxu0 %v1439
    %1938 = vmatpush1.bf16.msra.mxu0 %v1438
    %1939 = vmatprep.subr.bf16.mxu0 %v1443
    %1940 = vmatpush1.bf16.msra.mxu0 %v1442
    %1941 = vmatprep.subr.bf16.mxu0 %v1447
    %1942 = vmatpush1.bf16.msra.mxu0 %v1446
    %1943 = vmatprep.subr.bf16.mxu0 %v1451
    %1944 = vmatpush1.bf16.msra.mxu0 %v1450
    %1945 = vmatprep.subr.bf16.mxu0 %v1455
    %1946 = vmatpush1.bf16.msra.mxu0 %v1454
    %1947 = vmatprep.subr.bf16.mxu0 %v1459
    %1948 = vmatpush1.bf16.msra.mxu0 %v1458
    %1949 = vmatprep.mubr.bf16.mxu0 %v471
    %1950 = vmatmul.mubr.bf16.gmra.mrb[0].mxu0 %v470
    %v1951 = vpop.f32.mrb[0].mxu0
    %v1952 = vadd.f32 %v1899, %v1951
    %v1953 = vpop.f32.mrb[0].mxu0
    %v1954 = vadd.f32 %v1901, %v1953
    %v1955 = vpop.f32.mrb[0].mxu0
    %v1956 = vadd.f32 %v1903, %v1955
    %v1957 = vpop.f32.mrb[0].mxu0
    %v1958 = vadd.f32 %v1905, %v1957
    %1959 = vmatprep.mubr.bf16.mxu0 %v477
    %1960 = vmatmul.mubr.bf16.gmra.mrb[0].mxu0 %v476
    %v1961 = vpop.f32.mrb[0].mxu0
    %v1962 = vadd.f32 %v1909, %v1961
    %v1963 = vpop.f32.mrb[0].mxu0
    %v1964 = vadd.f32 %v1911, %v1963
    %v1965 = vpop.f32.mrb[0].mxu0
    %v1966 = vadd.f32 %v1913, %v1965
    %v1967 = vpop.f32.mrb[0].mxu0
    %v1968 = vadd.f32 %v1915, %v1967
    %1969 = vdwg.mxu0
    %v1970 = vmax.f32 %v1793, 0.0
    %v1971 = vmax.f32 %v1795, 0.0
    %v1972 = vmax.f32 %v1952, 0.0
    %v1973 = vmax.f32 %v1954, 0.0
    %v1974 = vmax.f32 %v1797, 0.0
    %v1975 = vmax.f32 %v1799, 0.0
    %v1976 = vmax.f32 %v1956, 0.0
    %v1977 = vmax.f32 %v1958, 0.0
    %v1978 = vmax.f32 %v1803, 0.0
    %v1979 = vmax.f32 %v1805, 0.0
    %v1980 = vmax.f32 %v1962, 0.0
    %v1981 = vmax.f32 %v1964, 0.0
    %v1982 = vmax.f32 %v1807, 0.0
    %v1983 = vmax.f32 %v1809, 0.0
    %v1984 = vmax.f32 %v1966, 0.0
    %v1985 = vmax.f32 %v1968, 0.0
    %v2002 = vcombine.low %v1970, %v1971
    %v2003 = vcombine.high %v1970, %v1971
    %v2004 = vcombine.low %v1972, %v1973
    %v2005 = vcombine.high %v1972, %v1973
    %v2007 = vunpack.c.l.s4 1983009808
    %v2008 = vunpack.c.0.s8 %v2007
    %v2009 = vlaneseq
    %v2010 = vshrl.u32 %v2009, 7
    %v2011 = vsub.s32 %v2008, %v2010
    %v2012 = vrot.slane %v2002, %v2011
    %v2014 = vunpack.c.l.s4 1983009808
    %v2015 = vunpack.c.0.s8 %v2014
    %v2016 = vlaneseq
    %v2017 = vshrl.u32 %v2016, 7
    %v2018 = vsub.s32 %v2015, %v2017
    %v2019 = vrot.slane %v2003, %v2018
    %v2021 = vunpack.c.l.s4 1983009808
    %v2022 = vunpack.c.0.s8 %v2021
    %v2023 = vlaneseq
    %v2024 = vshrl.u32 %v2023, 7
    %v2025 = vsub.s32 %v2022, %v2024
    %v2026 = vrot.slane %v2004, %v2025
    %v2028 = vunpack.c.l.s4 1983009808
    %v2029 = vunpack.c.0.s8 %v2028
    %v2030 = vlaneseq
    %v2031 = vshrl.u32 %v2030, 7
    %v2032 = vsub.s32 %v2029, %v2031
    %v2033 = vrot.slane %v2005, %v2032
    %v2034 = vcombine.low %v2012, %v2026
    %v2035 = vcombine.high %v2012, %v2026
    %v2036 = vcombine.low %v2019, %v2033
    %v2037 = vcombine.high %v2019, %v2033
    %v2038 = vcombine.low %v1974, %v1975
    %v2039 = vcombine.high %v1974, %v1975
    %v2040 = vcombine.low %v1976, %v1977
    %v2041 = vcombine.high %v1976, %v1977
    %v2043 = vunpack.c.l.s4 1983009808
    %v2044 = vunpack.c.0.s8 %v2043
    %v2045 = vlaneseq
    %v2046 = vshrl.u32 %v2045, 7
    %v2047 = vsub.s32 %v2044, %v2046
    %v2048 = vrot.slane %v2038, %v2047
    %v2050 = vunpack.c.l.s4 1983009808
    %v2051 = vunpack.c.0.s8 %v2050
    %v2052 = vlaneseq
    %v2053 = vshrl.u32 %v2052, 7
    %v2054 = vsub.s32 %v2051, %v2053
    %v2055 = vrot.slane %v2039, %v2054
    %v2057 = vunpack.c.l.s4 1983009808
    %v2058 = vunpack.c.0.s8 %v2057
    %v2059 = vlaneseq
    %v2060 = vshrl.u32 %v2059, 7
    %v2061 = vsub.s32 %v2058, %v2060
    %v2062 = vrot.slane %v2040, %v2061
    %v2064 = vunpack.c.l.s4 1983009808
    %v2065 = vunpack.c.0.s8 %v2064
    %v2066 = vlaneseq
    %v2067 = vshrl.u32 %v2066, 7
    %v2068 = vsub.s32 %v2065, %v2067
    %v2069 = vrot.slane %v2041, %v2068
    %v2070 = vcombine.low %v2048, %v2062
    %v2071 = vcombine.high %v2048, %v2062
    %v2072 = vcombine.low %v2055, %v2069
    %v2073 = vcombine.high %v2055, %v2069
    %v2074 = vcombine.low %v1978, %v1979
    %v2075 = vcombine.high %v1978, %v1979
    %v2076 = vcombine.low %v1980, %v1981
    %v2077 = vcombine.high %v1980, %v1981
    %v2079 = vunpack.c.l.s4 1983009808
    %v2080 = vunpack.c.0.s8 %v2079
    %v2081 = vlaneseq
    %v2082 = vshrl.u32 %v2081, 7
    %v2083 = vsub.s32 %v2080, %v2082
    %v2084 = vrot.slane %v2074, %v2083
    %v2086 = vunpack.c.l.s4 1983009808
    %v2087 = vunpack.c.0.s8 %v2086
    %v2088 = vlaneseq
    %v2089 = vshrl.u32 %v2088, 7
    %v2090 = vsub.s32 %v2087, %v2089
    %v2091 = vrot.slane %v2075, %v2090
    %v2093 = vunpack.c.l.s4 1983009808
    %v2094 = vunpack.c.0.s8 %v2093
    %v2095 = vlaneseq
    %v2096 = vshrl.u32 %v2095, 7
    %v2097 = vsub.s32 %v2094, %v2096
    %v2098 = vrot.slane %v2076, %v2097
    %v2100 = vunpack.c.l.s4 1983009808
    %v2101 = vunpack.c.0.s8 %v2100
    %v2102 = vlaneseq
    %v2103 = vshrl.u32 %v2102, 7
    %v2104 = vsub.s32 %v2101, %v2103
    %v2105 = vrot.slane %v2077, %v2104
    %v2106 = vcombine.low %v2084, %v2098
    %v2107 = vcombine.high %v2084, %v2098
    %v2108 = vcombine.low %v2091, %v2105
    %v2109 = vcombine.high %v2091, %v2105
    %v2110 = vcombine.low %v1982, %v1983
    %v2111 = vcombine.high %v1982, %v1983
    %v2112 = vcombine.low %v1984, %v1985
    %v2113 = vcombine.high %v1984, %v1985
    %v2115 = vunpack.c.l.s4 1983009808
    %v2116 = vunpack.c.0.s8 %v2115
    %v2117 = vlaneseq
    %v2118 = vshrl.u32 %v2117, 7
    %v2119 = vsub.s32 %v2116, %v2118
    %v2120 = vrot.slane %v2110, %v2119
    %v2122 = vunpack.c.l.s4 1983009808
    %v2123 = vunpack.c.0.s8 %v2122
    %v2124 = vlaneseq
    %v2125 = vshrl.u32 %v2124, 7
    %v2126 = vsub.s32 %v2123, %v2125
    %v2127 = vrot.slane %v2111, %v2126
    %v2129 = vunpack.c.l.s4 1983009808
    %v2130 = vunpack.c.0.s8 %v2129
    %v2131 = vlaneseq
    %v2132 = vshrl.u32 %v2131, 7
    %v2133 = vsub.s32 %v2130, %v2132
    %v2134 = vrot.slane %v2112, %v2133
    %v2136 = vunpack.c.l.s4 1983009808
    %v2137 = vunpack.c.0.s8 %v2136
    %v2138 = vlaneseq
    %v2139 = vshrl.u32 %v2138, 7
    %v2140 = vsub.s32 %v2137, %v2139
    %v2141 = vrot.slane %v2113, %v2140
    %v2142 = vcombine.low %v2120, %v2134
    %v2143 = vcombine.high %v2120, %v2134
    %v2144 = vcombine.low %v2127, %v2141
    %v2145 = vcombine.high %v2127, %v2141
    %v2162 = vrot.slane %v2034, 7
    %v2163 = vrot.slane %v2162, 2
    %v2164 = vrot.slane %v2035, 7
    %v2165 = vrot.slane %v2164, 2
    %v2166 = vrot.slane %v2036, 7
    %v2167 = vrot.slane %v2166, 2
    %v2168 = vrot.slane %v2037, 7
    %v2169 = vrot.slane %v2168, 2
    %v2170 = vrot.slane %v2070, 7
    %v2171 = vrot.slane %v2170, 2
    %v2172 = vrot.slane %v2071, 7
    %v2173 = vrot.slane %v2172, 2
    %v2174 = vrot.slane %v2072, 7
    %v2175 = vrot.slane %v2174, 2
    %v2176 = vrot.slane %v2073, 7
    %v2177 = vrot.slane %v2176, 2
    %v2178 = vrot.slane %v2106, 7
    %v2179 = vrot.slane %v2178, 2
    %v2180 = vrot.slane %v2107, 7
    %v2181 = vrot.slane %v2180, 2
    %v2182 = vrot.slane %v2108, 7
    %v2183 = vrot.slane %v2182, 2
    %v2184 = vrot.slane %v2109, 7
    %v2185 = vrot.slane %v2184, 2
    %v2186 = vrot.slane %v2142, 7
    %v2187 = vrot.slane %v2186, 2
    %v2188 = vrot.slane %v2143, 7
    %v2189 = vrot.slane %v2188, 2
    %v2190 = vrot.slane %v2144, 7
    %v2191 = vrot.slane %v2190, 2
    %v2192 = vrot.slane %v2145, 7
    %v2193 = vrot.slane %v2192, 2
    %v2210 = vmax.f32 %v2034, %v2163
    %v2211 = vmax.f32 %v2035, %v2165
    %v2212 = vmax.f32 %v2036, %v2167
    %v2213 = vmax.f32 %v2037, %v2169
    %v2214 = vmax.f32 %v2070, %v2171
    %v2215 = vmax.f32 %v2071, %v2173
    %v2216 = vmax.f32 %v2072, %v2175
    %v2217 = vmax.f32 %v2073, %v2177
    %v2218 = vmax.f32 %v2106, %v2179
    %v2219 = vmax.f32 %v2107, %v2181
    %v2220 = vmax.f32 %v2108, %v2183
    %v2221 = vmax.f32 %v2109, %v2185
    %v2222 = vmax.f32 %v2142, %v2187
    %v2223 = vmax.f32 %v2143, %v2189
    %v2224 = vmax.f32 %v2144, %v2191
    %v2225 = vmax.f32 %v2145, %v2193
    %v2242 = vrot.slane %v2210, 4
    %v2243 = vrot.slane %v2211, 4
    %v2244 = vrot.slane %v2212, 4
    %v2245 = vrot.slane %v2213, 4
    %v2246 = vrot.slane %v2214, 4
    %v2247 = vrot.slane %v2215, 4
    %v2248 = vrot.slane %v2216, 4
    %v2249 = vrot.slane %v2217, 4
    %v2250 = vrot.slane %v2218, 4
    %v2251 = vrot.slane %v2219, 4
    %v2252 = vrot.slane %v2220, 4
    %v2253 = vrot.slane %v2221, 4
    %v2254 = vrot.slane %v2222, 4
    %v2255 = vrot.slane %v2223, 4
    %v2256 = vrot.slane %v2224, 4
    %v2257 = vrot.slane %v2225, 4
    %v2274 = vmax.f32 %v2210, %v2242
    %v2275 = vmax.f32 %v2211, %v2243
    %v2276 = vmax.f32 %v2212, %v2244
    %v2277 = vmax.f32 %v2213, %v2245
    %v2278 = vmax.f32 %v2214, %v2246
    %v2279 = vmax.f32 %v2215, %v2247
    %v2280 = vmax.f32 %v2216, %v2248
    %v2281 = vmax.f32 %v2217, %v2249
    %v2282 = vmax.f32 %v2218, %v2250
    %v2283 = vmax.f32 %v2219, %v2251
    %v2284 = vmax.f32 %v2220, %v2252
    %v2285 = vmax.f32 %v2221, %v2253
    %v2286 = vmax.f32 %v2222, %v2254
    %v2287 = vmax.f32 %v2223, %v2255
    %v2288 = vmax.f32 %v2224, %v2256
    %v2289 = vmax.f32 %v2225, %v2257
    %v2307 = vunpack.c.l.s4 572653568
    %v2308 = vunpack.c.0.s8 %v2307
    %v2309 = vlaneseq
    %v2310 = vshrl.u32 %v2309, 7
    %v2311 = vsub.s32 %v2308, %v2310
    %v2312 = vrot.slane %v2274, %v2311
    %v2314 = vunpack.c.l.s4 572653568
    %v2315 = vunpack.c.0.s8 %v2314
    %v2316 = vlaneseq
    %v2317 = vshrl.u32 %v2316, 7
    %v2318 = vsub.s32 %v2315, %v2317
    %v2319 = vrot.slane %v2275, %v2318
    %v2321 = vunpack.c.l.s4 572653568
    %v2322 = vunpack.c.0.s8 %v2321
    %v2323 = vlaneseq
    %v2324 = vshrl.u32 %v2323, 7
    %v2325 = vsub.s32 %v2322, %v2324
    %v2326 = vrot.slane %v2276, %v2325
    %v2328 = vunpack.c.l.s4 572653568
    %v2329 = vunpack.c.0.s8 %v2328
    %v2330 = vlaneseq
    %v2331 = vshrl.u32 %v2330, 7
    %v2332 = vsub.s32 %v2329, %v2331
    %v2333 = vrot.slane %v2277, %v2332
    %v2335 = vunpack.c.l.s4 572653568
    %v2336 = vunpack.c.0.s8 %v2335
    %v2337 = vlaneseq
    %v2338 = vshrl.u32 %v2337, 7
    %v2339 = vsub.s32 %v2336, %v2338
    %v2340 = vrot.slane %v2278, %v2339
    %v2342 = vunpack.c.l.s4 572653568
    %v2343 = vunpack.c.0.s8 %v2342
    %v2344 = vlaneseq
    %v2345 = vshrl.u32 %v2344, 7
    %v2346 = vsub.s32 %v2343, %v2345
    %v2347 = vrot.slane %v2279, %v2346
    %v2349 = vunpack.c.l.s4 572653568
    %v2350 = vunpack.c.0.s8 %v2349
    %v2351 = vlaneseq
    %v2352 = vshrl.u32 %v2351, 7
    %v2353 = vsub.s32 %v2350, %v2352
    %v2354 = vrot.slane %v2280, %v2353
    %v2356 = vunpack.c.l.s4 572653568
    %v2357 = vunpack.c.0.s8 %v2356
    %v2358 = vlaneseq
    %v2359 = vshrl.u32 %v2358, 7
    %v2360 = vsub.s32 %v2357, %v2359
    %v2361 = vrot.slane %v2281, %v2360
    %v2363 = vunpack.c.l.s4 572653568
    %v2364 = vunpack.c.0.s8 %v2363
    %v2365 = vlaneseq
    %v2366 = vshrl.u32 %v2365, 7
    %v2367 = vsub.s32 %v2364, %v2366
    %v2368 = vrot.slane %v2282, %v2367
    %v2370 = vunpack.c.l.s4 572653568
    %v2371 = vunpack.c.0.s8 %v2370
    %v2372 = vlaneseq
    %v2373 = vshrl.u32 %v2372, 7
    %v2374 = vsub.s32 %v2371, %v2373
    %v2375 = vrot.slane %v2283, %v2374
    %v2377 = vunpack.c.l.s4 572653568
    %v2378 = vunpack.c.0.s8 %v2377
    %v2379 = vlaneseq
    %v2380 = vshrl.u32 %v2379, 7
    %v2381 = vsub.s32 %v2378, %v2380
    %v2382 = vrot.slane %v2284, %v2381
    %v2384 = vunpack.c.l.s4 572653568
    %v2385 = vunpack.c.0.s8 %v2384
    %v2386 = vlaneseq
    %v2387 = vshrl.u32 %v2386, 7
    %v2388 = vsub.s32 %v2385, %v2387
    %v2389 = vrot.slane %v2285, %v2388
    %v2391 = vunpack.c.l.s4 572653568
    %v2392 = vunpack.c.0.s8 %v2391
    %v2393 = vlaneseq
    %v2394 = vshrl.u32 %v2393, 7
    %v2395 = vsub.s32 %v2392, %v2394
    %v2396 = vrot.slane %v2286, %v2395
    %v2398 = vunpack.c.l.s4 572653568
    %v2399 = vunpack.c.0.s8 %v2398
    %v2400 = vlaneseq
    %v2401 = vshrl.u32 %v2400, 7
    %v2402 = vsub.s32 %v2399, %v2401
    %v2403 = vrot.slane %v2287, %v2402
    %v2405 = vunpack.c.l.s4 572653568
    %v2406 = vunpack.c.0.s8 %v2405
    %v2407 = vlaneseq
    %v2408 = vshrl.u32 %v2407, 7
    %v2409 = vsub.s32 %v2406, %v2408
    %v2410 = vrot.slane %v2288, %v2409
    %v2412 = vunpack.c.l.s4 572653568
    %v2413 = vunpack.c.0.s8 %v2412
    %v2414 = vlaneseq
    %v2415 = vshrl.u32 %v2414, 7
    %v2416 = vsub.s32 %v2413, %v2415
    %v2417 = vrot.slane %v2289, %v2416
    %vm2418 = vcmask 1041409
    %v2419 = vsel %vm2418, %v2319, %v2312
    %vm2420 = vcmask 1045509
    %v2421 = vsel %vm2420, %v2319, %v2419
    %vm2422 = vcmask 1042434
    %v2423 = vsel %vm2422, %v2326, %v2421
    %vm2424 = vcmask 1046534
    %v2425 = vsel %vm2424, %v2326, %v2423
    %vm2426 = vcmask 1043459
    %v2427 = vsel %vm2426, %v2333, %v2425
    %vm2428 = vcmask 1047559
    %v2429 = vsel %vm2428, %v2333, %v2427
    %v2430 = vsel %vm2418, %v2347, %v2340
    %v2431 = vsel %vm2420, %v2347, %v2430
    %v2432 = vsel %vm2422, %v2354, %v2431
    %v2433 = vsel %vm2424, %v2354, %v2432
    %v2434 = vsel %vm2426, %v2361, %v2433
    %v2435 = vsel %vm2428, %v2361, %v2434
    %v2436 = vsel %vm2418, %v2375, %v2368
    %v2437 = vsel %vm2420, %v2375, %v2436
    %v2438 = vsel %vm2422, %v2382, %v2437
    %v2439 = vsel %vm2424, %v2382, %v2438
    %v2440 = vsel %vm2426, %v2389, %v2439
    %v2441 = vsel %vm2428, %v2389, %v2440
    %v2442 = vsel %vm2418, %v2403, %v2396
    %v2443 = vsel %vm2420, %v2403, %v2442
    %v2444 = vsel %vm2422, %v2410, %v2443
    %v2445 = vsel %vm2424, %v2410, %v2444
    %v2446 = vsel %vm2426, %v2417, %v2445
    %v2447 = vsel %vm2428, %v2417, %v2446
    %v2453 = vunpack.c.l.s4 1935823168
    %v2454 = vunpack.c.0.s8 %v2453
    %v2455 = vlaneseq
    %v2456 = vshrl.u32 %v2455, 7
    %v2457 = vsub.s32 %v2454, %v2456
    %v2458 = vrot.slane %v2429, %v2457
    %v2460 = vunpack.c.l.s4 1935823168
    %v2461 = vunpack.c.0.s8 %v2460
    %v2462 = vlaneseq
    %v2463 = vshrl.u32 %v2462, 7
    %v2464 = vsub.s32 %v2461, %v2463
    %v2465 = vrot.slane %v2435, %v2464
    %v2467 = vunpack.c.l.s4 1935823168
    %v2468 = vunpack.c.0.s8 %v2467
    %v2469 = vlaneseq
    %v2470 = vshrl.u32 %v2469, 7
    %v2471 = vsub.s32 %v2468, %v2470
    %v2472 = vrot.slane %v2441, %v2471
    %v2474 = vunpack.c.l.s4 1935823168
    %v2475 = vunpack.c.0.s8 %v2474
    %v2476 = vlaneseq
    %v2477 = vshrl.u32 %v2476, 7
    %v2478 = vsub.s32 %v2475, %v2477
    %v2479 = vrot.slane %v2447, %v2478
    %v2484 = vcombine.low %v2458, %v2472
    %v2485 = vcombine.high %v2458, %v2472
    %v2487 = vunpack.c.l.s4 1966171168
    %v2488 = vunpack.c.0.s8 %v2487
    %v2489 = vlaneseq
    %v2490 = vshrl.u32 %v2489, 7
    %v2491 = vsub.s32 %v2488, %v2490
    %v2492 = vrot.slane %v2484, %v2491
    %v2494 = vunpack.c.l.s4 1966171168
    %v2495 = vunpack.c.0.s8 %v2494
    %v2496 = vlaneseq
    %v2497 = vshrl.u32 %v2496, 7
    %v2498 = vsub.s32 %v2495, %v2497
    %v2499 = vrot.slane %v2485, %v2498
    %v2500 = vcombine.high %v2492, %v2492
    %v2501 = vcombine.high %v2499, %v2499
    %v2503 = vunpack.c.l.s4 1966171168
    %v2504 = vunpack.c.0.s8 %v2503
    %v2505 = vlaneseq
    %v2506 = vshrl.u32 %v2505, 7
    %v2507 = vsub.s32 %v2504, %v2506
    %v2508 = vrot.slane %v2492, %v2507
    %v2510 = vunpack.c.l.s4 1966171168
    %v2511 = vunpack.c.0.s8 %v2510
    %v2512 = vlaneseq
    %v2513 = vshrl.u32 %v2512, 7
    %v2514 = vsub.s32 %v2511, %v2513
    %v2515 = vrot.slane %v2499, %v2514
    %v2517 = vunpack.c.l.s4 1966171168
    %v2518 = vunpack.c.0.s8 %v2517
    %v2519 = vlaneseq
    %v2520 = vshrl.u32 %v2519, 7
    %v2521 = vsub.s32 %v2518, %v2520
    %v2522 = vrot.slane %v2500, %v2521
    %v2524 = vunpack.c.l.s4 1966171168
    %v2525 = vunpack.c.0.s8 %v2524
    %v2526 = vlaneseq
    %v2527 = vshrl.u32 %v2526, 7
    %v2528 = vsub.s32 %v2525, %v2527
    %v2529 = vrot.slane %v2501, %v2528
    %v2530 = vcombine.high %v2508, %v2508
    %v2531 = vcombine.high %v2515, %v2515
    %v2532 = vcombine.high %v2522, %v2522
    %v2533 = vcombine.high %v2529, %v2529
    %v2534 = vcombine.low %v2465, %v2479
    %v2535 = vcombine.high %v2465, %v2479
    %v2537 = vunpack.c.l.s4 1966171168
    %v2538 = vunpack.c.0.s8 %v2537
    %v2539 = vlaneseq
    %v2540 = vshrl.u32 %v2539, 7
    %v2541 = vsub.s32 %v2538, %v2540
    %v2542 = vrot.slane %v2534, %v2541
    %v2544 = vunpack.c.l.s4 1966171168
    %v2545 = vunpack.c.0.s8 %v2544
    %v2546 = vlaneseq
    %v2547 = vshrl.u32 %v2546, 7
    %v2548 = vsub.s32 %v2545, %v2547
    %v2549 = vrot.slane %v2535, %v2548
    %v2550 = vcombine.high %v2542, %v2542
    %v2551 = vcombine.high %v2549, %v2549
    %v2553 = vunpack.c.l.s4 1966171168
    %v2554 = vunpack.c.0.s8 %v2553
    %v2555 = vlaneseq
    %v2556 = vshrl.u32 %v2555, 7
    %v2557 = vsub.s32 %v2554, %v2556
    %v2558 = vrot.slane %v2542, %v2557
    %v2560 = vunpack.c.l.s4 1966171168
    %v2561 = vunpack.c.0.s8 %v2560
    %v2562 = vlaneseq
    %v2563 = vshrl.u32 %v2562, 7
    %v2564 = vsub.s32 %v2561, %v2563
    %v2565 = vrot.slane %v2549, %v2564
    %v2567 = vunpack.c.l.s4 1966171168
    %v2568 = vunpack.c.0.s8 %v2567
    %v2569 = vlaneseq
    %v2570 = vshrl.u32 %v2569, 7
    %v2571 = vsub.s32 %v2568, %v2570
    %v2572 = vrot.slane %v2550, %v2571
    %v2574 = vunpack.c.l.s4 1966171168
    %v2575 = vunpack.c.0.s8 %v2574
    %v2576 = vlaneseq
    %v2577 = vshrl.u32 %v2576, 7
    %v2578 = vsub.s32 %v2575, %v2577
    %v2579 = vrot.slane %v2551, %v2578
    %v2580 = vcombine.high %v2558, %v2558
    %v2581 = vcombine.high %v2565, %v2565
    %v2582 = vcombine.high %v2572, %v2572
    %v2583 = vcombine.high %v2579, %v2579
    %v2600 = vpack.c.bf16 %v2508, %v2508
    %v2601 = vpack.c.bf16 %v2522, %v2522
    %v2602 = vpack.c.bf16 %v2530, %v2530
    %v2603 = vpack.c.bf16 %v2532, %v2532
    %v2604 = vpack.c.bf16 %v2515, %v2515
    %v2605 = vpack.c.bf16 %v2529, %v2529
    %v2606 = vpack.c.bf16 %v2531, %v2531
    %v2607 = vpack.c.bf16 %v2533, %v2533
    %v2608 = vpack.c.bf16 %v2558, %v2558
    %v2609 = vpack.c.bf16 %v2572, %v2572
    %v2610 = vpack.c.bf16 %v2580, %v2580
    %v2611 = vpack.c.bf16 %v2582, %v2582
    %v2612 = vpack.c.bf16 %v2565, %v2565
    %v2613 = vpack.c.bf16 %v2579, %v2579
    %v2614 = vpack.c.bf16 %v2581, %v2581
    %v2615 = vpack.c.bf16 %v2583, %v2583
    %v2616 = vld [vmem:[#allocation6] sm:$0xf]
    %v2617 = vld [vmem:[#allocation6 + $0x4] sm:$0xf]
    %v2618 = vld [vmem:[#allocation6 + $0x8] sm:$0xf]
    %v2619 = vld [vmem:[#allocation6 + $0xc] sm:$0xf]
    %v2620 = vld [vmem:[#allocation6 + $0x10] sm:$0xf]
    %v2621 = vld [vmem:[#allocation6 + $0x14] sm:$0xf]
    %v2622 = vld [vmem:[#allocation6 + $0x18] sm:$0xf]
    %v2623 = vld [vmem:[#allocation6 + $0x1c] sm:$0xf]
    %v2624 = vld [vmem:[#allocation6 + $0x20] sm:$0xf]
    %v2625 = vld [vmem:[#allocation6 + $0x24] sm:$0xf]
    %v2626 = vld [vmem:[#allocation6 + $0x28] sm:$0xf]
    %v2627 = vld [vmem:[#allocation6 + $0x2c] sm:$0xf]
    %v2628 = vld [vmem:[#allocation6 + $0x30] sm:$0xf]
    %v2629 = vld [vmem:[#allocation6 + $0x34] sm:$0xf]
    %v2630 = vld [vmem:[#allocation6 + $0x38] sm:$0xf]
    %v2631 = vld [vmem:[#allocation6 + $0x3c] sm:$0xf]
    %v2632 = vld [vmem:[#allocation6 + $0x40] sm:$0xf]
    %v2633 = vld [vmem:[#allocation6 + $0x44] sm:$0xf]
    %v2634 = vld [vmem:[#allocation6 + $0x48] sm:$0xf]
    %v2635 = vld [vmem:[#allocation6 + $0x4c] sm:$0xf]
    %v2636 = vld [vmem:[#allocation6 + $0x50] sm:$0xf]
    %v2637 = vld [vmem:[#allocation6 + $0x54] sm:$0xf]
    %v2638 = vld [vmem:[#allocation6 + $0x58] sm:$0xf]
    %v2639 = vld [vmem:[#allocation6 + $0x5c] sm:$0xf]
    %v2640 = vld [vmem:[#allocation6 + $0x60] sm:$0xf]
    %v2641 = vld [vmem:[#allocation6 + $0x64] sm:$0xf]
    %v2642 = vld [vmem:[#allocation6 + $0x68] sm:$0xf]
    %v2643 = vld [vmem:[#allocation6 + $0x6c] sm:$0xf]
    %v2644 = vld [vmem:[#allocation6 + $0x70] sm:$0xf]
    %v2645 = vld [vmem:[#allocation6 + $0x74] sm:$0xf]
    %v2646 = vld [vmem:[#allocation6 + $0x78] sm:$0xf]
    %v2647 = vld [vmem:[#allocation6 + $0x7c] sm:$0xf]
    %v2648 = vld [vmem:[#allocation6 + $0x80] sm:$0xf]
    %v2649 = vld [vmem:[#allocation6 + $0x84] sm:$0xf]
    %v2650 = vld [vmem:[#allocation6 + $0x88] sm:$0xf]
    %v2651 = vld [vmem:[#allocation6 + $0x8c] sm:$0xf]
    %v2652 = vld [vmem:[#allocation6 + $0x90] sm:$0xf]
    %v2653 = vld [vmem:[#allocation6 + $0x94] sm:$0xf]
    %v2654 = vld [vmem:[#allocation6 + $0x98] sm:$0xf]
    %v2655 = vld [vmem:[#allocation6 + $0x9c] sm:$0xf]
    %v2656 = vld [vmem:[#allocation6 + $0xa0] sm:$0xf]
    %v2657 = vld [vmem:[#allocation6 + $0xa4] sm:$0xf]
    %v2658 = vld [vmem:[#allocation6 + $0xa8] sm:$0xf]
    %v2659 = vld [vmem:[#allocation6 + $0xac] sm:$0xf]
    %v2660 = vld [vmem:[#allocation6 + $0xb0] sm:$0xf]
    %v2661 = vld [vmem:[#allocation6 + $0xb4] sm:$0xf]
    %v2662 = vld [vmem:[#allocation6 + $0xb8] sm:$0xf]
    %v2663 = vld [vmem:[#allocation6 + $0xbc] sm:$0xf]
    %v2664 = vld [vmem:[#allocation6 + $0xc0] sm:$0xf]
    %v2665 = vld [vmem:[#allocation6 + $0xc4] sm:$0xf]
    %v2666 = vld [vmem:[#allocation6 + $0xc8] sm:$0xf]
    %v2667 = vld [vmem:[#allocation6 + $0xcc] sm:$0xf]
    %v2668 = vld [vmem:[#allocation6 + $0xd0] sm:$0xf]
    %v2669 = vld [vmem:[#allocation6 + $0xd4] sm:$0xf]
    %v2670 = vld [vmem:[#allocation6 + $0xd8] sm:$0xf]
    %v2671 = vld [vmem:[#allocation6 + $0xdc] sm:$0xf]
    %v2672 = vld [vmem:[#allocation6 + $0xe0] sm:$0xf]
    %v2673 = vld [vmem:[#allocation6 + $0xe4] sm:$0xf]
    %v2674 = vld [vmem:[#allocation6 + $0xe8] sm:$0xf]
    %v2675 = vld [vmem:[#allocation6 + $0xec] sm:$0xf]
    %v2676 = vld [vmem:[#allocation6 + $0xf0] sm:$0xf]
    %v2677 = vld [vmem:[#allocation6 + $0xf4] sm:$0xf]
    %v2678 = vld [vmem:[#allocation6 + $0xf8] sm:$0xf]
    %v2679 = vld [vmem:[#allocation6 + $0xfc] sm:$0xf]
    %v2680 = vld [vmem:[#allocation6 + $0x100] sm:$0xf]
    %v2681 = vld [vmem:[#allocation6 + $0x104] sm:$0xf]
    %v2682 = vld [vmem:[#allocation6 + $0x108] sm:$0xf]
    %v2683 = vld [vmem:[#allocation6 + $0x10c] sm:$0xf]
    %v2684 = vld [vmem:[#allocation6 + $0x110] sm:$0xf]
    %v2685 = vld [vmem:[#allocation6 + $0x114] sm:$0xf]
    %v2686 = vld [vmem:[#allocation6 + $0x118] sm:$0xf]
    %v2687 = vld [vmem:[#allocation6 + $0x11c] sm:$0xf]
    %v2688 = vld [vmem:[#allocation6 + $0x120] sm:$0xf]
    %v2689 = vld [vmem:[#allocation6 + $0x124] sm:$0xf]
    %v2690 = vld [vmem:[#allocation6 + $0x128] sm:$0xf]
    %v2691 = vld [vmem:[#allocation6 + $0x12c] sm:$0xf]
    %v2692 = vld [vmem:[#allocation6 + $0x130] sm:$0xf]
    %v2693 = vld [vmem:[#allocation6 + $0x134] sm:$0xf]
    %v2694 = vld [vmem:[#allocation6 + $0x138] sm:$0xf]
    %v2695 = vld [vmem:[#allocation6 + $0x13c] sm:$0xf]
    %v2696 = vld [vmem:[#allocation6 + $0x140] sm:$0xf]
    %v2697 = vld [vmem:[#allocation6 + $0x144] sm:$0xf]
    %v2698 = vld [vmem:[#allocation6 + $0x148] sm:$0xf]
    %v2699 = vld [vmem:[#allocation6 + $0x14c] sm:$0xf]
    %v2700 = vld [vmem:[#allocation6 + $0x150] sm:$0xf]
    %v2701 = vld [vmem:[#allocation6 + $0x154] sm:$0xf]
    %v2702 = vld [vmem:[#allocation6 + $0x158] sm:$0xf]
    %v2703 = vld [vmem:[#allocation6 + $0x15c] sm:$0xf]
    %v2704 = vld [vmem:[#allocation6 + $0x160] sm:$0xf]
    %v2705 = vld [vmem:[#allocation6 + $0x164] sm:$0xf]
    %v2706 = vld [vmem:[#allocation6 + $0x168] sm:$0xf]
    %v2707 = vld [vmem:[#allocation6 + $0x16c] sm:$0xf]
    %v2708 = vld [vmem:[#allocation6 + $0x170] sm:$0xf]
    %v2709 = vld [vmem:[#allocation6 + $0x174] sm:$0xf]
    %v2710 = vld [vmem:[#allocation6 + $0x178] sm:$0xf]
    %v2711 = vld [vmem:[#allocation6 + $0x17c] sm:$0xf]
    %v2712 = vld [vmem:[#allocation6 + $0x180] sm:$0xf]
    %v2713 = vld [vmem:[#allocation6 + $0x184] sm:$0xf]
    %v2714 = vld [vmem:[#allocation6 + $0x188] sm:$0xf]
    %v2715 = vld [vmem:[#allocation6 + $0x18c] sm:$0xf]
    %v2716 = vld [vmem:[#allocation6 + $0x190] sm:$0xf]
    %v2717 = vld [vmem:[#allocation6 + $0x194] sm:$0xf]
    %v2718 = vld [vmem:[#allocation6 + $0x198] sm:$0xf]
    %v2719 = vld [vmem:[#allocation6 + $0x19c] sm:$0xf]
    %v2720 = vld [vmem:[#allocation6 + $0x1a0] sm:$0xf]
    %v2721 = vld [vmem:[#allocation6 + $0x1a4] sm:$0xf]
    %v2722 = vld [vmem:[#allocation6 + $0x1a8] sm:$0xf]
    %v2723 = vld [vmem:[#allocation6 + $0x1ac] sm:$0xf]
    %v2724 = vld [vmem:[#allocation6 + $0x1b0] sm:$0xf]
    %v2725 = vld [vmem:[#allocation6 + $0x1b4] sm:$0xf]
    %v2726 = vld [vmem:[#allocation6 + $0x1b8] sm:$0xf]
    %v2727 = vld [vmem:[#allocation6 + $0x1bc] sm:$0xf]
    %v2728 = vld [vmem:[#allocation6 + $0x1c0] sm:$0xf]
    %v2729 = vld [vmem:[#allocation6 + $0x1c4] sm:$0xf]
    %v2730 = vld [vmem:[#allocation6 + $0x1c8] sm:$0xf]
    %v2731 = vld [vmem:[#allocation6 + $0x1cc] sm:$0xf]
    %v2732 = vld [vmem:[#allocation6 + $0x1d0] sm:$0xf]
    %v2733 = vld [vmem:[#allocation6 + $0x1d4] sm:$0xf]
    %v2734 = vld [vmem:[#allocation6 + $0x1d8] sm:$0xf]
    %v2735 = vld [vmem:[#allocation6 + $0x1dc] sm:$0xf]
    %v2736 = vld [vmem:[#allocation6 + $0x1e0] sm:$0xf]
    %v2737 = vld [vmem:[#allocation6 + $0x1e4] sm:$0xf]
    %v2738 = vld [vmem:[#allocation6 + $0x1e8] sm:$0xf]
    %v2739 = vld [vmem:[#allocation6 + $0x1ec] sm:$0xf]
    %v2740 = vld [vmem:[#allocation6 + $0x1f0] sm:$0xf]
    %v2741 = vld [vmem:[#allocation6 + $0x1f4] sm:$0xf]
    %v2742 = vld [vmem:[#allocation6 + $0x1f8] sm:$0xf]
    %v2743 = vld [vmem:[#allocation6 + $0x1fc] sm:$0xf]
    %v2744 = vld [vmem:[#allocation6 + $0x200] sm:$0xf]
    %v2745 = vld [vmem:[#allocation6 + $0x204] sm:$0xf]
    %v2746 = vld [vmem:[#allocation6 + $0x208] sm:$0xf]
    %v2747 = vld [vmem:[#allocation6 + $0x20c] sm:$0xf]
    %v2748 = vld [vmem:[#allocation6 + $0x210] sm:$0xf]
    %v2749 = vld [vmem:[#allocation6 + $0x214] sm:$0xf]
    %v2750 = vld [vmem:[#allocation6 + $0x218] sm:$0xf]
    %v2751 = vld [vmem:[#allocation6 + $0x21c] sm:$0xf]
    %v2752 = vld [vmem:[#allocation6 + $0x220] sm:$0xf]
    %v2753 = vld [vmem:[#allocation6 + $0x224] sm:$0xf]
    %v2754 = vld [vmem:[#allocation6 + $0x228] sm:$0xf]
    %v2755 = vld [vmem:[#allocation6 + $0x22c] sm:$0xf]
    %v2756 = vld [vmem:[#allocation6 + $0x230] sm:$0xf]
    %v2757 = vld [vmem:[#allocation6 + $0x234] sm:$0xf]
    %v2758 = vld [vmem:[#allocation6 + $0x238] sm:$0xf]
    %v2759 = vld [vmem:[#allocation6 + $0x23c] sm:$0xf]
    %v2760 = vld [vmem:[#allocation6 + $0x240] sm:$0xf]
    %v2761 = vld [vmem:[#allocation6 + $0x244] sm:$0xf]
    %v2762 = vld [vmem:[#allocation6 + $0x248] sm:$0xf]
    %v2763 = vld [vmem:[#allocation6 + $0x24c] sm:$0xf]
    %v2764 = vld [vmem:[#allocation6 + $0x250] sm:$0xf]
    %v2765 = vld [vmem:[#allocation6 + $0x254] sm:$0xf]
    %v2766 = vld [vmem:[#allocation6 + $0x258] sm:$0xf]
    %v2767 = vld [vmem:[#allocation6 + $0x25c] sm:$0xf]
    %v2768 = vld [vmem:[#allocation6 + $0x260] sm:$0xf]
    %v2769 = vld [vmem:[#allocation6 + $0x264] sm:$0xf]
    %v2770 = vld [vmem:[#allocation6 + $0x268] sm:$0xf]
    %v2771 = vld [vmem:[#allocation6 + $0x26c] sm:$0xf]
    %v2772 = vld [vmem:[#allocation6 + $0x270] sm:$0xf]
    %v2773 = vld [vmem:[#allocation6 + $0x274] sm:$0xf]
    %v2774 = vld [vmem:[#allocation6 + $0x278] sm:$0xf]
    %v2775 = vld [vmem:[#allocation6 + $0x27c] sm:$0xf]
    %v2776 = vld [vmem:[#allocation6 + $0x280] sm:$0xf]
    %v2777 = vld [vmem:[#allocation6 + $0x284] sm:$0xf]
    %v2778 = vld [vmem:[#allocation6 + $0x288] sm:$0xf]
    %v2779 = vld [vmem:[#allocation6 + $0x28c] sm:$0xf]
    %v2780 = vld [vmem:[#allocation6 + $0x290] sm:$0xf]
    %v2781 = vld [vmem:[#allocation6 + $0x294] sm:$0xf]
    %v2782 = vld [vmem:[#allocation6 + $0x298] sm:$0xf]
    %v2783 = vld [vmem:[#allocation6 + $0x29c] sm:$0xf]
    %v2784 = vld [vmem:[#allocation6 + $0x2a0] sm:$0xf]
    %v2785 = vld [vmem:[#allocation6 + $0x2a4] sm:$0xf]
    %v2786 = vld [vmem:[#allocation6 + $0x2a8] sm:$0xf]
    %v2787 = vld [vmem:[#allocation6 + $0x2ac] sm:$0xf]
    %v2788 = vld [vmem:[#allocation6 + $0x2b0] sm:$0xf]
    %v2789 = vld [vmem:[#allocation6 + $0x2b4] sm:$0xf]
    %v2790 = vld [vmem:[#allocation6 + $0x2b8] sm:$0xf]
    %v2791 = vld [vmem:[#allocation6 + $0x2bc] sm:$0xf]
    %v2792 = vld [vmem:[#allocation6 + $0x2c0] sm:$0xf]
    %v2793 = vld [vmem:[#allocation6 + $0x2c4] sm:$0xf]
    %v2794 = vld [vmem:[#allocation6 + $0x2c8] sm:$0xf]
    %v2795 = vld [vmem:[#allocation6 + $0x2cc] sm:$0xf]
    %v2796 = vld [vmem:[#allocation6 + $0x2d0] sm:$0xf]
    %v2797 = vld [vmem:[#allocation6 + $0x2d4] sm:$0xf]
    %v2798 = vld [vmem:[#allocation6 + $0x2d8] sm:$0xf]
    %v2799 = vld [vmem:[#allocation6 + $0x2dc] sm:$0xf]
    %v2800 = vld [vmem:[#allocation6 + $0x2e0] sm:$0xf]
    %v2801 = vld [vmem:[#allocation6 + $0x2e4] sm:$0xf]
    %v2802 = vld [vmem:[#allocation6 + $0x2e8] sm:$0xf]
    %v2803 = vld [vmem:[#allocation6 + $0x2ec] sm:$0xf]
    %v2804 = vld [vmem:[#allocation6 + $0x2f0] sm:$0xf]
    %v2805 = vld [vmem:[#allocation6 + $0x2f4] sm:$0xf]
    %v2806 = vld [vmem:[#allocation6 + $0x2f8] sm:$0xf]
    %v2807 = vld [vmem:[#allocation6 + $0x2fc] sm:$0xf]
    %v2808 = vld [vmem:[#allocation6 + $0x300] sm:$0xf]
    %v2809 = vld [vmem:[#allocation6 + $0x304] sm:$0xf]
    %v2810 = vld [vmem:[#allocation6 + $0x308] sm:$0xf]
    %v2811 = vld [vmem:[#allocation6 + $0x30c] sm:$0xf]
    %v2812 = vld [vmem:[#allocation6 + $0x310] sm:$0xf]
    %v2813 = vld [vmem:[#allocation6 + $0x314] sm:$0xf]
    %v2814 = vld [vmem:[#allocation6 + $0x318] sm:$0xf]
    %v2815 = vld [vmem:[#allocation6 + $0x31c] sm:$0xf]
    %v2816 = vld [vmem:[#allocation6 + $0x320] sm:$0xf]
    %v2817 = vld [vmem:[#allocation6 + $0x324] sm:$0xf]
    %v2818 = vld [vmem:[#allocation6 + $0x328] sm:$0xf]
    %v2819 = vld [vmem:[#allocation6 + $0x32c] sm:$0xf]
    %v2820 = vld [vmem:[#allocation6 + $0x330] sm:$0xf]
    %v2821 = vld [vmem:[#allocation6 + $0x334] sm:$0xf]
    %v2822 = vld [vmem:[#allocation6 + $0x338] sm:$0xf]
    %v2823 = vld [vmem:[#allocation6 + $0x33c] sm:$0xf]
    %v2824 = vld [vmem:[#allocation6 + $0x340] sm:$0xf]
    %v2825 = vld [vmem:[#allocation6 + $0x344] sm:$0xf]
    %v2826 = vld [vmem:[#allocation6 + $0x348] sm:$0xf]
    %v2827 = vld [vmem:[#allocation6 + $0x34c] sm:$0xf]
    %v2828 = vld [vmem:[#allocation6 + $0x350] sm:$0xf]
    %v2829 = vld [vmem:[#allocation6 + $0x354] sm:$0xf]
    %v2830 = vld [vmem:[#allocation6 + $0x358] sm:$0xf]
    %v2831 = vld [vmem:[#allocation6 + $0x35c] sm:$0xf]
    %v2832 = vld [vmem:[#allocation6 + $0x360] sm:$0xf]
    %v2833 = vld [vmem:[#allocation6 + $0x364] sm:$0xf]
    %v2834 = vld [vmem:[#allocation6 + $0x368] sm:$0xf]
    %v2835 = vld [vmem:[#allocation6 + $0x36c] sm:$0xf]
    %v2836 = vld [vmem:[#allocation6 + $0x370] sm:$0xf]
    %v2837 = vld [vmem:[#allocation6 + $0x374] sm:$0xf]
    %v2838 = vld [vmem:[#allocation6 + $0x378] sm:$0xf]
    %v2839 = vld [vmem:[#allocation6 + $0x37c] sm:$0xf]
    %v2840 = vld [vmem:[#allocation6 + $0x380] sm:$0xf]
    %v2841 = vld [vmem:[#allocation6 + $0x384] sm:$0xf]
    %v2842 = vld [vmem:[#allocation6 + $0x388] sm:$0xf]
    %v2843 = vld [vmem:[#allocation6 + $0x38c] sm:$0xf]
    %v2844 = vld [vmem:[#allocation6 + $0x390] sm:$0xf]
    %v2845 = vld [vmem:[#allocation6 + $0x394] sm:$0xf]
    %v2846 = vld [vmem:[#allocation6 + $0x398] sm:$0xf]
    %v2847 = vld [vmem:[#allocation6 + $0x39c] sm:$0xf]
    %v2848 = vld [vmem:[#allocation6 + $0x3a0] sm:$0xf]
    %v2849 = vld [vmem:[#allocation6 + $0x3a4] sm:$0xf]
    %v2850 = vld [vmem:[#allocation6 + $0x3a8] sm:$0xf]
    %v2851 = vld [vmem:[#allocation6 + $0x3ac] sm:$0xf]
    %v2852 = vld [vmem:[#allocation6 + $0x3b0] sm:$0xf]
    %v2853 = vld [vmem:[#allocation6 + $0x3b4] sm:$0xf]
    %v2854 = vld [vmem:[#allocation6 + $0x3b8] sm:$0xf]
    %v2855 = vld [vmem:[#allocation6 + $0x3bc] sm:$0xf]
    %v2856 = vld [vmem:[#allocation6 + $0x3c0] sm:$0xf]
    %v2857 = vld [vmem:[#allocation6 + $0x3c4] sm:$0xf]
    %v2858 = vld [vmem:[#allocation6 + $0x3c8] sm:$0xf]
    %v2859 = vld [vmem:[#allocation6 + $0x3cc] sm:$0xf]
    %v2860 = vld [vmem:[#allocation6 + $0x3d0] sm:$0xf]
    %v2861 = vld [vmem:[#allocation6 + $0x3d4] sm:$0xf]
    %v2862 = vld [vmem:[#allocation6 + $0x3d8] sm:$0xf]
    %v2863 = vld [vmem:[#allocation6 + $0x3dc] sm:$0xf]
    %v2864 = vld [vmem:[#allocation6 + $0x3e0] sm:$0xf]
    %v2865 = vld [vmem:[#allocation6 + $0x3e4] sm:$0xf]
    %v2866 = vld [vmem:[#allocation6 + $0x3e8] sm:$0xf]
    %v2867 = vld [vmem:[#allocation6 + $0x3ec] sm:$0xf]
    %v2868 = vld [vmem:[#allocation6 + $0x3f0] sm:$0xf]
    %v2869 = vld [vmem:[#allocation6 + $0x3f4] sm:$0xf]
    %v2870 = vld [vmem:[#allocation6 + $0x3f8] sm:$0xf]
    %v2871 = vld [vmem:[#allocation6 + $0x3fc] sm:$0xf]
    %v2872 = vld [vmem:[%s1] sm:$0x3]
    %v2873 = vpack.c.bf16 %v2872, %v2872
    %v2874 = vld [vmem:[%s7] sm:$0xf]
    %vm2875 = vcmask 64512
    %v2877 = vsel %vm2875, %v2873, 0
    %vm2879 = vcmask 1043456
    %v2881 = vsel %vm2879, %v2874, 0
    %2883 = vmatprep.subr.bf16.mxu0 0
    %2884 = vmatpush1.bf16.msra.mxu0 %v2881
    %2885 = vmatprep.subr.bf16.mxu0 0
    %2886 = vmatpush1.bf16.msra.mxu0 0
    %2887 = vmatprep.subr.bf16.mxu0 0
    %2888 = vmatpush1.bf16.msra.mxu0 0
    %2889 = vmatprep.subr.bf16.mxu0 0
    %2890 = vmatpush1.bf16.msra.mxu0 0
    %2891 = vmatprep.subr.bf16.mxu0 0
    %2892 = vmatpush1.bf16.msra.mxu0 0
    %2893 = vmatprep.subr.bf16.mxu0 0
    %2894 = vmatpush1.bf16.msra.mxu0 0
    %2895 = vmatprep.subr.bf16.mxu0 0
    %2896 = vmatpush1.bf16.msra.mxu0 0
    %2897 = vmatprep.subr.bf16.mxu0 0
    %2898 = vmatpush1.bf16.msra.mxu0 0
    %2899 = vmatprep.subr.bf16.mxu0 0
    %2900 = vmatpush1.bf16.msra.mxu0 0
    %2901 = vmatprep.subr.bf16.mxu0 0
    %2902 = vmatpush1.bf16.msra.mxu0 0
    %2903 = vmatprep.subr.bf16.mxu0 0
    %2904 = vmatpush1.bf16.msra.mxu0 0
    %2905 = vmatprep.subr.bf16.mxu0 0
    %2906 = vmatpush1.bf16.msra.mxu0 0
    %2907 = vmatprep.subr.bf16.mxu0 0
    %2908 = vmatpush1.bf16.msra.mxu0 0
    %2909 = vmatprep.subr.bf16.mxu0 0
    %2910 = vmatpush1.bf16.msra.mxu0 0
    %2911 = vmatprep.subr.bf16.mxu0 0
    %2912 = vmatpush1.bf16.msra.mxu0 0
    %2913 = vmatprep.subr.bf16.mxu0 0
    %2914 = vmatpush1.bf16.msra.mxu0 0
    %2915 = vmatprep.mubr.bf16.mxu0 0
    %2916 = vmatmul.mubr.bf16.gmra.mrb[0].mxu0 %v2877
    %v2917 = vpop.f32.mrb[0].mxu0
    %v2918 = vadd.f32 0.0, %v2917
    %v2919 = vpop.f32.mrb[0].mxu0
    %v2920 = vpop.f32.mrb[0].mxu0
    %v2921 = vpop.f32.mrb[0].mxu0
    %2922 = vdwg.mxu0
    %v3179 = vunpack.c.l.b16 %v2616
    %v3180 = vunpack.c.l.b16 %v2617
    %v3181 = vunpack.c.l.b16 %v2618
    %v3182 = vunpack.c.l.b16 %v2619
    %v3183 = vunpack.c.l.b16 %v2620
    %v3184 = vunpack.c.l.b16 %v2621
    %v3185 = vunpack.c.l.b16 %v2622
    %v3186 = vunpack.c.l.b16 %v2623
    %v3187 = vunpack.c.l.b16 %v2624
    %v3188 = vunpack.c.l.b16 %v2625
    %v3189 = vunpack.c.l.b16 %v2626
    %v3190 = vunpack.c.l.b16 %v2627
    %v3191 = vunpack.c.l.b16 %v2628
    %v3192 = vunpack.c.l.b16 %v2629
    %v3193 = vunpack.c.l.b16 %v2630
    %v3194 = vunpack.c.l.b16 %v2631
    %v3195 = vunpack.c.l.b16 %v2632
    %v3196 = vunpack.c.l.b16 %v2633
    %v3197 = vunpack.c.l.b16 %v2634
    %v3198 = vunpack.c.l.b16 %v2635
    %v3199 = vunpack.c.l.b16 %v2636
    %v3200 = vunpack.c.l.b16 %v2637
    %v3201 = vunpack.c.l.b16 %v2638
    %v3202 = vunpack.c.l.b16 %v2639
    %v3203 = vunpack.c.l.b16 %v2640
    %v3204 = vunpack.c.l.b16 %v2641
    %v3205 = vunpack.c.l.b16 %v2642
    %v3206 = vunpack.c.l.b16 %v2643
    %v3207 = vunpack.c.l.b16 %v2644
    %v3208 = vunpack.c.l.b16 %v2645
    %v3209 = vunpack.c.l.b16 %v2646
    %v3210 = vunpack.c.l.b16 %v2647
    %v3211 = vunpack.c.l.b16 %v2648
    %v3212 = vunpack.c.l.b16 %v2649
    %v3213 = vunpack.c.l.b16 %v2650
    %v3214 = vunpack.c.l.b16 %v2651
    %v3215 = vunpack.c.l.b16 %v2652
    %v3216 = vunpack.c.l.b16 %v2653
    %v3217 = vunpack.c.l.b16 %v2654
    %v3218 = vunpack.c.l.b16 %v2655
    %v3219 = vunpack.c.l.b16 %v2656
    %v3220 = vunpack.c.l.b16 %v2657
    %v3221 = vunpack.c.l.b16 %v2658
    %v3222 = vunpack.c.l.b16 %v2659
    %v3223 = vunpack.c.l.b16 %v2660
    %v3224 = vunpack.c.l.b16 %v2661
    %v3225 = vunpack.c.l.b16 %v2662
    %v3226 = vunpack.c.l.b16 %v2663
    %v3227 = vunpack.c.l.b16 %v2664
    %v3228 = vunpack.c.l.b16 %v2665
    %v3229 = vunpack.c.l.b16 %v2666
    %v3230 = vunpack.c.l.b16 %v2667
    %v3231 = vunpack.c.l.b16 %v2668
    %v3232 = vunpack.c.l.b16 %v2669
    %v3233 = vunpack.c.l.b16 %v2670
    %v3234 = vunpack.c.l.b16 %v2671
    %v3235 = vunpack.c.l.b16 %v2672
    %v3236 = vunpack.c.l.b16 %v2673
    %v3237 = vunpack.c.l.b16 %v2674
    %v3238 = vunpack.c.l.b16 %v2675
    %v3239 = vunpack.c.l.b16 %v2676
    %v3240 = vunpack.c.l.b16 %v2677
    %v3241 = vunpack.c.l.b16 %v2678
    %v3242 = vunpack.c.l.b16 %v2679
    %v3243 = vunpack.c.l.b16 %v2680
    %v3244 = vunpack.c.l.b16 %v2681
    %v3245 = vunpack.c.l.b16 %v2682
    %v3246 = vunpack.c.l.b16 %v2683
    %v3247 = vunpack.c.l.b16 %v2684
    %v3248 = vunpack.c.l.b16 %v2685
    %v3249 = vunpack.c.l.b16 %v2686
    %v3250 = vunpack.c.l.b16 %v2687
    %v3251 = vunpack.c.l.b16 %v2688
    %v3252 = vunpack.c.l.b16 %v2689
    %v3253 = vunpack.c.l.b16 %v2690
    %v3254 = vunpack.c.l.b16 %v2691
    %v3255 = vunpack.c.l.b16 %v2692
    %v3256 = vunpack.c.l.b16 %v2693
    %v3257 = vunpack.c.l.b16 %v2694
    %v3258 = vunpack.c.l.b16 %v2695
    %v3259 = vunpack.c.l.b16 %v2696
    %v3260 = vunpack.c.l.b16 %v2697
    %v3261 = vunpack.c.l.b16 %v2698
    %v3262 = vunpack.c.l.b16 %v2699
    %v3263 = vunpack.c.l.b16 %v2700
    %v3264 = vunpack.c.l.b16 %v2701
    %v3265 = vunpack.c.l.b16 %v2702
    %v3266 = vunpack.c.l.b16 %v2703
    %v3267 = vunpack.c.l.b16 %v2704
    %v3268 = vunpack.c.l.b16 %v2705
    %v3269 = vunpack.c.l.b16 %v2706
    %v3270 = vunpack.c.l.b16 %v2707
    %v3271 = vunpack.c.l.b16 %v2708
    %v3272 = vunpack.c.l.b16 %v2709
    %v3273 = vunpack.c.l.b16 %v2710
    %v3274 = vunpack.c.l.b16 %v2711
    %v3275 = vunpack.c.l.b16 %v2712
    %v3276 = vunpack.c.l.b16 %v2713
    %v3277 = vunpack.c.l.b16 %v2714
    %v3278 = vunpack.c.l.b16 %v2715
    %v3279 = vunpack.c.l.b16 %v2716
    %v3280 = vunpack.c.l.b16 %v2717
    %v3281 = vunpack.c.l.b16 %v2718
    %v3282 = vunpack.c.l.b16 %v2719
    %v3283 = vunpack.c.l.b16 %v2720
    %v3284 = vunpack.c.l.b16 %v2721
    %v3285 = vunpack.c.l.b16 %v2722
    %v3286 = vunpack.c.l.b16 %v2723
    %v3287 = vunpack.c.l.b16 %v2724
    %v3288 = vunpack.c.l.b16 %v2725
    %v3289 = vunpack.c.l.b16 %v2726
    %v3290 = vunpack.c.l.b16 %v2727
    %v3291 = vunpack.c.l.b16 %v2728
    %v3292 = vunpack.c.l.b16 %v2729
    %v3293 = vunpack.c.l.b16 %v2730
    %v3294 = vunpack.c.l.b16 %v2731
    %v3295 = vunpack.c.l.b16 %v2732
    %v3296 = vunpack.c.l.b16 %v2733
    %v3297 = vunpack.c.l.b16 %v2734
    %v3298 = vunpack.c.l.b16 %v2735
    %v3299 = vunpack.c.l.b16 %v2736
    %v3300 = vunpack.c.l.b16 %v2737
    %v3301 = vunpack.c.l.b16 %v2738
    %v3302 = vunpack.c.l.b16 %v2739
    %v3303 = vunpack.c.l.b16 %v2740
    %v3304 = vunpack.c.l.b16 %v2741
    %v3305 = vunpack.c.l.b16 %v2742
    %v3306 = vunpack.c.l.b16 %v2743
    %v3307 = vunpack.c.l.b16 %v2744
    %v3308 = vunpack.c.l.b16 %v2745
    %v3309 = vunpack.c.l.b16 %v2746
    %v3310 = vunpack.c.l.b16 %v2747
    %v3311 = vunpack.c.l.b16 %v2748
    %v3312 = vunpack.c.l.b16 %v2749
    %v3313 = vunpack.c.l.b16 %v2750
    %v3314 = vunpack.c.l.b16 %v2751
    %v3315 = vunpack.c.l.b16 %v2752
    %v3316 = vunpack.c.l.b16 %v2753
    %v3317 = vunpack.c.l.b16 %v2754
    %v3318 = vunpack.c.l.b16 %v2755
    %v3319 = vunpack.c.l.b16 %v2756
    %v3320 = vunpack.c.l.b16 %v2757
    %v3321 = vunpack.c.l.b16 %v2758
    %v3322 = vunpack.c.l.b16 %v2759
    %v3323 = vunpack.c.l.b16 %v2760
    %v3324 = vunpack.c.l.b16 %v2761
    %v3325 = vunpack.c.l.b16 %v2762
    %v3326 = vunpack.c.l.b16 %v2763
    %v3327 = vunpack.c.l.b16 %v2764
    %v3328 = vunpack.c.l.b16 %v2765
    %v3329 = vunpack.c.l.b16 %v2766
    %v3330 = vunpack.c.l.b16 %v2767
    %v3331 = vunpack.c.l.b16 %v2768
    %v3332 = vunpack.c.l.b16 %v2769
    %v3333 = vunpack.c.l.b16 %v2770
    %v3334 = vunpack.c.l.b16 %v2771
    %v3335 = vunpack.c.l.b16 %v2772
    %v3336 = vunpack.c.l.b16 %v2773
    %v3337 = vunpack.c.l.b16 %v2774
    %v3338 = vunpack.c.l.b16 %v2775
    %v3339 = vunpack.c.l.b16 %v2776
    %v3340 = vunpack.c.l.b16 %v2777
    %v3341 = vunpack.c.l.b16 %v2778
    %v3342 = vunpack.c.l.b16 %v2779
    %v3343 = vunpack.c.l.b16 %v2780
    %v3344 = vunpack.c.l.b16 %v2781
    %v3345 = vunpack.c.l.b16 %v2782
    %v3346 = vunpack.c.l.b16 %v2783
    %v3347 = vunpack.c.l.b16 %v2784
    %v3348 = vunpack.c.l.b16 %v2785
    %v3349 = vunpack.c.l.b16 %v2786
    %v3350 = vunpack.c.l.b16 %v2787
    %v3351 = vunpack.c.l.b16 %v2788
    %v3352 = vunpack.c.l.b16 %v2789
    %v3353 = vunpack.c.l.b16 %v2790
    %v3354 = vunpack.c.l.b16 %v2791
    %v3355 = vunpack.c.l.b16 %v2792
    %v3356 = vunpack.c.l.b16 %v2793
    %v3357 = vunpack.c.l.b16 %v2794
    %v3358 = vunpack.c.l.b16 %v2795
    %v3359 = vunpack.c.l.b16 %v2796
    %v3360 = vunpack.c.l.b16 %v2797
    %v3361 = vunpack.c.l.b16 %v2798
    %v3362 = vunpack.c.l.b16 %v2799
    %v3363 = vunpack.c.l.b16 %v2800
    %v3364 = vunpack.c.l.b16 %v2801
    %v3365 = vunpack.c.l.b16 %v2802
    %v3366 = vunpack.c.l.b16 %v2803
    %v3367 = vunpack.c.l.b16 %v2804
    %v3368 = vunpack.c.l.b16 %v2805
    %v3369 = vunpack.c.l.b16 %v2806
    %v3370 = vunpack.c.l.b16 %v2807
    %v3371 = vunpack.c.l.b16 %v2808
    %v3372 = vunpack.c.l.b16 %v2809
    %v3373 = vunpack.c.l.b16 %v2810
    %v3374 = vunpack.c.l.b16 %v2811
    %v3375 = vunpack.c.l.b16 %v2812
    %v3376 = vunpack.c.l.b16 %v2813
    %v3377 = vunpack.c.l.b16 %v2814
    %v3378 = vunpack.c.l.b16 %v2815
    %v3379 = vunpack.c.l.b16 %v2816
    %v3380 = vunpack.c.l.b16 %v2817
    %v3381 = vunpack.c.l.b16 %v2818
    %v3382 = vunpack.c.l.b16 %v2819
    %v3383 = vunpack.c.l.b16 %v2820
    %v3384 = vunpack.c.l.b16 %v2821
    %v3385 = vunpack.c.l.b16 %v2822
    %v3386 = vunpack.c.l.b16 %v2823
    %v3387 = vunpack.c.l.b16 %v2824
    %v3388 = vunpack.c.l.b16 %v2825
    %v3389 = vunpack.c.l.b16 %v2826
    %v3390 = vunpack.c.l.b16 %v2827
    %v3391 = vunpack.c.l.b16 %v2828
    %v3392 = vunpack.c.l.b16 %v2829
    %v3393 = vunpack.c.l.b16 %v2830
    %v3394 = vunpack.c.l.b16 %v2831
    %v3395 = vunpack.c.l.b16 %v2832
    %v3396 = vunpack.c.l.b16 %v2833
    %v3397 = vunpack.c.l.b16 %v2834
    %v3398 = vunpack.c.l.b16 %v2835
    %v3399 = vunpack.c.l.b16 %v2836
    %v3400 = vunpack.c.l.b16 %v2837
    %v3401 = vunpack.c.l.b16 %v2838
    %v3402 = vunpack.c.l.b16 %v2839
    %v3403 = vunpack.c.l.b16 %v2840
    %v3404 = vunpack.c.l.b16 %v2841
    %v3405 = vunpack.c.l.b16 %v2842
    %v3406 = vunpack.c.l.b16 %v2843
    %v3407 = vunpack.c.l.b16 %v2844
    %v3408 = vunpack.c.l.b16 %v2845
    %v3409 = vunpack.c.l.b16 %v2846
    %v3410 = vunpack.c.l.b16 %v2847
    %v3411 = vunpack.c.l.b16 %v2848
    %v3412 = vunpack.c.l.b16 %v2849
    %v3413 = vunpack.c.l.b16 %v2850
    %v3414 = vunpack.c.l.b16 %v2851
    %v3415 = vunpack.c.l.b16 %v2852
    %v3416 = vunpack.c.l.b16 %v2853
    %v3417 = vunpack.c.l.b16 %v2854
    %v3418 = vunpack.c.l.b16 %v2855
    %v3419 = vunpack.c.l.b16 %v2856
    %v3420 = vunpack.c.l.b16 %v2857
    %v3421 = vunpack.c.l.b16 %v2858
    %v3422 = vunpack.c.l.b16 %v2859
    %v3423 = vunpack.c.l.b16 %v2860
    %v3424 = vunpack.c.l.b16 %v2861
    %v3425 = vunpack.c.l.b16 %v2862
    %v3426 = vunpack.c.l.b16 %v2863
    %v3427 = vunpack.c.l.b16 %v2864
    %v3428 = vunpack.c.l.b16 %v2865
    %v3429 = vunpack.c.l.b16 %v2866
    %v3430 = vunpack.c.l.b16 %v2867
    %v3431 = vunpack.c.l.b16 %v2868
    %v3432 = vunpack.c.l.b16 %v2869
    %v3433 = vunpack.c.l.b16 %v2870
    %v3434 = vunpack.c.l.b16 %v2871
    %v3435 = vpack.c.b16 %v3180, %v3179
    %v3436 = vpack.c.b16 %v3182, %v3181
    %v3437 = vpack.c.b16 %v3184, %v3183
    %v3438 = vpack.c.b16 %v3186, %v3185
    %v3439 = vpack.c.b16 %v3188, %v3187
    %v3440 = vpack.c.b16 %v3190, %v3189
    %v3441 = vpack.c.b16 %v3192, %v3191
    %v3442 = vpack.c.b16 %v3194, %v3193
    %v3443 = vpack.c.b16 %v3196, %v3195
    %v3444 = vpack.c.b16 %v3198, %v3197
    %v3445 = vpack.c.b16 %v3200, %v3199
    %v3446 = vpack.c.b16 %v3202, %v3201
    %v3447 = vpack.c.b16 %v3204, %v3203
    %v3448 = vpack.c.b16 %v3206, %v3205
    %v3449 = vpack.c.b16 %v3208, %v3207
    %v3450 = vpack.c.b16 %v3210, %v3209
    %v3451 = vpack.c.b16 %v3212, %v3211
    %v3452 = vpack.c.b16 %v3214, %v3213
    %v3453 = vpack.c.b16 %v3216, %v3215
    %v3454 = vpack.c.b16 %v3218, %v3217
    %v3455 = vpack.c.b16 %v3220, %v3219
    %v3456 = vpack.c.b16 %v3222, %v3221
    %v3457 = vpack.c.b16 %v3224, %v3223
    %v3458 = vpack.c.b16 %v3226, %v3225
    %v3459 = vpack.c.b16 %v3228, %v3227
    %v3460 = vpack.c.b16 %v3230, %v3229
    %v3461 = vpack.c.b16 %v3232, %v3231
    %v3462 = vpack.c.b16 %v3234, %v3233
    %v3463 = vpack.c.b16 %v3236, %v3235
    %v3464 = vpack.c.b16 %v3238, %v3237
    %v3465 = vpack.c.b16 %v3240, %v3239
    %v3466 = vpack.c.b16 %v3242, %v3241
    %v3467 = vpack.c.b16 %v3244, %v3243
    %v3468 = vpack.c.b16 %v3246, %v3245
    %v3469 = vpack.c.b16 %v3248, %v3247
    %v3470 = vpack.c.b16 %v3250, %v3249
    %v3471 = vpack.c.b16 %v3252, %v3251
    %v3472 = vpack.c.b16 %v3254, %v3253
    %v3473 = vpack.c.b16 %v3256, %v3255
    %v3474 = vpack.c.b16 %v3258, %v3257
    %v3475 = vpack.c.b16 %v3260, %v3259
    %v3476 = vpack.c.b16 %v3262, %v3261
    %v3477 = vpack.c.b16 %v3264, %v3263
    %v3478 = vpack.c.b16 %v3266, %v3265
    %v3479 = vpack.c.b16 %v3268, %v3267
    %v3480 = vpack.c.b16 %v3270, %v3269
    %v3481 = vpack.c.b16 %v3272, %v3271
    %v3482 = vpack.c.b16 %v3274, %v3273
    %v3483 = vpack.c.b16 %v3276, %v3275
    %v3484 = vpack.c.b16 %v3278, %v3277
    %v3485 = vpack.c.b16 %v3280, %v3279
    %v3486 = vpack.c.b16 %v3282, %v3281
    %v3487 = vpack.c.b16 %v3284, %v3283
    %v3488 = vpack.c.b16 %v3286, %v3285
    %v3489 = vpack.c.b16 %v3288, %v3287
    %v3490 = vpack.c.b16 %v3290, %v3289
    %v3491 = vpack.c.b16 %v3292, %v3291
    %v3492 = vpack.c.b16 %v3294, %v3293
    %v3493 = vpack.c.b16 %v3296, %v3295
    %v3494 = vpack.c.b16 %v3298, %v3297
    %v3495 = vpack.c.b16 %v3300, %v3299
    %v3496 = vpack.c.b16 %v3302, %v3301
    %v3497 = vpack.c.b16 %v3304, %v3303
    %v3498 = vpack.c.b16 %v3306, %v3305
    %v3499 = vpack.c.b16 %v3308, %v3307
    %v3500 = vpack.c.b16 %v3310, %v3309
    %v3501 = vpack.c.b16 %v3312, %v3311
    %v3502 = vpack.c.b16 %v3314, %v3313
    %v3503 = vpack.c.b16 %v3316, %v3315
    %v3504 = vpack.c.b16 %v3318, %v3317
    %v3505 = vpack.c.b16 %v3320, %v3319
    %v3506 = vpack.c.b16 %v3322, %v3321
    %v3507 = vpack.c.b16 %v3324, %v3323
    %v3508 = vpack.c.b16 %v3326, %v3325
    %v3509 = vpack.c.b16 %v3328, %v3327
    %v3510 = vpack.c.b16 %v3330, %v3329
    %v3511 = vpack.c.b16 %v3332, %v3331
    %v3512 = vpack.c.b16 %v3334, %v3333
    %v3513 = vpack.c.b16 %v3336, %v3335
    %v3514 = vpack.c.b16 %v3338, %v3337
    %v3515 = vpack.c.b16 %v3340, %v3339
    %v3516 = vpack.c.b16 %v3342, %v3341
    %v3517 = vpack.c.b16 %v3344, %v3343
    %v3518 = vpack.c.b16 %v3346, %v3345
    %v3519 = vpack.c.b16 %v3348, %v3347
    %v3520 = vpack.c.b16 %v3350, %v3349
    %v3521 = vpack.c.b16 %v3352, %v3351
    %v3522 = vpack.c.b16 %v3354, %v3353
    %v3523 = vpack.c.b16 %v3356, %v3355
    %v3524 = vpack.c.b16 %v3358, %v3357
    %v3525 = vpack.c.b16 %v3360, %v3359
    %v3526 = vpack.c.b16 %v3362, %v3361
    %v3527 = vpack.c.b16 %v3364, %v3363
    %v3528 = vpack.c.b16 %v3366, %v3365
    %v3529 = vpack.c.b16 %v3368, %v3367
    %v3530 = vpack.c.b16 %v3370, %v3369
    %v3531 = vpack.c.b16 %v3372, %v3371
    %v3532 = vpack.c.b16 %v3374, %v3373
    %v3533 = vpack.c.b16 %v3376, %v3375
    %v3534 = vpack.c.b16 %v3378, %v3377
    %v3535 = vpack.c.b16 %v3380, %v3379
    %v3536 = vpack.c.b16 %v3382, %v3381
    %v3537 = vpack.c.b16 %v3384, %v3383
    %v3538 = vpack.c.b16 %v3386, %v3385
    %v3539 = vpack.c.b16 %v3388, %v3387
    %v3540 = vpack.c.b16 %v3390, %v3389
    %v3541 = vpack.c.b16 %v3392, %v3391
    %v3542 = vpack.c.b16 %v3394, %v3393
    %v3543 = vpack.c.b16 %v3396, %v3395
    %v3544 = vpack.c.b16 %v3398, %v3397
    %v3545 = vpack.c.b16 %v3400, %v3399
    %v3546 = vpack.c.b16 %v3402, %v3401
    %v3547 = vpack.c.b16 %v3404, %v3403
    %v3548 = vpack.c.b16 %v3406, %v3405
    %v3549 = vpack.c.b16 %v3408, %v3407
    %v3550 = vpack.c.b16 %v3410, %v3409
    %v3551 = vpack.c.b16 %v3412, %v3411
    %v3552 = vpack.c.b16 %v3414, %v3413
    %v3553 = vpack.c.b16 %v3416, %v3415
    %v3554 = vpack.c.b16 %v3418, %v3417
    %v3555 = vpack.c.b16 %v3420, %v3419
    %v3556 = vpack.c.b16 %v3422, %v3421
    %v3557 = vpack.c.b16 %v3424, %v3423
    %v3558 = vpack.c.b16 %v3426, %v3425
    %v3559 = vpack.c.b16 %v3428, %v3427
    %v3560 = vpack.c.b16 %v3430, %v3429
    %v3561 = vpack.c.b16 %v3432, %v3431
    %v3562 = vpack.c.b16 %v3434, %v3433
    %3691 = vmatprep.subr.bf16.mxu0 0
    %3692 = vmatpush1.bf16.msra.mxu0 %v3435
    %3693 = vmatprep.subr.bf16.mxu0 0
    %3694 = vmatpush1.bf16.msra.mxu0 %v3436
    %3695 = vmatprep.subr.bf16.mxu0 0
    %3696 = vmatpush1.bf16.msra.mxu0 %v3437
    %3697 = vmatprep.subr.bf16.mxu0 0
    %3698 = vmatpush1.bf16.msra.mxu0 %v3438
    %3699 = vmatprep.subr.bf16.mxu0 0
    %3700 = vmatpush1.bf16.msra.mxu0 %v3439
    %3701 = vmatprep.subr.bf16.mxu0 0
    %3702 = vmatpush1.bf16.msra.mxu0 %v3440
    %3703 = vmatprep.subr.bf16.mxu0 0
    %3704 = vmatpush1.bf16.msra.mxu0 %v3441
    %3705 = vmatprep.subr.bf16.mxu0 0
    %3706 = vmatpush1.bf16.msra.mxu0 %v3442
    %3707 = vmatprep.subr.bf16.mxu0 0
    %3708 = vmatpush1.bf16.msra.mxu0 %v3443
    %3709 = vmatprep.subr.bf16.mxu0 0
    %3710 = vmatpush1.bf16.msra.mxu0 %v3444
    %3711 = vmatprep.subr.bf16.mxu0 0
    %3712 = vmatpush1.bf16.msra.mxu0 %v3445
    %3713 = vmatprep.subr.bf16.mxu0 0
    %3714 = vmatpush1.bf16.msra.mxu0 %v3446
    %3715 = vmatprep.subr.bf16.mxu0 0
    %3716 = vmatpush1.bf16.msra.mxu0 %v3447
    %3717 = vmatprep.subr.bf16.mxu0 0
    %3718 = vmatpush1.bf16.msra.mxu0 %v3448
    %3719 = vmatprep.subr.bf16.mxu0 0
    %3720 = vmatpush1.bf16.msra.mxu0 %v3449
    %3721 = vmatprep.subr.bf16.mxu0 0
    %3722 = vmatpush1.bf16.msra.mxu0 %v3450
    %3723 = vmatprep.mubr.bf16.mxu0 %v2601
    %3724 = vmatmul.mubr.bf16.gmra.mrb[0].mxu0 %v2600
    %v3725 = vpop.f32.mrb[0].mxu0
    %v3726 = vadd.f32 %v2918, %v3725
    %v3727 = vpop.f32.mrb[0].mxu0
    %v3728 = vpop.f32.mrb[0].mxu0
    %v3729 = vpop.f32.mrb[0].mxu0
    %3730 = vdwg.mxu0
    %3731 = vmatprep.subr.bf16.mxu0 0
    %3732 = vmatpush1.bf16.msra.mxu0 %v3451
    %3733 = vmatprep.subr.bf16.mxu0 0
    %3734 = vmatpush1.bf16.msra.mxu0 %v3452
    %3735 = vmatprep.subr.bf16.mxu0 0
    %3736 = vmatpush1.bf16.msra.mxu0 %v3453
    %3737 = vmatprep.subr.bf16.mxu0 0
    %3738 = vmatpush1.bf16.msra.mxu0 %v3454
    %3739 = vmatprep.subr.bf16.mxu0 0
    %3740 = vmatpush1.bf16.msra.mxu0 %v3455
    %3741 = vmatprep.subr.bf16.mxu0 0
    %3742 = vmatpush1.bf16.msra.mxu0 %v3456
    %3743 = vmatprep.subr.bf16.mxu0 0
    %3744 = vmatpush1.bf16.msra.mxu0 %v3457
    %3745 = vmatprep.subr.bf16.mxu0 0
    %3746 = vmatpush1.bf16.msra.mxu0 %v3458
    %3747 = vmatprep.subr.bf16.mxu0 0
    %3748 = vmatpush1.bf16.msra.mxu0 %v3459
    %3749 = vmatprep.subr.bf16.mxu0 0
    %3750 = vmatpush1.bf16.msra.mxu0 %v3460
    %3751 = vmatprep.subr.bf16.mxu0 0
    %3752 = vmatpush1.bf16.msra.mxu0 %v3461
    %3753 = vmatprep.subr.bf16.mxu0 0
    %3754 = vmatpush1.bf16.msra.mxu0 %v3462
    %3755 = vmatprep.subr.bf16.mxu0 0
    %3756 = vmatpush1.bf16.msra.mxu0 %v3463
    %3757 = vmatprep.subr.bf16.mxu0 0
    %3758 = vmatpush1.bf16.msra.mxu0 %v3464
    %3759 = vmatprep.subr.bf16.mxu0 0
    %3760 = vmatpush1.bf16.msra.mxu0 %v3465
    %3761 = vmatprep.subr.bf16.mxu0 0
    %3762 = vmatpush1.bf16.msra.mxu0 %v3466
    %3763 = vmatprep.mubr.bf16.mxu0 %v2603
    %3764 = vmatmul.mubr.bf16.gmra.mrb[0].mxu0 %v2602
    %v3765 = vpop.f32.mrb[0].mxu0
    %v3766 = vadd.f32 %v3726, %v3765
    %v3767 = vpop.f32.mrb[0].mxu0
    %v3768 = vpop.f32.mrb[0].mxu0
    %v3769 = vpop.f32.mrb[0].mxu0
    %3770 = vdwg.mxu0
    %3771 = vmatprep.subr.bf16.mxu0 0
    %3772 = vmatpush1.bf16.msra.mxu0 %v3467
    %3773 = vmatprep.subr.bf16.mxu0 0
    %3774 = vmatpush1.bf16.msra.mxu0 %v3468
    %3775 = vmatprep.subr.bf16.mxu0 0
    %3776 = vmatpush1.bf16.msra.mxu0 %v3469
    %3777 = vmatprep.subr.bf16.mxu0 0
    %3778 = vmatpush1.bf16.msra.mxu0 %v3470
    %3779 = vmatprep.subr.bf16.mxu0 0
    %3780 = vmatpush1.bf16.msra.mxu0 %v3471
    %3781 = vmatprep.subr.bf16.mxu0 0
    %3782 = vmatpush1.bf16.msra.mxu0 %v3472
    %3783 = vmatprep.subr.bf16.mxu0 0
    %3784 = vmatpush1.bf16.msra.mxu0 %v3473
    %3785 = vmatprep.subr.bf16.mxu0 0
    %3786 = vmatpush1.bf16.msra.mxu0 %v3474
    %3787 = vmatprep.subr.bf16.mxu0 0
    %3788 = vmatpush1.bf16.msra.mxu0 %v3475
    %3789 = vmatprep.subr.bf16.mxu0 0
    %3790 = vmatpush1.bf16.msra.mxu0 %v3476
    %3791 = vmatprep.subr.bf16.mxu0 0
    %3792 = vmatpush1.bf16.msra.mxu0 %v3477
    %3793 = vmatprep.subr.bf16.mxu0 0
    %3794 = vmatpush1.bf16.msra.mxu0 %v3478
    %3795 = vmatprep.subr.bf16.mxu0 0
    %3796 = vmatpush1.bf16.msra.mxu0 %v3479
    %3797 = vmatprep.subr.bf16.mxu0 0
    %3798 = vmatpush1.bf16.msra.mxu0 %v3480
    %3799 = vmatprep.subr.bf16.mxu0 0
    %3800 = vmatpush1.bf16.msra.mxu0 %v3481
    %3801 = vmatprep.subr.bf16.mxu0 0
    %3802 = vmatpush1.bf16.msra.mxu0 %v3482
    %3803 = vmatprep.mubr.bf16.mxu0 %v2605
    %3804 = vmatmul.mubr.bf16.gmra.mrb[0].mxu0 %v2604
    %v3805 = vpop.f32.mrb[0].mxu0
    %v3806 = vadd.f32 %v3766, %v3805
    %v3807 = vpop.f32.mrb[0].mxu0
    %v3808 = vpop.f32.mrb[0].mxu0
    %v3809 = vpop.f32.mrb[0].mxu0
    %3810 = vdwg.mxu0
    %3811 = vmatprep.subr.bf16.mxu0 0
    %3812 = vmatpush1.bf16.msra.mxu0 %v3483
    %3813 = vmatprep.subr.bf16.mxu0 0
    %3814 = vmatpush1.bf16.msra.mxu0 %v3484
    %3815 = vmatprep.subr.bf16.mxu0 0
    %3816 = vmatpush1.bf16.msra.mxu0 %v3485
    %3817 = vmatprep.subr.bf16.mxu0 0
    %3818 = vmatpush1.bf16.msra.mxu0 %v3486
    %3819 = vmatprep.subr.bf16.mxu0 0
    %3820 = vmatpush1.bf16.msra.mxu0 %v3487
    %3821 = vmatprep.subr.bf16.mxu0 0
    %3822 = vmatpush1.bf16.msra.mxu0 %v3488
    %3823 = vmatprep.subr.bf16.mxu0 0
    %3824 = vmatpush1.bf16.msra.mxu0 %v3489
    %3825 = vmatprep.subr.bf16.mxu0 0
    %3826 = vmatpush1.bf16.msra.mxu0 %v3490
    %3827 = vmatprep.subr.bf16.mxu0 0
    %3828 = vmatpush1.bf16.msra.mxu0 %v3491
    %3829 = vmatprep.subr.bf16.mxu0 0
    %3830 = vmatpush1.bf16.msra.mxu0 %v3492
    %3831 = vmatprep.subr.bf16.mxu0 0
    %3832 = vmatpush1.bf16.msra.mxu0 %v3493
    %3833 = vmatprep.subr.bf16.mxu0 0
    %3834 = vmatpush1.bf16.msra.mxu0 %v3494
    %3835 = vmatprep.subr.bf16.mxu0 0
    %3836 = vmatpush1.bf16.msra.mxu0 %v3495
    %3837 = vmatprep.subr.bf16.mxu0 0
    %3838 = vmatpush1.bf16.msra.mxu0 %v3496
    %3839 = vmatprep.subr.bf16.mxu0 0
    %3840 = vmatpush1.bf16.msra.mxu0 %v3497
    %3841 = vmatprep.subr.bf16.mxu0 0
    %3842 = vmatpush1.bf16.msra.mxu0 %v3498
    %3843 = vmatprep.mubr.bf16.mxu0 %v2607
    %3844 = vmatmul.mubr.bf16.gmra.mrb[0].mxu0 %v2606
    %v3845 = vpop.f32.mrb[0].mxu0
    %v3846 = vadd.f32 %v3806, %v3845
    %v3847 = vpop.f32.mrb[0].mxu0
    %v3848 = vpop.f32.mrb[0].mxu0
    %v3849 = vpop.f32.mrb[0].mxu0
    %3850 = vdwg.mxu0
    %3851 = vmatprep.subr.bf16.mxu0 0
    %3852 = vmatpush1.bf16.msra.mxu0 %v3499
    %3853 = vmatprep.subr.bf16.mxu0 0
    %3854 = vmatpush1.bf16.msra.mxu0 %v3500
    %3855 = vmatprep.subr.bf16.mxu0 0
    %3856 = vmatpush1.bf16.msra.mxu0 %v3501
    %3857 = vmatprep.subr.bf16.mxu0 0
    %3858 = vmatpush1.bf16.msra.mxu0 %v3502
    %3859 = vmatprep.subr.bf16.mxu0 0
    %3860 = vmatpush1.bf16.msra.mxu0 %v3503
    %3861 = vmatprep.subr.bf16.mxu0 0
    %3862 = vmatpush1.bf16.msra.mxu0 %v3504
    %3863 = vmatprep.subr.bf16.mxu0 0
    %3864 = vmatpush1.bf16.msra.mxu0 %v3505
    %3865 = vmatprep.subr.bf16.mxu0 0
    %3866 = vmatpush1.bf16.msra.mxu0 %v3506
    %3867 = vmatprep.subr.bf16.mxu0 0
    %3868 = vmatpush1.bf16.msra.mxu0 %v3507
    %3869 = vmatprep.subr.bf16.mxu0 0
    %3870 = vmatpush1.bf16.msra.mxu0 %v3508
    %3871 = vmatprep.subr.bf16.mxu0 0
    %3872 = vmatpush1.bf16.msra.mxu0 %v3509
    %3873 = vmatprep.subr.bf16.mxu0 0
    %3874 = vmatpush1.bf16.msra.mxu0 %v3510
    %3875 = vmatprep.subr.bf16.mxu0 0
    %3876 = vmatpush1.bf16.msra.mxu0 %v3511
    %3877 = vmatprep.subr.bf16.mxu0 0
    %3878 = vmatpush1.bf16.msra.mxu0 %v3512
    %3879 = vmatprep.subr.bf16.mxu0 0
    %3880 = vmatpush1.bf16.msra.mxu0 %v3513
    %3881 = vmatprep.subr.bf16.mxu0 0
    %3882 = vmatpush1.bf16.msra.mxu0 %v3514
    %3883 = vmatprep.mubr.bf16.mxu0 %v2609
    %3884 = vmatmul.mubr.bf16.gmra.mrb[0].mxu0 %v2608
    %v3885 = vpop.f32.mrb[0].mxu0
    %v3886 = vadd.f32 %v3846, %v3885
    %v3887 = vpop.f32.mrb[0].mxu0
    %v3888 = vpop.f32.mrb[0].mxu0
    %v3889 = vpop.f32.mrb[0].mxu0
    %3890 = vdwg.mxu0
    %3891 = vmatprep.subr.bf16.mxu0 0
    %3892 = vmatpush1.bf16.msra.mxu0 %v3515
    %3893 = vmatprep.subr.bf16.mxu0 0
    %3894 = vmatpush1.bf16.msra.mxu0 %v3516
    %3895 = vmatprep.subr.bf16.mxu0 0
    %3896 = vmatpush1.bf16.msra.mxu0 %v3517
    %3897 = vmatprep.subr.bf16.mxu0 0
    %3898 = vmatpush1.bf16.msra.mxu0 %v3518
    %3899 = vmatprep.subr.bf16.mxu0 0
    %3900 = vmatpush1.bf16.msra.mxu0 %v3519
    %3901 = vmatprep.subr.bf16.mxu0 0
    %3902 = vmatpush1.bf16.msra.mxu0 %v3520
    %3903 = vmatprep.subr.bf16.mxu0 0
    %3904 = vmatpush1.bf16.msra.mxu0 %v3521
    %3905 = vmatprep.subr.bf16.mxu0 0
    %3906 = vmatpush1.bf16.msra.mxu0 %v3522
    %3907 = vmatprep.subr.bf16.mxu0 0
    %3908 = vmatpush1.bf16.msra.mxu0 %v3523
    %3909 = vmatprep.subr.bf16.mxu0 0
    %3910 = vmatpush1.bf16.msra.mxu0 %v3524
    %3911 = vmatprep.subr.bf16.mxu0 0
    %3912 = vmatpush1.bf16.msra.mxu0 %v3525
    %3913 = vmatprep.subr.bf16.mxu0 0
    %3914 = vmatpush1.bf16.msra.mxu0 %v3526
    %3915 = vmatprep.subr.bf16.mxu0 0
    %3916 = vmatpush1.bf16.msra.mxu0 %v3527
    %3917 = vmatprep.subr.bf16.mxu0 0
    %3918 = vmatpush1.bf16.msra.mxu0 %v3528
    %3919 = vmatprep.subr.bf16.mxu0 0
    %3920 = vmatpush1.bf16.msra.mxu0 %v3529
    %3921 = vmatprep.subr.bf16.mxu0 0
    %3922 = vmatpush1.bf16.msra.mxu0 %v3530
    %3923 = vmatprep.mubr.bf16.mxu0 %v2611
    %3924 = vmatmul.mubr.bf16.gmra.mrb[0].mxu0 %v2610
    %v3925 = vpop.f32.mrb[0].mxu0
    %v3926 = vadd.f32 %v3886, %v3925
    %v3927 = vpop.f32.mrb[0].mxu0
    %v3928 = vpop.f32.mrb[0].mxu0
    %v3929 = vpop.f32.mrb[0].mxu0
    %3930 = vdwg.mxu0
    %3931 = vmatprep.subr.bf16.mxu0 0
    %3932 = vmatpush1.bf16.msra.mxu0 %v3531
    %3933 = vmatprep.subr.bf16.mxu0 0
    %3934 = vmatpush1.bf16.msra.mxu0 %v3532
    %3935 = vmatprep.subr.bf16.mxu0 0
    %3936 = vmatpush1.bf16.msra.mxu0 %v3533
    %3937 = vmatprep.subr.bf16.mxu0 0
    %3938 = vmatpush1.bf16.msra.mxu0 %v3534
    %3939 = vmatprep.subr.bf16.mxu0 0
    %3940 = vmatpush1.bf16.msra.mxu0 %v3535
    %3941 = vmatprep.subr.bf16.mxu0 0
    %3942 = vmatpush1.bf16.msra.mxu0 %v3536
    %3943 = vmatprep.subr.bf16.mxu0 0
    %3944 = vmatpush1.bf16.msra.mxu0 %v3537
    %3945 = vmatprep.subr.bf16.mxu0 0
    %3946 = vmatpush1.bf16.msra.mxu0 %v3538
    %3947 = vmatprep.subr.bf16.mxu0 0
    %3948 = vmatpush1.bf16.msra.mxu0 %v3539
    %3949 = vmatprep.subr.bf16.mxu0 0
    %3950 = vmatpush1.bf16.msra.mxu0 %v3540
    %3951 = vmatprep.subr.bf16.mxu0 0
    %3952 = vmatpush1.bf16.msra.mxu0 %v3541
    %3953 = vmatprep.subr.bf16.mxu0 0
    %3954 = vmatpush1.bf16.msra.mxu0 %v3542
    %3955 = vmatprep.subr.bf16.mxu0 0
    %3956 = vmatpush1.bf16.msra.mxu0 %v3543
    %3957 = vmatprep.subr.bf16.mxu0 0
    %3958 = vmatpush1.bf16.msra.mxu0 %v3544
    %3959 = vmatprep.subr.bf16.mxu0 0
    %3960 = vmatpush1.bf16.msra.mxu0 %v3545
    %3961 = vmatprep.subr.bf16.mxu0 0
    %3962 = vmatpush1.bf16.msra.mxu0 %v3546
    %3963 = vmatprep.mubr.bf16.mxu0 %v2613
    %3964 = vmatmul.mubr.bf16.gmra.mrb[0].mxu0 %v2612
    %v3965 = vpop.f32.mrb[0].mxu0
    %v3966 = vadd.f32 %v3926, %v3965
    %v3967 = vpop.f32.mrb[0].mxu0
    %v3968 = vpop.f32.mrb[0].mxu0
    %v3969 = vpop.f32.mrb[0].mxu0
    %3970 = vdwg.mxu0
    %3971 = vmatprep.subr.bf16.mxu0 0
    %3972 = vmatpush1.bf16.msra.mxu0 %v3547
    %3973 = vmatprep.subr.bf16.mxu0 0
    %3974 = vmatpush1.bf16.msra.mxu0 %v3548
    %3975 = vmatprep.subr.bf16.mxu0 0
    %3976 = vmatpush1.bf16.msra.mxu0 %v3549
    %3977 = vmatprep.subr.bf16.mxu0 0
    %3978 = vmatpush1.bf16.msra.mxu0 %v3550
    %3979 = vmatprep.subr.bf16.mxu0 0
    %3980 = vmatpush1.bf16.msra.mxu0 %v3551
    %3981 = vmatprep.subr.bf16.mxu0 0
    %3982 = vmatpush1.bf16.msra.mxu0 %v3552
    %3983 = vmatprep.subr.bf16.mxu0 0
    %3984 = vmatpush1.bf16.msra.mxu0 %v3553
    %3985 = vmatprep.subr.bf16.mxu0 0
    %3986 = vmatpush1.bf16.msra.mxu0 %v3554
    %3987 = vmatprep.subr.bf16.mxu0 0
    %3988 = vmatpush1.bf16.msra.mxu0 %v3555
    %3989 = vmatprep.subr.bf16.mxu0 0
    %3990 = vmatpush1.bf16.msra.mxu0 %v3556
    %3991 = vmatprep.subr.bf16.mxu0 0
    %3992 = vmatpush1.bf16.msra.mxu0 %v3557
    %3993 = vmatprep.subr.bf16.mxu0 0
    %3994 = vmatpush1.bf16.msra.mxu0 %v3558
    %3995 = vmatprep.subr.bf16.mxu0 0
    %3996 = vmatpush1.bf16.msra.mxu0 %v3559
    %3997 = vmatprep.subr.bf16.mxu0 0
    %3998 = vmatpush1.bf16.msra.mxu0 %v3560
    %3999 = vmatprep.subr.bf16.mxu0 0
    %4000 = vmatpush1.bf16.msra.mxu0 %v3561
    %4001 = vmatprep.subr.bf16.mxu0 0
    %4002 = vmatpush1.bf16.msra.mxu0 %v3562
    %4003 = vmatprep.mubr.bf16.mxu0 %v2615
    %4004 = vmatmul.mubr.bf16.gmra.mrb[0].mxu0 %v2614
    %v4005 = vpop.f32.mrb[0].mxu0
    %v4006 = vadd.f32 %v3966, %v4005
    %v4007 = vpop.f32.mrb[0].mxu0
    %v4008 = vpop.f32.mrb[0].mxu0
    %v4009 = vpop.f32.mrb[0].mxu0
    %4010 = vdwg.mxu0
    %v4011 = vld [vmem:[%s8] sm:$0x1]
    %v4013 = vlaneseq
    %v4014 = vshrl.u32 %v4013, 7
    %v4015 = vsub.s32 0, %v4014
    %v4016 = vrot.slane %v4011, %v4015
    %v4018 = vadd.f32 %v4006, %v4016
    %v4019 = vmax.f32 %v4018, 0.0
    %v4020 = vpack.c.bf16 %v4019, %v4019
    %v4021 = vld [vmem:[%s9] sm:$0xf]
    %v4022 = vld [vmem:[%s9 + $0x4] sm:$0xf]
    %v4023 = vld [vmem:[%s9 + $0x8] sm:$0xf]
    %v4024 = vld [vmem:[%s9 + $0xc] sm:$0xf]
    %v4025 = vld [vmem:[%s9 + $0x10] sm:$0xf]
    %v4026 = vld [vmem:[%s9 + $0x14] sm:$0xf]
    %v4027 = vld [vmem:[%s9 + $0x18] sm:$0xf]
    %v4028 = vld [vmem:[%s9 + $0x1c] sm:$0xf]
    %v4029 = vld [vmem:[%s9 + $0x20] sm:$0xf]
    %v4030 = vld [vmem:[%s9 + $0x24] sm:$0xf]
    %v4031 = vld [vmem:[%s9 + $0x28] sm:$0xf]
    %v4032 = vld [vmem:[%s9 + $0x2c] sm:$0xf]
    %v4033 = vld [vmem:[%s9 + $0x30] sm:$0xf]
    %v4034 = vld [vmem:[%s9 + $0x34] sm:$0xf]
    %v4035 = vld [vmem:[%s9 + $0x38] sm:$0xf]
    %v4036 = vld [vmem:[%s9 + $0x3c] sm:$0xf]
    %v4037 = vld [vmem:[%s10] sm:$0x1]
    %v4039 = vlaneseq
    %v4040 = vshrl.u32 %v4039, 7
    %v4041 = vsub.s32 0, %v4040
    %v4042 = vrot.slane %v4037, %v4041
    %v4060 = vunpack.c.l.b16 %v4021
    %v4061 = vunpack.c.l.b16 %v4022
    %v4062 = vunpack.c.l.b16 %v4023
    %v4063 = vunpack.c.l.b16 %v4024
    %v4064 = vunpack.c.l.b16 %v4025
    %v4065 = vunpack.c.l.b16 %v4026
    %v4066 = vunpack.c.l.b16 %v4027
    %v4067 = vunpack.c.l.b16 %v4028
    %v4068 = vunpack.c.l.b16 %v4029
    %v4069 = vunpack.c.l.b16 %v4030
    %v4070 = vunpack.c.l.b16 %v4031
    %v4071 = vunpack.c.l.b16 %v4032
    %v4072 = vunpack.c.l.b16 %v4033
    %v4073 = vunpack.c.l.b16 %v4034
    %v4074 = vunpack.c.l.b16 %v4035
    %v4075 = vunpack.c.l.b16 %v4036
    %v4076 = vpack.c.b16 %v4061, %v4060
    %v4077 = vpack.c.b16 %v4063, %v4062
    %v4078 = vpack.c.b16 %v4065, %v4064
    %v4079 = vpack.c.b16 %v4067, %v4066
    %v4080 = vpack.c.b16 %v4069, %v4068
    %v4081 = vpack.c.b16 %v4071, %v4070
    %v4082 = vpack.c.b16 %v4073, %v4072
    %v4083 = vpack.c.b16 %v4075, %v4074
    %4092 = vmatprep.subr.bf16.mxu0 0
    %4093 = vmatpush1.bf16.msra.mxu0 %v4076
    %4094 = vmatprep.subr.bf16.mxu0 0
    %4095 = vmatpush1.bf16.msra.mxu0 %v4077
    %4096 = vmatprep.subr.bf16.mxu0 0
    %4097 = vmatpush1.bf16.msra.mxu0 %v4078
    %4098 = vmatprep.subr.bf16.mxu0 0
    %4099 = vmatpush1.bf16.msra.mxu0 %v4079
    %4100 = vmatprep.subr.bf16.mxu0 0
    %4101 = vmatpush1.bf16.msra.mxu0 %v4080
    %4102 = vmatprep.subr.bf16.mxu0 0
    %4103 = vmatpush1.bf16.msra.mxu0 %v4081
    %4104 = vmatprep.subr.bf16.mxu0 0
    %4105 = vmatpush1.bf16.msra.mxu0 %v4082
    %4106 = vmatprep.subr.bf16.mxu0 0
    %4107 = vmatpush1.bf16.msra.mxu0 %v4083
    %4108 = vmatprep.subr.bf16.mxu0 0
    %4109 = vmatpush1.bf16.msra.mxu0 0
    %4110 = vmatprep.subr.bf16.mxu0 0
    %4111 = vmatpush1.bf16.msra.mxu0 0
    %4112 = vmatprep.subr.bf16.mxu0 0
    %4113 = vmatpush1.bf16.msra.mxu0 0
    %4114 = vmatprep.subr.bf16.mxu0 0
    %4115 = vmatpush1.bf16.msra.mxu0 0
    %4116 = vmatprep.subr.bf16.mxu0 0
    %4117 = vmatpush1.bf16.msra.mxu0 0
    %4118 = vmatprep.subr.bf16.mxu0 0
    %4119 = vmatpush1.bf16.msra.mxu0 0
    %4120 = vmatprep.subr.bf16.mxu0 0
    %4121 = vmatpush1.bf16.msra.mxu0 0
    %4122 = vmatprep.subr.bf16.mxu0 0
    %4123 = vmatpush1.bf16.msra.mxu0 0
    %4124 = vmatprep.mubr.bf16.mxu0 0
    %4125 = vmatmul.mubr.bf16.gmra.mrb[0].mxu0 %v4020
    %v4126 = vpop.f32.mrb[0].mxu0
    %v4127 = vadd.f32 %v4042, %v4126
    %v4128 = vpop.f32.mrb[0].mxu0
    %v4129 = vpop.f32.mrb[0].mxu0
    %v4130 = vpop.f32.mrb[0].mxu0
    %4131 = vdwg.mxu0
    %4132 = vst [vmem:[#allocation8] sm:$0x3] %v4127
    // Predicated region
    $region54: #{hybrid_cnn_forward.1} parent=1 // pred_check
      _
    $region55: #{hybrid_cnn_forward.1} parent=1 // pred_check_branch
      %4134 = sbr.rel (0) target = $region57
    $region56: #{hybrid_cnn_forward.1} parent=1 // pred_region
      %s4136 = ssub.s32 32, 32
      %4137 = vsyncadd [#allocation5], %s4136
      %s4139 = sshll.u32 [#allocation8], 4
      %s4140 = int_to_ptr.vmem [resolvable:$true] %s4139
      %4142 = dma.vmem_to_hbm [thread:$0]  %s4140, 32, %s11, [#allocation5]
    $region57: #{hybrid_cnn_forward.1} parent=1 // pred_fallthru
      _
    // Predicated region
    $region58: #{hybrid_cnn_forward.1} parent=1 // pred_check
      _
    $region59: #{hybrid_cnn_forward.1} parent=1 // pred_check_branch
      %4144 = sbr.rel (0) target = $region61
    $region60: #{hybrid_cnn_forward.1} parent=1 // pred_region
      %4145 = dma.done [#allocation5], 32
    $region61: #{hybrid_cnn_forward.1} parent=1 // pred_fallthru
      _
    %4146 = vsyncpa [#allocation4], 1
    %4147 = vsyncpa [#allocation7], 1
    %4148 = vsyncpa [#allocation5], 1

</llo_original>
